<compile_context>
chip_gen: v7x
topology: tpu7x:2x2x1
jax: 0.10.0
libtpu: 0.0.40
codegen_flags: <defaults>
</compile_context>

<pallas_src>
import functools
import math

import jax
import jax.numpy as jnp
import numpy as np
from jax.experimental import pallas as pl
from jax.experimental.pallas import tpu as pltpu


_VMEM = pl.BlockSpec(memory_space=pltpu.MemorySpace.VMEM)


def _round_up(x, m):
    return (x + m - 1) // m * m


# --------------------------------------------------------------------------
# Fused Pallas kernel: full autoencoder forward in one call
# --------------------------------------------------------------------------
def _lstm_ae_kernel(*args, seq_len, batch, hidden_dim, num_layers):
    H = hidden_dim
    n_params = 6 * num_layers + 6
    x_ref = args[0]
    param_refs = args[1:1 + n_params]
    out_ref = args[1 + n_params]
    buf_a = args[2 + n_params]           # (seq*batch, H) inter-layer scratch
    buf_b = args[3 + n_params]           # (seq*batch, H) inter-layer scratch
    bufs = (buf_a, buf_b)

    # -- unpack parameter refs (same flat order as the wrapper builds) --
    enc, dec = [], []
    idx = 0
    for _ in range(num_layers):
        enc.append(param_refs[idx:idx + 3]); idx += 3
    for _ in range(num_layers):
        dec.append(param_refs[idx:idx + 3]); idx += 3
    fce_w, fce_b, fcd_w, fcd_b, out_w, out_b = param_refs[idx:idx + 6]

    zeros_h = jnp.zeros((batch, H), jnp.float32)

    def run_layer(x_flat, w_ih, w_hh, b, h0, c0, out_buf):
        """One LSTM layer, time loop fully unrolled.

        x_flat: (seq*batch, in_dim) time-major value, or None if the input is
        identically zero (decoder layer 0) -> skip x @ W_ih entirely.
        If out_buf is not None, per-step hidden states are written to it
        (time-major flat).  Returns the final hidden state (batch, H).
        """
        if x_flat is None:
            # zero input: only the (hoisted) bias contributes.
            xw_all = None
            xw_const = jnp.broadcast_to(b, (batch, 4 * H))
        else:
            # hoisted input projection: one big matmul for the whole sequence,
            # bias folded in here (not re-broadcast inside the loop).
            xw_all = jnp.dot(x_flat, w_ih,
                             preferred_element_type=jnp.float32) + b
        h, c = h0, c0
        for t in range(seq_len):                       # static full unroll
            if xw_all is None:
                xw_t = xw_const
            else:
                # batch is padded to a multiple of 8 -> sublane-aligned slice.
                xw_t = xw_all[t * batch:(t + 1) * batch, :]
            pre = xw_t + jnp.dot(h, w_hh, preferred_element_type=jnp.float32)
            # gate order (i, f, o, g): one sigmoid over the 3H slab, one tanh.
            ifo = jax.nn.sigmoid(pre[:, :3 * H])
            g = jnp.tanh(pre[:, 3 * H:])
            i_g = ifo[:, :H]
            f_g = ifo[:, H:2 * H]
            o_g = ifo[:, 2 * H:]
            c = f_g * c + i_g * g
            h = o_g * jnp.tanh(c)
            if out_buf is not None:
                out_buf[t * batch:(t + 1) * batch, :] = h
        return h

    # ---- encoder LSTM stack (only the last layer's final h is needed) ----
    cur = x_ref[...]                                    # (seq*batch, input_dim)
    h_last = zeros_h
    for l in range(num_layers):
        w_ih, w_hh, b = enc[l]
        last = (l == num_layers - 1)
        ob = None if last else bufs[l % 2]
        h_last = run_layer(cur, w_ih[...], w_hh[...], b[...],
                           zeros_h, zeros_h, ob)
        if not last:
            cur = ob[...]

    # ---- bottleneck: fc_enc -> fc_dec ----
    latent = jnp.dot(h_last, fce_w[...],
                     preferred_element_type=jnp.float32) + fce_b[...]
    dec_h0 = jnp.dot(latent, fcd_w[...],
                     preferred_element_type=jnp.float32) + fcd_b[...]
    dec_c0 = jnp.zeros_like(dec_h0)

    # ---- decoder LSTM stack (zero input, shared (dec_h0, 0) per layer) ----
    cur = None                                          # layer-0 input is zero
    for l in range(num_layers):
        w_ih, w_hh, b = dec[l]
        ob = bufs[l % 2]
        run_layer(cur, None if cur is None else w_ih[...], w_hh[...], b[...],
                  dec_h0, dec_c0, ob)
        cur = ob[...]

    # ---- output projection on time-major flat activations (lane-dense) ----
    out_ref[...] = (jnp.dot(cur, out_w[...],
                            preferred_element_type=jnp.float32) + out_b[...])


# --------------------------------------------------------------------------
# Wrapper
# --------------------------------------------------------------------------
def lstm_autoencoder_forward(params, x, *, seq_len, hidden_dim, num_layers):
    """x: (batch, seq_len, input_dim) -> (batch, seq_len, input_dim)."""
    batch, _, input_dim = x.shape
    batch_p = _round_up(batch, 8)       # sublane-aligned per-timestep blocks
    out_p = _round_up(input_dim, 128)   # lane-dense output store

    # tiny (batch*seq*input_dim) transpose/pad/reshape; heavy tensors never
    # leave the kernel.  Padded rows are all-zero and stay row-independent
    # through every op, so they never contaminate real rows.
    x_tm = jnp.transpose(x, (1, 0, 2)).astype(jnp.float32)   # (seq, B, in)
    if batch_p != batch:
        x_tm = jnp.pad(x_tm, ((0, 0), (0, batch_p - batch), (0, 0)))
    x_flat = x_tm.reshape(seq_len * batch_p, input_dim)

    out_w = params["out"]["w"].astype(jnp.float32)
    out_b = params["out"]["b"].astype(jnp.float32)
    if out_p != input_dim:
        out_w = jnp.pad(out_w, ((0, 0), (0, out_p - input_dim)))
        out_b = jnp.pad(out_b, ((0, 0), (0, out_p - input_dim)))

    args = [x_flat]
    for p in params["enc"]:
        args += [p["w_ih"], p["w_hh"], p["b"]]
    for p in params["dec"]:
        args += [p["w_ih"], p["w_hh"], p["b"]]
    args += [params["fc_enc"]["w"], params["fc_enc"]["b"],
             params["fc_dec"]["w"], params["fc_dec"]["b"],
             out_w, out_b]

    kernel = functools.partial(_lstm_ae_kernel, seq_len=seq_len, batch=batch_p,
                               hidden_dim=hidden_dim, num_layers=num_layers)
    out_flat = pl.pallas_call(
        kernel,
        out_shape=jax.ShapeDtypeStruct((seq_len * batch_p, out_p),
                                       jnp.float32),
        in_specs=[_VMEM] * len(args),
        out_specs=_VMEM,
        scratch_shapes=[
            pltpu.VMEM((seq_len * batch_p, hidden_dim), jnp.float32),
            pltpu.VMEM((seq_len * batch_p, hidden_dim), jnp.float32),
        ],
    )(*args)
    # only the narrow (input_dim-wide) result is un-padded / transposed back.
    out = out_flat.reshape(seq_len, batch_p, out_p)[:, :batch, :input_dim]
    return out.transpose(1, 0, 2)


# --------------------------------------------------------------------------
# Parameter init (fused gate layout, gate order i, f, o, g)
# --------------------------------------------------------------------------
def _uniform(key, shape, k):
    return jax.random.uniform(key, shape, jnp.float32, -k, k)


def init_params(key, input_dim, hidden_dim, latent_dim, num_layers):
    params = {"enc": [], "dec": []}
    k_lstm = 1.0 / math.sqrt(hidden_dim)

    def lstm_layer_params(key, in_dim):
        k1, k2, k3, k4 = jax.random.split(key, 4)
        return {
            "w_ih": _uniform(k1, (in_dim, 4 * hidden_dim), k_lstm),
            "w_hh": _uniform(k2, (hidden_dim, 4 * hidden_dim), k_lstm),
            # combined bias b_ih + b_hh
            "b": (_uniform(k3, (1, 4 * hidden_dim), k_lstm)
                  + _uniform(k4, (1, 4 * hidden_dim), k_lstm)),
        }

    keys = jax.random.split(key, 2 * num_layers + 3)
    ki = 0
    for layer in range(num_layers):
        in_dim = input_dim if layer == 0 else hidden_dim
        params["enc"].append(lstm_layer_params(keys[ki], in_dim)); ki += 1
    for _ in range(num_layers):
        params["dec"].append(lstm_layer_params(keys[ki], hidden_dim)); ki += 1

    def linear_params(key, fan_in, fan_out):
        k1, k2 = jax.random.split(key)
        k = 1.0 / math.sqrt(fan_in)
        return {"w": _uniform(k1, (fan_in, fan_out), k),
                "b": _uniform(k2, (1, fan_out), k)}

    params["fc_enc"] = linear_params(keys[ki], hidden_dim, latent_dim); ki += 1
    params["fc_dec"] = linear_params(keys[ki], latent_dim, hidden_dim); ki += 1
    params["out"] = linear_params(keys[ki], hidden_dim, input_dim); ki += 1
    return params


# --------------------------------------------------------------------------
# Pure-JAX reference (same fused weights / gate order) for correctness check
# --------------------------------------------------------------------------
def _lstm_layer_ref(x_tm, w_ih, w_hh, b, h0, c0):
    H = h0.shape[-1]

    def step(carry, x_t):
        h, c = carry
        pre = x_t @ w_ih + h @ w_hh + b
        i = jax.nn.sigmoid(pre[:, :H])
        f = jax.nn.sigmoid(pre[:, H:2 * H])
        o = jax.nn.sigmoid(pre[:, 2 * H:3 * H])
        g = jnp.tanh(pre[:, 3 * H:])
        c = f * c + i * g
        h = o * jnp.tanh(c)
        return (h, c), h

    (h, c), outs = jax.lax.scan(step, (h0, c0), x_tm)
    return outs, h, c


def forward_ref(params, x, *, seq_len, hidden_dim, num_layers):
    batch = x.shape[0]
    zeros_h = jnp.zeros((batch, hidden_dim), jnp.float32)
    inp = jnp.transpose(x, (1, 0, 2)).astype(jnp.float32)
    h_last = zeros_h
    for layer in range(num_layers):
        p = params["enc"][layer]
        inp, h_last, _ = _lstm_layer_ref(inp, p["w_ih"], p["w_hh"], p["b"],
                                         zeros_h, zeros_h)
    latent = h_last @ params["fc_enc"]["w"] + params["fc_enc"]["b"]
    dec_h0 = latent @ params["fc_dec"]["w"] + params["fc_dec"]["b"]
    dec_c0 = jnp.zeros_like(dec_h0)
    inp = jnp.zeros((seq_len, batch, hidden_dim), jnp.float32)
    for layer in range(num_layers):
        p = params["dec"][layer]
        inp, _, _ = _lstm_layer_ref(inp, p["w_ih"], p["w_hh"], p["b"],
                                    dec_h0, dec_c0)
    dec_out = jnp.transpose(inp, (1, 0, 2))
    return dec_out @ params["out"]["w"] + params["out"]["b"]


# --------------------------------------------------------------------------
if __name__ == "__main__":
    seq_len, input_dim, hidden_dim, latent_dim, num_layers = 8, 4, 32, 16, 2
    batch = 2

    key = jax.random.PRNGKey(0)
    k_params, k_x = jax.random.split(key)
    params = init_params(k_params, input_dim, hidden_dim, latent_dim,
                         num_layers)
    x = jax.random.normal(k_x, (batch, seq_len, input_dim), jnp.float32)

    fwd = jax.jit(functools.partial(lstm_autoencoder_forward,
                                    seq_len=seq_len, hidden_dim=hidden_dim,
                                    num_layers=num_layers))
    out = jax.block_until_ready(fwd(params, x))
    assert out.shape == (batch, seq_len, input_dim)

    ref = jax.block_until_ready(
        forward_ref(params, x, seq_len=seq_len, hidden_dim=hidden_dim,
                    num_layers=num_layers))
    # f32 exact-math parity modulo MXU accumulation / transcendental rounding
    # differences compounded through 2*seq_len recurrent steps.
    np.testing.assert_allclose(np.asarray(out), np.asarray(ref),
                               rtol=1e-3, atol=1e-3)

    print("KERNEL_OK")
</pallas_src>

<mosaic_0001>
module attributes {stable_mosaic.version = 11 : i64} {
  func.func @_lstm_ae_kernel(%arg0: memref<64x4xf32, #tpu.memory_space<vmem>>, %arg1: memref<4x128xf32, #tpu.memory_space<vmem>>, %arg2: memref<32x128xf32, #tpu.memory_space<vmem>>, %arg3: memref<1x128xf32, #tpu.memory_space<vmem>>, %arg4: memref<32x128xf32, #tpu.memory_space<vmem>>, %arg5: memref<32x128xf32, #tpu.memory_space<vmem>>, %arg6: memref<1x128xf32, #tpu.memory_space<vmem>>, %arg7: memref<32x128xf32, #tpu.memory_space<vmem>>, %arg8: memref<32x128xf32, #tpu.memory_space<vmem>>, %arg9: memref<1x128xf32, #tpu.memory_space<vmem>>, %arg10: memref<32x128xf32, #tpu.memory_space<vmem>>, %arg11: memref<32x128xf32, #tpu.memory_space<vmem>>, %arg12: memref<1x128xf32, #tpu.memory_space<vmem>>, %arg13: memref<32x16xf32, #tpu.memory_space<vmem>>, %arg14: memref<1x16xf32, #tpu.memory_space<vmem>>, %arg15: memref<16x32xf32, #tpu.memory_space<vmem>>, %arg16: memref<1x32xf32, #tpu.memory_space<vmem>>, %arg17: memref<32x128xf32, #tpu.memory_space<vmem>>, %arg18: memref<1x128xf32, #tpu.memory_space<vmem>>, %arg19: memref<64x128xf32, #tpu.memory_space<vmem>>, %arg20: memref<64x32xf32, #tpu.memory_space<vmem>>, %arg21: memref<64x32xf32, #tpu.memory_space<vmem>>) attributes {dimension_semantics = [], scalar_prefetch = 0 : i64, scratch_operands = 2 : i64, tpu.core_type = #tpu.core_type<tc>} {
    %cst = arith.constant 0.000000e+00 : f32
    %0 = vector.broadcast %cst : f32 to vector<8x32xf32>
    %c0 = arith.constant 0 : index
    %c0_0 = arith.constant 0 : index
    %1 = vector.load %arg0[%c0, %c0_0] : memref<64x4xf32, #tpu.memory_space<vmem>>, vector<64x4xf32>
    %c0_1 = arith.constant 0 : index
    %c0_2 = arith.constant 0 : index
    %2 = vector.load %arg1[%c0_1, %c0_2] : memref<4x128xf32, #tpu.memory_space<vmem>>, vector<4x128xf32>
    %c0_3 = arith.constant 0 : index
    %c0_4 = arith.constant 0 : index
    %3 = vector.load %arg2[%c0_3, %c0_4] : memref<32x128xf32, #tpu.memory_space<vmem>>, vector<32x128xf32>
    %c0_5 = arith.constant 0 : index
    %c0_6 = arith.constant 0 : index
    %4 = vector.load %arg3[%c0_5, %c0_6] : memref<1x128xf32, #tpu.memory_space<vmem>>, vector<1x128xf32>
    %cst_7 = arith.constant dense<0.000000e+00> : vector<64x128xf32>
    %5 = tpu.matmul %1, %2, %cst_7 {dimension_numbers = #tpu.dot_dimension_numbers<[1], [0], [0], [1], [0, 0, 1, 1], [], []>} : vector<64x4xf32>, vector<4x128xf32>, vector<64x128xf32> -> vector<64x128xf32>
    %6 = vector.broadcast %4 : vector<1x128xf32> to vector<64x128xf32>
    %7 = arith.addf %5, %6 : vector<64x128xf32>
    %8 = vector.extract_strided_slice %7 {offsets = [0, 0], sizes = [8, 128], strides = [1, 1]} : vector<64x128xf32> to vector<8x128xf32>
    %cst_8 = arith.constant dense<0.000000e+00> : vector<8x128xf32>
    %9 = tpu.matmul %0, %3, %cst_8 {dimension_numbers = #tpu.dot_dimension_numbers<[1], [0], [0], [1], [0, 0, 1, 1], [], []>} : vector<8x32xf32>, vector<32x128xf32>, vector<8x128xf32> -> vector<8x128xf32>
    %10 = arith.addf %8, %9 : vector<8x128xf32>
    %11 = vector.extract_strided_slice %10 {offsets = [0, 0], sizes = [8, 96], strides = [1, 1]} : vector<8x128xf32> to vector<8x96xf32>
    %12 = arith.negf %11 : vector<8x96xf32>
    %13 = math.exp %12 : vector<8x96xf32>
    %cst_9 = arith.constant 1.000000e+00 : f32
    %14 = vector.broadcast %cst_9 : f32 to vector<8x96xf32>
    %15 = arith.addf %14, %13 : vector<8x96xf32>
    %16 = arith.divf %14, %15 : vector<8x96xf32>
    %17 = vector.extract_strided_slice %10 {offsets = [0, 96], sizes = [8, 32], strides = [1, 1]} : vector<8x128xf32> to vector<8x32xf32>
    %18 = math.tanh %17 : vector<8x32xf32>
    %19 = vector.extract_strided_slice %16 {offsets = [0, 0], sizes = [8, 32], strides = [1, 1]} : vector<8x96xf32> to vector<8x32xf32>
    %20 = vector.extract_strided_slice %16 {offsets = [0, 32], sizes = [8, 32], strides = [1, 1]} : vector<8x96xf32> to vector<8x32xf32>
    %21 = vector.extract_strided_slice %16 {offsets = [0, 64], sizes = [8, 32], strides = [1, 1]} : vector<8x96xf32> to vector<8x32xf32>
    %22 = arith.mulf %20, %0 : vector<8x32xf32>
    %23 = arith.mulf %19, %18 : vector<8x32xf32>
    %24 = arith.addf %22, %23 : vector<8x32xf32>
    %25 = math.tanh %24 : vector<8x32xf32>
    %26 = arith.mulf %21, %25 : vector<8x32xf32>
    %c0_10 = arith.constant 0 : index
    %c0_11 = arith.constant 0 : index
    %27 = vector.load %arg20[%c0_10, %c0_11] : memref<64x32xf32, #tpu.memory_space<vmem>>, vector<8x32xf32>
    tpu.vector_store %arg20[%c0_10, %c0_11], %26 {strides = array<i32>} : memref<64x32xf32, #tpu.memory_space<vmem>>, vector<8x32xf32>,
    %28 = vector.extract_strided_slice %7 {offsets = [8, 0], sizes = [8, 128], strides = [1, 1]} : vector<64x128xf32> to vector<8x128xf32>
    %cst_12 = arith.constant dense<0.000000e+00> : vector<8x128xf32>
    %29 = tpu.matmul %26, %3, %cst_12 {dimension_numbers = #tpu.dot_dimension_numbers<[1], [0], [0], [1], [0, 0, 1, 1], [], []>} : vector<8x32xf32>, vector<32x128xf32>, vector<8x128xf32> -> vector<8x128xf32>
    %30 = arith.addf %28, %29 : vector<8x128xf32>
    %31 = vector.extract_strided_slice %30 {offsets = [0, 0], sizes = [8, 96], strides = [1, 1]} : vector<8x128xf32> to vector<8x96xf32>
    %32 = arith.negf %31 : vector<8x96xf32>
    %33 = math.exp %32 : vector<8x96xf32>
    %cst_13 = arith.constant 1.000000e+00 : f32
    %34 = vector.broadcast %cst_13 : f32 to vector<8x96xf32>
    %35 = arith.addf %34, %33 : vector<8x96xf32>
    %36 = arith.divf %34, %35 : vector<8x96xf32>
    %37 = vector.extract_strided_slice %30 {offsets = [0, 96], sizes = [8, 32], strides = [1, 1]} : vector<8x128xf32> to vector<8x32xf32>
    %38 = math.tanh %37 : vector<8x32xf32>
    %39 = vector.extract_strided_slice %36 {offsets = [0, 0], sizes = [8, 32], strides = [1, 1]} : vector<8x96xf32> to vector<8x32xf32>
    %40 = vector.extract_strided_slice %36 {offsets = [0, 32], sizes = [8, 32], strides = [1, 1]} : vector<8x96xf32> to vector<8x32xf32>
    %41 = vector.extract_strided_slice %36 {offsets = [0, 64], sizes = [8, 32], strides = [1, 1]} : vector<8x96xf32> to vector<8x32xf32>
    %42 = arith.mulf %40, %24 : vector<8x32xf32>
    %43 = arith.mulf %39, %38 : vector<8x32xf32>
    %44 = arith.addf %42, %43 : vector<8x32xf32>
    %45 = math.tanh %44 : vector<8x32xf32>
    %46 = arith.mulf %41, %45 : vector<8x32xf32>
    %c8 = arith.constant 8 : index
    %c0_14 = arith.constant 0 : index
    %47 = vector.load %arg20[%c8, %c0_14] : memref<64x32xf32, #tpu.memory_space<vmem>>, vector<8x32xf32>
    tpu.vector_store %arg20[%c8, %c0_14], %46 {strides = array<i32>} : memref<64x32xf32, #tpu.memory_space<vmem>>, vector<8x32xf32>,
    %48 = vector.extract_strided_slice %7 {offsets = [16, 0], sizes = [8, 128], strides = [1, 1]} : vector<64x128xf32> to vector<8x128xf32>
    %cst_15 = arith.constant dense<0.000000e+00> : vector<8x128xf32>
    %49 = tpu.matmul %46, %3, %cst_15 {dimension_numbers = #tpu.dot_dimension_numbers<[1], [0], [0], [1], [0, 0, 1, 1], [], []>} : vector<8x32xf32>, vector<32x128xf32>, vector<8x128xf32> -> vector<8x128xf32>
    %50 = arith.addf %48, %49 : vector<8x128xf32>
    %51 = vector.extract_strided_slice %50 {offsets = [0, 0], sizes = [8, 96], strides = [1, 1]} : vector<8x128xf32> to vector<8x96xf32>
    %52 = arith.negf %51 : vector<8x96xf32>
    %53 = math.exp %52 : vector<8x96xf32>
    %cst_16 = arith.constant 1.000000e+00 : f32
    %54 = vector.broadcast %cst_16 : f32 to vector<8x96xf32>
    %55 = arith.addf %54, %53 : vector<8x96xf32>
    %56 = arith.divf %54, %55 : vector<8x96xf32>
    %57 = vector.extract_strided_slice %50 {offsets = [0, 96], sizes = [8, 32], strides = [1, 1]} : vector<8x128xf32> to vector<8x32xf32>
    %58 = math.tanh %57 : vector<8x32xf32>
    %59 = vector.extract_strided_slice %56 {offsets = [0, 0], sizes = [8, 32], strides = [1, 1]} : vector<8x96xf32> to vector<8x32xf32>
    %60 = vector.extract_strided_slice %56 {offsets = [0, 32], sizes = [8, 32], strides = [1, 1]} : vector<8x96xf32> to vector<8x32xf32>
    %61 = vector.extract_strided_slice %56 {offsets = [0, 64], sizes = [8, 32], strides = [1, 1]} : vector<8x96xf32> to vector<8x32xf32>
    %62 = arith.mulf %60, %44 : vector<8x32xf32>
    %63 = arith.mulf %59, %58 : vector<8x32xf32>
    %64 = arith.addf %62, %63 : vector<8x32xf32>
    %65 = math.tanh %64 : vector<8x32xf32>
    %66 = arith.mulf %61, %65 : vector<8x32xf32>
    %c16 = arith.constant 16 : index
    %c0_17 = arith.constant 0 : index
    %67 = vector.load %arg20[%c16, %c0_17] : memref<64x32xf32, #tpu.memory_space<vmem>>, vector<8x32xf32>
    tpu.vector_store %arg20[%c16, %c0_17], %66 {strides = array<i32>} : memref<64x32xf32, #tpu.memory_space<vmem>>, vector<8x32xf32>,
    %68 = vector.extract_strided_slice %7 {offsets = [24, 0], sizes = [8, 128], strides = [1, 1]} : vector<64x128xf32> to vector<8x128xf32>
    %cst_18 = arith.constant dense<0.000000e+00> : vector<8x128xf32>
    %69 = tpu.matmul %66, %3, %cst_18 {dimension_numbers = #tpu.dot_dimension_numbers<[1], [0], [0], [1], [0, 0, 1, 1], [], []>} : vector<8x32xf32>, vector<32x128xf32>, vector<8x128xf32> -> vector<8x128xf32>
    %70 = arith.addf %68, %69 : vector<8x128xf32>
    %71 = vector.extract_strided_slice %70 {offsets = [0, 0], sizes = [8, 96], strides = [1, 1]} : vector<8x128xf32> to vector<8x96xf32>
    %72 = arith.negf %71 : vector<8x96xf32>
    %73 = math.exp %72 : vector<8x96xf32>
    %cst_19 = arith.constant 1.000000e+00 : f32
    %74 = vector.broadcast %cst_19 : f32 to vector<8x96xf32>
    %75 = arith.addf %74, %73 : vector<8x96xf32>
    %76 = arith.divf %74, %75 : vector<8x96xf32>
    %77 = vector.extract_strided_slice %70 {offsets = [0, 96], sizes = [8, 32], strides = [1, 1]} : vector<8x128xf32> to vector<8x32xf32>
    %78 = math.tanh %77 : vector<8x32xf32>
    %79 = vector.extract_strided_slice %76 {offsets = [0, 0], sizes = [8, 32], strides = [1, 1]} : vector<8x96xf32> to vector<8x32xf32>
    %80 = vector.extract_strided_slice %76 {offsets = [0, 32], sizes = [8, 32], strides = [1, 1]} : vector<8x96xf32> to vector<8x32xf32>
    %81 = vector.extract_strided_slice %76 {offsets = [0, 64], sizes = [8, 32], strides = [1, 1]} : vector<8x96xf32> to vector<8x32xf32>
    %82 = arith.mulf %80, %64 : vector<8x32xf32>
    %83 = arith.mulf %79, %78 : vector<8x32xf32>
    %84 = arith.addf %82, %83 : vector<8x32xf32>
    %85 = math.tanh %84 : vector<8x32xf32>
    %86 = arith.mulf %81, %85 : vector<8x32xf32>
    %c24 = arith.constant 24 : index
    %c0_20 = arith.constant 0 : index
    %87 = vector.load %arg20[%c24, %c0_20] : memref<64x32xf32, #tpu.memory_space<vmem>>, vector<8x32xf32>
    tpu.vector_store %arg20[%c24, %c0_20], %86 {strides = array<i32>} : memref<64x32xf32, #tpu.memory_space<vmem>>, vector<8x32xf32>,
    %88 = vector.extract_strided_slice %7 {offsets = [32, 0], sizes = [8, 128], strides = [1, 1]} : vector<64x128xf32> to vector<8x128xf32>
    %cst_21 = arith.constant dense<0.000000e+00> : vector<8x128xf32>
    %89 = tpu.matmul %86, %3, %cst_21 {dimension_numbers = #tpu.dot_dimension_numbers<[1], [0], [0], [1], [0, 0, 1, 1], [], []>} : vector<8x32xf32>, vector<32x128xf32>, vector<8x128xf32> -> vector<8x128xf32>
    %90 = arith.addf %88, %89 : vector<8x128xf32>
    %91 = vector.extract_strided_slice %90 {offsets = [0, 0], sizes = [8, 96], strides = [1, 1]} : vector<8x128xf32> to vector<8x96xf32>
    %92 = arith.negf %91 : vector<8x96xf32>
    %93 = math.exp %92 : vector<8x96xf32>
    %cst_22 = arith.constant 1.000000e+00 : f32
    %94 = vector.broadcast %cst_22 : f32 to vector<8x96xf32>
    %95 = arith.addf %94, %93 : vector<8x96xf32>
    %96 = arith.divf %94, %95 : vector<8x96xf32>
    %97 = vector.extract_strided_slice %90 {offsets = [0, 96], sizes = [8, 32], strides = [1, 1]} : vector<8x128xf32> to vector<8x32xf32>
    %98 = math.tanh %97 : vector<8x32xf32>
    %99 = vector.extract_strided_slice %96 {offsets = [0, 0], sizes = [8, 32], strides = [1, 1]} : vector<8x96xf32> to vector<8x32xf32>
    %100 = vector.extract_strided_slice %96 {offsets = [0, 32], sizes = [8, 32], strides = [1, 1]} : vector<8x96xf32> to vector<8x32xf32>
    %101 = vector.extract_strided_slice %96 {offsets = [0, 64], sizes = [8, 32], strides = [1, 1]} : vector<8x96xf32> to vector<8x32xf32>
    %102 = arith.mulf %100, %84 : vector<8x32xf32>
    %103 = arith.mulf %99, %98 : vector<8x32xf32>
    %104 = arith.addf %102, %103 : vector<8x32xf32>
    %105 = math.tanh %104 : vector<8x32xf32>
    %106 = arith.mulf %101, %105 : vector<8x32xf32>
    %c32 = arith.constant 32 : index
    %c0_23 = arith.constant 0 : index
    %107 = vector.load %arg20[%c32, %c0_23] : memref<64x32xf32, #tpu.memory_space<vmem>>, vector<8x32xf32>
    tpu.vector_store %arg20[%c32, %c0_23], %106 {strides = array<i32>} : memref<64x32xf32, #tpu.memory_space<vmem>>, vector<8x32xf32>,
    %108 = vector.extract_strided_slice %7 {offsets = [40, 0], sizes = [8, 128], strides = [1, 1]} : vector<64x128xf32> to vector<8x128xf32>
    %cst_24 = arith.constant dense<0.000000e+00> : vector<8x128xf32>
    %109 = tpu.matmul %106, %3, %cst_24 {dimension_numbers = #tpu.dot_dimension_numbers<[1], [0], [0], [1], [0, 0, 1, 1], [], []>} : vector<8x32xf32>, vector<32x128xf32>, vector<8x128xf32> -> vector<8x128xf32>
    %110 = arith.addf %108, %109 : vector<8x128xf32>
    %111 = vector.extract_strided_slice %110 {offsets = [0, 0], sizes = [8, 96], strides = [1, 1]} : vector<8x128xf32> to vector<8x96xf32>
    %112 = arith.negf %111 : vector<8x96xf32>
    %113 = math.exp %112 : vector<8x96xf32>
    %cst_25 = arith.constant 1.000000e+00 : f32
    %114 = vector.broadcast %cst_25 : f32 to vector<8x96xf32>
    %115 = arith.addf %114, %113 : vector<8x96xf32>
    %116 = arith.divf %114, %115 : vector<8x96xf32>
    %117 = vector.extract_strided_slice %110 {offsets = [0, 96], sizes = [8, 32], strides = [1, 1]} : vector<8x128xf32> to vector<8x32xf32>
    %118 = math.tanh %117 : vector<8x32xf32>
    %119 = vector.extract_strided_slice %116 {offsets = [0, 0], sizes = [8, 32], strides = [1, 1]} : vector<8x96xf32> to vector<8x32xf32>
    %120 = vector.extract_strided_slice %116 {offsets = [0, 32], sizes = [8, 32], strides = [1, 1]} : vector<8x96xf32> to vector<8x32xf32>
    %121 = vector.extract_strided_slice %116 {offsets = [0, 64], sizes = [8, 32], strides = [1, 1]} : vector<8x96xf32> to vector<8x32xf32>
    %122 = arith.mulf %120, %104 : vector<8x32xf32>
    %123 = arith.mulf %119, %118 : vector<8x32xf32>
    %124 = arith.addf %122, %123 : vector<8x32xf32>
    %125 = math.tanh %124 : vector<8x32xf32>
    %126 = arith.mulf %121, %125 : vector<8x32xf32>
    %c40 = arith.constant 40 : index
    %c0_26 = arith.constant 0 : index
    %127 = vector.load %arg20[%c40, %c0_26] : memref<64x32xf32, #tpu.memory_space<vmem>>, vector<8x32xf32>
    tpu.vector_store %arg20[%c40, %c0_26], %126 {strides = array<i32>} : memref<64x32xf32, #tpu.memory_space<vmem>>, vector<8x32xf32>,
    %128 = vector.extract_strided_slice %7 {offsets = [48, 0], sizes = [8, 128], strides = [1, 1]} : vector<64x128xf32> to vector<8x128xf32>
    %cst_27 = arith.constant dense<0.000000e+00> : vector<8x128xf32>
    %129 = tpu.matmul %126, %3, %cst_27 {dimension_numbers = #tpu.dot_dimension_numbers<[1], [0], [0], [1], [0, 0, 1, 1], [], []>} : vector<8x32xf32>, vector<32x128xf32>, vector<8x128xf32> -> vector<8x128xf32>
    %130 = arith.addf %128, %129 : vector<8x128xf32>
    %131 = vector.extract_strided_slice %130 {offsets = [0, 0], sizes = [8, 96], strides = [1, 1]} : vector<8x128xf32> to vector<8x96xf32>
    %132 = arith.negf %131 : vector<8x96xf32>
    %133 = math.exp %132 : vector<8x96xf32>
    %cst_28 = arith.constant 1.000000e+00 : f32
    %134 = vector.broadcast %cst_28 : f32 to vector<8x96xf32>
    %135 = arith.addf %134, %133 : vector<8x96xf32>
    %136 = arith.divf %134, %135 : vector<8x96xf32>
    %137 = vector.extract_strided_slice %130 {offsets = [0, 96], sizes = [8, 32], strides = [1, 1]} : vector<8x128xf32> to vector<8x32xf32>
    %138 = math.tanh %137 : vector<8x32xf32>
    %139 = vector.extract_strided_slice %136 {offsets = [0, 0], sizes = [8, 32], strides = [1, 1]} : vector<8x96xf32> to vector<8x32xf32>
    %140 = vector.extract_strided_slice %136 {offsets = [0, 32], sizes = [8, 32], strides = [1, 1]} : vector<8x96xf32> to vector<8x32xf32>
    %141 = vector.extract_strided_slice %136 {offsets = [0, 64], sizes = [8, 32], strides = [1, 1]} : vector<8x96xf32> to vector<8x32xf32>
    %142 = arith.mulf %140, %124 : vector<8x32xf32>
    %143 = arith.mulf %139, %138 : vector<8x32xf32>
    %144 = arith.addf %142, %143 : vector<8x32xf32>
    %145 = math.tanh %144 : vector<8x32xf32>
    %146 = arith.mulf %141, %145 : vector<8x32xf32>
    %c48 = arith.constant 48 : index
    %c0_29 = arith.constant 0 : index
    %147 = vector.load %arg20[%c48, %c0_29] : memref<64x32xf32, #tpu.memory_space<vmem>>, vector<8x32xf32>
    tpu.vector_store %arg20[%c48, %c0_29], %146 {strides = array<i32>} : memref<64x32xf32, #tpu.memory_space<vmem>>, vector<8x32xf32>,
    %148 = vector.extract_strided_slice %7 {offsets = [56, 0], sizes = [8, 128], strides = [1, 1]} : vector<64x128xf32> to vector<8x128xf32>
    %cst_30 = arith.constant dense<0.000000e+00> : vector<8x128xf32>
    %149 = tpu.matmul %146, %3, %cst_30 {dimension_numbers = #tpu.dot_dimension_numbers<[1], [0], [0], [1], [0, 0, 1, 1], [], []>} : vector<8x32xf32>, vector<32x128xf32>, vector<8x128xf32> -> vector<8x128xf32>
    %150 = arith.addf %148, %149 : vector<8x128xf32>
    %151 = vector.extract_strided_slice %150 {offsets = [0, 0], sizes = [8, 96], strides = [1, 1]} : vector<8x128xf32> to vector<8x96xf32>
    %152 = arith.negf %151 : vector<8x96xf32>
    %153 = math.exp %152 : vector<8x96xf32>
    %cst_31 = arith.constant 1.000000e+00 : f32
    %154 = vector.broadcast %cst_31 : f32 to vector<8x96xf32>
    %155 = arith.addf %154, %153 : vector<8x96xf32>
    %156 = arith.divf %154, %155 : vector<8x96xf32>
    %157 = vector.extract_strided_slice %150 {offsets = [0, 96], sizes = [8, 32], strides = [1, 1]} : vector<8x128xf32> to vector<8x32xf32>
    %158 = math.tanh %157 : vector<8x32xf32>
    %159 = vector.extract_strided_slice %156 {offsets = [0, 0], sizes = [8, 32], strides = [1, 1]} : vector<8x96xf32> to vector<8x32xf32>
    %160 = vector.extract_strided_slice %156 {offsets = [0, 32], sizes = [8, 32], strides = [1, 1]} : vector<8x96xf32> to vector<8x32xf32>
    %161 = vector.extract_strided_slice %156 {offsets = [0, 64], sizes = [8, 32], strides = [1, 1]} : vector<8x96xf32> to vector<8x32xf32>
    %162 = arith.mulf %160, %144 : vector<8x32xf32>
    %163 = arith.mulf %159, %158 : vector<8x32xf32>
    %164 = arith.addf %162, %163 : vector<8x32xf32>
    %165 = math.tanh %164 : vector<8x32xf32>
    %166 = arith.mulf %161, %165 : vector<8x32xf32>
    %c56 = arith.constant 56 : index
    %c0_32 = arith.constant 0 : index
    %167 = vector.load %arg20[%c56, %c0_32] : memref<64x32xf32, #tpu.memory_space<vmem>>, vector<8x32xf32>
    tpu.vector_store %arg20[%c56, %c0_32], %166 {strides = array<i32>} : memref<64x32xf32, #tpu.memory_space<vmem>>, vector<8x32xf32>,
    %c0_33 = arith.constant 0 : index
    %c0_34 = arith.constant 0 : index
    %168 = vector.load %arg20[%c0_33, %c0_34] : memref<64x32xf32, #tpu.memory_space<vmem>>, vector<64x32xf32>
    %c0_35 = arith.constant 0 : index
    %c0_36 = arith.constant 0 : index
    %169 = vector.load %arg4[%c0_35, %c0_36] : memref<32x128xf32, #tpu.memory_space<vmem>>, vector<32x128xf32>
    %c0_37 = arith.constant 0 : index
    %c0_38 = arith.constant 0 : index
    %170 = vector.load %arg5[%c0_37, %c0_38] : memref<32x128xf32, #tpu.memory_space<vmem>>, vector<32x128xf32>
    %c0_39 = arith.constant 0 : index
    %c0_40 = arith.constant 0 : index
    %171 = vector.load %arg6[%c0_39, %c0_40] : memref<1x128xf32, #tpu.memory_space<vmem>>, vector<1x128xf32>
    %cst_41 = arith.constant dense<0.000000e+00> : vector<64x128xf32>
    %172 = tpu.matmul %168, %169, %cst_41 {dimension_numbers = #tpu.dot_dimension_numbers<[1], [0], [0], [1], [0, 0, 1, 1], [], []>} : vector<64x32xf32>, vector<32x128xf32>, vector<64x128xf32> -> vector<64x128xf32>
    %173 = vector.broadcast %171 : vector<1x128xf32> to vector<64x128xf32>
    %174 = arith.addf %172, %173 : vector<64x128xf32>
    %175 = vector.extract_strided_slice %174 {offsets = [0, 0], sizes = [8, 128], strides = [1, 1]} : vector<64x128xf32> to vector<8x128xf32>
    %cst_42 = arith.constant dense<0.000000e+00> : vector<8x128xf32>
    %176 = tpu.matmul %0, %170, %cst_42 {dimension_numbers = #tpu.dot_dimension_numbers<[1], [0], [0], [1], [0, 0, 1, 1], [], []>} : vector<8x32xf32>, vector<32x128xf32>, vector<8x128xf32> -> vector<8x128xf32>
    %177 = arith.addf %175, %176 : vector<8x128xf32>
    %178 = vector.extract_strided_slice %177 {offsets = [0, 0], sizes = [8, 96], strides = [1, 1]} : vector<8x128xf32> to vector<8x96xf32>
    %179 = arith.negf %178 : vector<8x96xf32>
    %180 = math.exp %179 : vector<8x96xf32>
    %cst_43 = arith.constant 1.000000e+00 : f32
    %181 = vector.broadcast %cst_43 : f32 to vector<8x96xf32>
    %182 = arith.addf %181, %180 : vector<8x96xf32>
    %183 = arith.divf %181, %182 : vector<8x96xf32>
    %184 = vector.extract_strided_slice %177 {offsets = [0, 96], sizes = [8, 32], strides = [1, 1]} : vector<8x128xf32> to vector<8x32xf32>
    %185 = math.tanh %184 : vector<8x32xf32>
    %186 = vector.extract_strided_slice %183 {offsets = [0, 0], sizes = [8, 32], strides = [1, 1]} : vector<8x96xf32> to vector<8x32xf32>
    %187 = vector.extract_strided_slice %183 {offsets = [0, 32], sizes = [8, 32], strides = [1, 1]} : vector<8x96xf32> to vector<8x32xf32>
    %188 = vector.extract_strided_slice %183 {offsets = [0, 64], sizes = [8, 32], strides = [1, 1]} : vector<8x96xf32> to vector<8x32xf32>
    %189 = arith.mulf %187, %0 : vector<8x32xf32>
    %190 = arith.mulf %186, %185 : vector<8x32xf32>
    %191 = arith.addf %189, %190 : vector<8x32xf32>
    %192 = math.tanh %191 : vector<8x32xf32>
    %193 = arith.mulf %188, %192 : vector<8x32xf32>
    %194 = vector.extract_strided_slice %174 {offsets = [8, 0], sizes = [8, 128], strides = [1, 1]} : vector<64x128xf32> to vector<8x128xf32>
    %cst_44 = arith.constant dense<0.000000e+00> : vector<8x128xf32>
    %195 = tpu.matmul %193, %170, %cst_44 {dimension_numbers = #tpu.dot_dimension_numbers<[1], [0], [0], [1], [0, 0, 1, 1], [], []>} : vector<8x32xf32>, vector<32x128xf32>, vector<8x128xf32> -> vector<8x128xf32>
    %196 = arith.addf %194, %195 : vector<8x128xf32>
    %197 = vector.extract_strided_slice %196 {offsets = [0, 0], sizes = [8, 96], strides = [1, 1]} : vector<8x128xf32> to vector<8x96xf32>
    %198 = arith.negf %197 : vector<8x96xf32>
    %199 = math.exp %198 : vector<8x96xf32>
    %cst_45 = arith.constant 1.000000e+00 : f32
    %200 = vector.broadcast %cst_45 : f32 to vector<8x96xf32>
    %201 = arith.addf %200, %199 : vector<8x96xf32>
    %202 = arith.divf %200, %201 : vector<8x96xf32>
    %203 = vector.extract_strided_slice %196 {offsets = [0, 96], sizes = [8, 32], strides = [1, 1]} : vector<8x128xf32> to vector<8x32xf32>
    %204 = math.tanh %203 : vector<8x32xf32>
    %205 = vector.extract_strided_slice %202 {offsets = [0, 0], sizes = [8, 32], strides = [1, 1]} : vector<8x96xf32> to vector<8x32xf32>
    %206 = vector.extract_strided_slice %202 {offsets = [0, 32], sizes = [8, 32], strides = [1, 1]} : vector<8x96xf32> to vector<8x32xf32>
    %207 = vector.extract_strided_slice %202 {offsets = [0, 64], sizes = [8, 32], strides = [1, 1]} : vector<8x96xf32> to vector<8x32xf32>
    %208 = arith.mulf %206, %191 : vector<8x32xf32>
    %209 = arith.mulf %205, %204 : vector<8x32xf32>
    %210 = arith.addf %208, %209 : vector<8x32xf32>
    %211 = math.tanh %210 : vector<8x32xf32>
    %212 = arith.mulf %207, %211 : vector<8x32xf32>
    %213 = vector.extract_strided_slice %174 {offsets = [16, 0], sizes = [8, 128], strides = [1, 1]} : vector<64x128xf32> to vector<8x128xf32>
    %cst_46 = arith.constant dense<0.000000e+00> : vector<8x128xf32>
    %214 = tpu.matmul %212, %170, %cst_46 {dimension_numbers = #tpu.dot_dimension_numbers<[1], [0], [0], [1], [0, 0, 1, 1], [], []>} : vector<8x32xf32>, vector<32x128xf32>, vector<8x128xf32> -> vector<8x128xf32>
    %215 = arith.addf %213, %214 : vector<8x128xf32>
    %216 = vector.extract_strided_slice %215 {offsets = [0, 0], sizes = [8, 96], strides = [1, 1]} : vector<8x128xf32> to vector<8x96xf32>
    %217 = arith.negf %216 : vector<8x96xf32>
    %218 = math.exp %217 : vector<8x96xf32>
    %cst_47 = arith.constant 1.000000e+00 : f32
    %219 = vector.broadcast %cst_47 : f32 to vector<8x96xf32>
    %220 = arith.addf %219, %218 : vector<8x96xf32>
    %221 = arith.divf %219, %220 : vector<8x96xf32>
    %222 = vector.extract_strided_slice %215 {offsets = [0, 96], sizes = [8, 32], strides = [1, 1]} : vector<8x128xf32> to vector<8x32xf32>
    %223 = math.tanh %222 : vector<8x32xf32>
    %224 = vector.extract_strided_slice %221 {offsets = [0, 0], sizes = [8, 32], strides = [1, 1]} : vector<8x96xf32> to vector<8x32xf32>
    %225 = vector.extract_strided_slice %221 {offsets = [0, 32], sizes = [8, 32], strides = [1, 1]} : vector<8x96xf32> to vector<8x32xf32>
    %226 = vector.extract_strided_slice %221 {offsets = [0, 64], sizes = [8, 32], strides = [1, 1]} : vector<8x96xf32> to vector<8x32xf32>
    %227 = arith.mulf %225, %210 : vector<8x32xf32>
    %228 = arith.mulf %224, %223 : vector<8x32xf32>
    %229 = arith.addf %227, %228 : vector<8x32xf32>
    %230 = math.tanh %229 : vector<8x32xf32>
    %231 = arith.mulf %226, %230 : vector<8x32xf32>
    %232 = vector.extract_strided_slice %174 {offsets = [24, 0], sizes = [8, 128], strides = [1, 1]} : vector<64x128xf32> to vector<8x128xf32>
    %cst_48 = arith.constant dense<0.000000e+00> : vector<8x128xf32>
    %233 = tpu.matmul %231, %170, %cst_48 {dimension_numbers = #tpu.dot_dimension_numbers<[1], [0], [0], [1], [0, 0, 1, 1], [], []>} : vector<8x32xf32>, vector<32x128xf32>, vector<8x128xf32> -> vector<8x128xf32>
    %234 = arith.addf %232, %233 : vector<8x128xf32>
    %235 = vector.extract_strided_slice %234 {offsets = [0, 0], sizes = [8, 96], strides = [1, 1]} : vector<8x128xf32> to vector<8x96xf32>
    %236 = arith.negf %235 : vector<8x96xf32>
    %237 = math.exp %236 : vector<8x96xf32>
    %cst_49 = arith.constant 1.000000e+00 : f32
    %238 = vector.broadcast %cst_49 : f32 to vector<8x96xf32>
    %239 = arith.addf %238, %237 : vector<8x96xf32>
    %240 = arith.divf %238, %239 : vector<8x96xf32>
    %241 = vector.extract_strided_slice %234 {offsets = [0, 96], sizes = [8, 32], strides = [1, 1]} : vector<8x128xf32> to vector<8x32xf32>
    %242 = math.tanh %241 : vector<8x32xf32>
    %243 = vector.extract_strided_slice %240 {offsets = [0, 0], sizes = [8, 32], strides = [1, 1]} : vector<8x96xf32> to vector<8x32xf32>
    %244 = vector.extract_strided_slice %240 {offsets = [0, 32], sizes = [8, 32], strides = [1, 1]} : vector<8x96xf32> to vector<8x32xf32>
    %245 = vector.extract_strided_slice %240 {offsets = [0, 64], sizes = [8, 32], strides = [1, 1]} : vector<8x96xf32> to vector<8x32xf32>
    %246 = arith.mulf %244, %229 : vector<8x32xf32>
    %247 = arith.mulf %243, %242 : vector<8x32xf32>
    %248 = arith.addf %246, %247 : vector<8x32xf32>
    %249 = math.tanh %248 : vector<8x32xf32>
    %250 = arith.mulf %245, %249 : vector<8x32xf32>
    %251 = vector.extract_strided_slice %174 {offsets = [32, 0], sizes = [8, 128], strides = [1, 1]} : vector<64x128xf32> to vector<8x128xf32>
    %cst_50 = arith.constant dense<0.000000e+00> : vector<8x128xf32>
    %252 = tpu.matmul %250, %170, %cst_50 {dimension_numbers = #tpu.dot_dimension_numbers<[1], [0], [0], [1], [0, 0, 1, 1], [], []>} : vector<8x32xf32>, vector<32x128xf32>, vector<8x128xf32> -> vector<8x128xf32>
    %253 = arith.addf %251, %252 : vector<8x128xf32>
    %254 = vector.extract_strided_slice %253 {offsets = [0, 0], sizes = [8, 96], strides = [1, 1]} : vector<8x128xf32> to vector<8x96xf32>
    %255 = arith.negf %254 : vector<8x96xf32>
    %256 = math.exp %255 : vector<8x96xf32>
    %cst_51 = arith.constant 1.000000e+00 : f32
    %257 = vector.broadcast %cst_51 : f32 to vector<8x96xf32>
    %258 = arith.addf %257, %256 : vector<8x96xf32>
    %259 = arith.divf %257, %258 : vector<8x96xf32>
    %260 = vector.extract_strided_slice %253 {offsets = [0, 96], sizes = [8, 32], strides = [1, 1]} : vector<8x128xf32> to vector<8x32xf32>
    %261 = math.tanh %260 : vector<8x32xf32>
    %262 = vector.extract_strided_slice %259 {offsets = [0, 0], sizes = [8, 32], strides = [1, 1]} : vector<8x96xf32> to vector<8x32xf32>
    %263 = vector.extract_strided_slice %259 {offsets = [0, 32], sizes = [8, 32], strides = [1, 1]} : vector<8x96xf32> to vector<8x32xf32>
    %264 = vector.extract_strided_slice %259 {offsets = [0, 64], sizes = [8, 32], strides = [1, 1]} : vector<8x96xf32> to vector<8x32xf32>
    %265 = arith.mulf %263, %248 : vector<8x32xf32>
    %266 = arith.mulf %262, %261 : vector<8x32xf32>
    %267 = arith.addf %265, %266 : vector<8x32xf32>
    %268 = math.tanh %267 : vector<8x32xf32>
    %269 = arith.mulf %264, %268 : vector<8x32xf32>
    %270 = vector.extract_strided_slice %174 {offsets = [40, 0], sizes = [8, 128], strides = [1, 1]} : vector<64x128xf32> to vector<8x128xf32>
    %cst_52 = arith.constant dense<0.000000e+00> : vector<8x128xf32>
    %271 = tpu.matmul %269, %170, %cst_52 {dimension_numbers = #tpu.dot_dimension_numbers<[1], [0], [0], [1], [0, 0, 1, 1], [], []>} : vector<8x32xf32>, vector<32x128xf32>, vector<8x128xf32> -> vector<8x128xf32>
    %272 = arith.addf %270, %271 : vector<8x128xf32>
    %273 = vector.extract_strided_slice %272 {offsets = [0, 0], sizes = [8, 96], strides = [1, 1]} : vector<8x128xf32> to vector<8x96xf32>
    %274 = arith.negf %273 : vector<8x96xf32>
    %275 = math.exp %274 : vector<8x96xf32>
    %cst_53 = arith.constant 1.000000e+00 : f32
    %276 = vector.broadcast %cst_53 : f32 to vector<8x96xf32>
    %277 = arith.addf %276, %275 : vector<8x96xf32>
    %278 = arith.divf %276, %277 : vector<8x96xf32>
    %279 = vector.extract_strided_slice %272 {offsets = [0, 96], sizes = [8, 32], strides = [1, 1]} : vector<8x128xf32> to vector<8x32xf32>
    %280 = math.tanh %279 : vector<8x32xf32>
    %281 = vector.extract_strided_slice %278 {offsets = [0, 0], sizes = [8, 32], strides = [1, 1]} : vector<8x96xf32> to vector<8x32xf32>
    %282 = vector.extract_strided_slice %278 {offsets = [0, 32], sizes = [8, 32], strides = [1, 1]} : vector<8x96xf32> to vector<8x32xf32>
    %283 = vector.extract_strided_slice %278 {offsets = [0, 64], sizes = [8, 32], strides = [1, 1]} : vector<8x96xf32> to vector<8x32xf32>
    %284 = arith.mulf %282, %267 : vector<8x32xf32>
    %285 = arith.mulf %281, %280 : vector<8x32xf32>
    %286 = arith.addf %284, %285 : vector<8x32xf32>
    %287 = math.tanh %286 : vector<8x32xf32>
    %288 = arith.mulf %283, %287 : vector<8x32xf32>
    %289 = vector.extract_strided_slice %174 {offsets = [48, 0], sizes = [8, 128], strides = [1, 1]} : vector<64x128xf32> to vector<8x128xf32>
    %cst_54 = arith.constant dense<0.000000e+00> : vector<8x128xf32>
    %290 = tpu.matmul %288, %170, %cst_54 {dimension_numbers = #tpu.dot_dimension_numbers<[1], [0], [0], [1], [0, 0, 1, 1], [], []>} : vector<8x32xf32>, vector<32x128xf32>, vector<8x128xf32> -> vector<8x128xf32>
    %291 = arith.addf %289, %290 : vector<8x128xf32>
    %292 = vector.extract_strided_slice %291 {offsets = [0, 0], sizes = [8, 96], strides = [1, 1]} : vector<8x128xf32> to vector<8x96xf32>
    %293 = arith.negf %292 : vector<8x96xf32>
    %294 = math.exp %293 : vector<8x96xf32>
    %cst_55 = arith.constant 1.000000e+00 : f32
    %295 = vector.broadcast %cst_55 : f32 to vector<8x96xf32>
    %296 = arith.addf %295, %294 : vector<8x96xf32>
    %297 = arith.divf %295, %296 : vector<8x96xf32>
    %298 = vector.extract_strided_slice %291 {offsets = [0, 96], sizes = [8, 32], strides = [1, 1]} : vector<8x128xf32> to vector<8x32xf32>
    %299 = math.tanh %298 : vector<8x32xf32>
    %300 = vector.extract_strided_slice %297 {offsets = [0, 0], sizes = [8, 32], strides = [1, 1]} : vector<8x96xf32> to vector<8x32xf32>
    %301 = vector.extract_strided_slice %297 {offsets = [0, 32], sizes = [8, 32], strides = [1, 1]} : vector<8x96xf32> to vector<8x32xf32>
    %302 = vector.extract_strided_slice %297 {offsets = [0, 64], sizes = [8, 32], strides = [1, 1]} : vector<8x96xf32> to vector<8x32xf32>
    %303 = arith.mulf %301, %286 : vector<8x32xf32>
    %304 = arith.mulf %300, %299 : vector<8x32xf32>
    %305 = arith.addf %303, %304 : vector<8x32xf32>
    %306 = math.tanh %305 : vector<8x32xf32>
    %307 = arith.mulf %302, %306 : vector<8x32xf32>
    %308 = vector.extract_strided_slice %174 {offsets = [56, 0], sizes = [8, 128], strides = [1, 1]} : vector<64x128xf32> to vector<8x128xf32>
    %cst_56 = arith.constant dense<0.000000e+00> : vector<8x128xf32>
    %309 = tpu.matmul %307, %170, %cst_56 {dimension_numbers = #tpu.dot_dimension_numbers<[1], [0], [0], [1], [0, 0, 1, 1], [], []>} : vector<8x32xf32>, vector<32x128xf32>, vector<8x128xf32> -> vector<8x128xf32>
    %310 = arith.addf %308, %309 : vector<8x128xf32>
    %311 = vector.extract_strided_slice %310 {offsets = [0, 0], sizes = [8, 96], strides = [1, 1]} : vector<8x128xf32> to vector<8x96xf32>
    %312 = arith.negf %311 : vector<8x96xf32>
    %313 = math.exp %312 : vector<8x96xf32>
    %cst_57 = arith.constant 1.000000e+00 : f32
    %314 = vector.broadcast %cst_57 : f32 to vector<8x96xf32>
    %315 = arith.addf %314, %313 : vector<8x96xf32>
    %316 = arith.divf %314, %315 : vector<8x96xf32>
    %317 = vector.extract_strided_slice %310 {offsets = [0, 96], sizes = [8, 32], strides = [1, 1]} : vector<8x128xf32> to vector<8x32xf32>
    %318 = math.tanh %317 : vector<8x32xf32>
    %319 = vector.extract_strided_slice %316 {offsets = [0, 0], sizes = [8, 32], strides = [1, 1]} : vector<8x96xf32> to vector<8x32xf32>
    %320 = vector.extract_strided_slice %316 {offsets = [0, 32], sizes = [8, 32], strides = [1, 1]} : vector<8x96xf32> to vector<8x32xf32>
    %321 = vector.extract_strided_slice %316 {offsets = [0, 64], sizes = [8, 32], strides = [1, 1]} : vector<8x96xf32> to vector<8x32xf32>
    %322 = arith.mulf %320, %305 : vector<8x32xf32>
    %323 = arith.mulf %319, %318 : vector<8x32xf32>
    %324 = arith.addf %322, %323 : vector<8x32xf32>
    %325 = math.tanh %324 : vector<8x32xf32>
    %326 = arith.mulf %321, %325 : vector<8x32xf32>
    %c0_58 = arith.constant 0 : index
    %c0_59 = arith.constant 0 : index
    %327 = vector.load %arg13[%c0_58, %c0_59] : memref<32x16xf32, #tpu.memory_space<vmem>>, vector<32x16xf32>
    %cst_60 = arith.constant dense<0.000000e+00> : vector<8x16xf32>
    %328 = tpu.matmul %326, %327, %cst_60 {dimension_numbers = #tpu.dot_dimension_numbers<[1], [0], [0], [1], [0, 0, 1, 1], [], []>} : vector<8x32xf32>, vector<32x16xf32>, vector<8x16xf32> -> vector<8x16xf32>
    %c0_61 = arith.constant 0 : index
    %c0_62 = arith.constant 0 : index
    %329 = vector.load %arg14[%c0_61, %c0_62] : memref<1x16xf32, #tpu.memory_space<vmem>>, vector<1x16xf32>
    %330 = vector.broadcast %329 : vector<1x16xf32> to vector<8x16xf32>
    %331 = arith.addf %328, %330 : vector<8x16xf32>
    %c0_63 = arith.constant 0 : index
    %c0_64 = arith.constant 0 : index
    %332 = vector.load %arg15[%c0_63, %c0_64] : memref<16x32xf32, #tpu.memory_space<vmem>>, vector<16x32xf32>
    %cst_65 = arith.constant dense<0.000000e+00> : vector<8x32xf32>
    %333 = tpu.matmul %331, %332, %cst_65 {dimension_numbers = #tpu.dot_dimension_numbers<[1], [0], [0], [1], [0, 0, 1, 1], [], []>} : vector<8x16xf32>, vector<16x32xf32>, vector<8x32xf32> -> vector<8x32xf32>
    %c0_66 = arith.constant 0 : index
    %c0_67 = arith.constant 0 : index
    %334 = vector.load %arg16[%c0_66, %c0_67] : memref<1x32xf32, #tpu.memory_space<vmem>>, vector<1x32xf32>
    %335 = vector.broadcast %334 : vector<1x32xf32> to vector<8x32xf32>
    %336 = arith.addf %333, %335 : vector<8x32xf32>
    %cst_68 = arith.constant 0.000000e+00 : f32
    %337 = vector.broadcast %cst_68 : f32 to vector<8x32xf32>
    %c0_69 = arith.constant 0 : index
    %c0_70 = arith.constant 0 : index
    %338 = vector.load %arg8[%c0_69, %c0_70] : memref<32x128xf32, #tpu.memory_space<vmem>>, vector<32x128xf32>
    %c0_71 = arith.constant 0 : index
    %c0_72 = arith.constant 0 : index
    %339 = vector.load %arg9[%c0_71, %c0_72] : memref<1x128xf32, #tpu.memory_space<vmem>>, vector<1x128xf32>
    %340 = vector.shape_cast %339 : vector<1x128xf32> to vector<1x128xf32>
    %341 = vector.broadcast %340 : vector<1x128xf32> to vector<8x128xf32>
    %cst_73 = arith.constant dense<0.000000e+00> : vector<8x128xf32>
    %342 = tpu.matmul %336, %338, %cst_73 {dimension_numbers = #tpu.dot_dimension_numbers<[1], [0], [0], [1], [0, 0, 1, 1], [], []>} : vector<8x32xf32>, vector<32x128xf32>, vector<8x128xf32> -> vector<8x128xf32>
    %343 = arith.addf %341, %342 : vector<8x128xf32>
    %344 = vector.extract_strided_slice %343 {offsets = [0, 0], sizes = [8, 96], strides = [1, 1]} : vector<8x128xf32> to vector<8x96xf32>
    %345 = arith.negf %344 : vector<8x96xf32>
    %346 = math.exp %345 : vector<8x96xf32>
    %cst_74 = arith.constant 1.000000e+00 : f32
    %347 = vector.broadcast %cst_74 : f32 to vector<8x96xf32>
    %348 = arith.addf %347, %346 : vector<8x96xf32>
    %349 = arith.divf %347, %348 : vector<8x96xf32>
    %350 = vector.extract_strided_slice %343 {offsets = [0, 96], sizes = [8, 32], strides = [1, 1]} : vector<8x128xf32> to vector<8x32xf32>
    %351 = math.tanh %350 : vector<8x32xf32>
    %352 = vector.extract_strided_slice %349 {offsets = [0, 0], sizes = [8, 32], strides = [1, 1]} : vector<8x96xf32> to vector<8x32xf32>
    %353 = vector.extract_strided_slice %349 {offsets = [0, 32], sizes = [8, 32], strides = [1, 1]} : vector<8x96xf32> to vector<8x32xf32>
    %354 = vector.extract_strided_slice %349 {offsets = [0, 64], sizes = [8, 32], strides = [1, 1]} : vector<8x96xf32> to vector<8x32xf32>
    %355 = arith.mulf %353, %337 : vector<8x32xf32>
    %356 = arith.mulf %352, %351 : vector<8x32xf32>
    %357 = arith.addf %355, %356 : vector<8x32xf32>
    %358 = math.tanh %357 : vector<8x32xf32>
    %359 = arith.mulf %354, %358 : vector<8x32xf32>
    %c0_75 = arith.constant 0 : index
    %c0_76 = arith.constant 0 : index
    %360 = vector.load %arg20[%c0_75, %c0_76] : memref<64x32xf32, #tpu.memory_space<vmem>>, vector<8x32xf32>
    tpu.vector_store %arg20[%c0_75, %c0_76], %359 {strides = array<i32>} : memref<64x32xf32, #tpu.memory_space<vmem>>, vector<8x32xf32>,
    %cst_77 = arith.constant dense<0.000000e+00> : vector<8x128xf32>
    %361 = tpu.matmul %359, %338, %cst_77 {dimension_numbers = #tpu.dot_dimension_numbers<[1], [0], [0], [1], [0, 0, 1, 1], [], []>} : vector<8x32xf32>, vector<32x128xf32>, vector<8x128xf32> -> vector<8x128xf32>
    %362 = arith.addf %341, %361 : vector<8x128xf32>
    %363 = vector.extract_strided_slice %362 {offsets = [0, 0], sizes = [8, 96], strides = [1, 1]} : vector<8x128xf32> to vector<8x96xf32>
    %364 = arith.negf %363 : vector<8x96xf32>
    %365 = math.exp %364 : vector<8x96xf32>
    %cst_78 = arith.constant 1.000000e+00 : f32
    %366 = vector.broadcast %cst_78 : f32 to vector<8x96xf32>
    %367 = arith.addf %366, %365 : vector<8x96xf32>
    %368 = arith.divf %366, %367 : vector<8x96xf32>
    %369 = vector.extract_strided_slice %362 {offsets = [0, 96], sizes = [8, 32], strides = [1, 1]} : vector<8x128xf32> to vector<8x32xf32>
    %370 = math.tanh %369 : vector<8x32xf32>
    %371 = vector.extract_strided_slice %368 {offsets = [0, 0], sizes = [8, 32], strides = [1, 1]} : vector<8x96xf32> to vector<8x32xf32>
    %372 = vector.extract_strided_slice %368 {offsets = [0, 32], sizes = [8, 32], strides = [1, 1]} : vector<8x96xf32> to vector<8x32xf32>
    %373 = vector.extract_strided_slice %368 {offsets = [0, 64], sizes = [8, 32], strides = [1, 1]} : vector<8x96xf32> to vector<8x32xf32>
    %374 = arith.mulf %372, %357 : vector<8x32xf32>
    %375 = arith.mulf %371, %370 : vector<8x32xf32>
    %376 = arith.addf %374, %375 : vector<8x32xf32>
    %377 = math.tanh %376 : vector<8x32xf32>
    %378 = arith.mulf %373, %377 : vector<8x32xf32>
    %c8_79 = arith.constant 8 : index
    %c0_80 = arith.constant 0 : index
    %379 = vector.load %arg20[%c8_79, %c0_80] : memref<64x32xf32, #tpu.memory_space<vmem>>, vector<8x32xf32>
    tpu.vector_store %arg20[%c8_79, %c0_80], %378 {strides = array<i32>} : memref<64x32xf32, #tpu.memory_space<vmem>>, vector<8x32xf32>,
    %cst_81 = arith.constant dense<0.000000e+00> : vector<8x128xf32>
    %380 = tpu.matmul %378, %338, %cst_81 {dimension_numbers = #tpu.dot_dimension_numbers<[1], [0], [0], [1], [0, 0, 1, 1], [], []>} : vector<8x32xf32>, vector<32x128xf32>, vector<8x128xf32> -> vector<8x128xf32>
    %381 = arith.addf %341, %380 : vector<8x128xf32>
    %382 = vector.extract_strided_slice %381 {offsets = [0, 0], sizes = [8, 96], strides = [1, 1]} : vector<8x128xf32> to vector<8x96xf32>
    %383 = arith.negf %382 : vector<8x96xf32>
    %384 = math.exp %383 : vector<8x96xf32>
    %cst_82 = arith.constant 1.000000e+00 : f32
    %385 = vector.broadcast %cst_82 : f32 to vector<8x96xf32>
    %386 = arith.addf %385, %384 : vector<8x96xf32>
    %387 = arith.divf %385, %386 : vector<8x96xf32>
    %388 = vector.extract_strided_slice %381 {offsets = [0, 96], sizes = [8, 32], strides = [1, 1]} : vector<8x128xf32> to vector<8x32xf32>
    %389 = math.tanh %388 : vector<8x32xf32>
    %390 = vector.extract_strided_slice %387 {offsets = [0, 0], sizes = [8, 32], strides = [1, 1]} : vector<8x96xf32> to vector<8x32xf32>
    %391 = vector.extract_strided_slice %387 {offsets = [0, 32], sizes = [8, 32], strides = [1, 1]} : vector<8x96xf32> to vector<8x32xf32>
    %392 = vector.extract_strided_slice %387 {offsets = [0, 64], sizes = [8, 32], strides = [1, 1]} : vector<8x96xf32> to vector<8x32xf32>
    %393 = arith.mulf %391, %376 : vector<8x32xf32>
    %394 = arith.mulf %390, %389 : vector<8x32xf32>
    %395 = arith.addf %393, %394 : vector<8x32xf32>
    %396 = math.tanh %395 : vector<8x32xf32>
    %397 = arith.mulf %392, %396 : vector<8x32xf32>
    %c16_83 = arith.constant 16 : index
    %c0_84 = arith.constant 0 : index
    %398 = vector.load %arg20[%c16_83, %c0_84] : memref<64x32xf32, #tpu.memory_space<vmem>>, vector<8x32xf32>
    tpu.vector_store %arg20[%c16_83, %c0_84], %397 {strides = array<i32>} : memref<64x32xf32, #tpu.memory_space<vmem>>, vector<8x32xf32>,
    %cst_85 = arith.constant dense<0.000000e+00> : vector<8x128xf32>
    %399 = tpu.matmul %397, %338, %cst_85 {dimension_numbers = #tpu.dot_dimension_numbers<[1], [0], [0], [1], [0, 0, 1, 1], [], []>} : vector<8x32xf32>, vector<32x128xf32>, vector<8x128xf32> -> vector<8x128xf32>
    %400 = arith.addf %341, %399 : vector<8x128xf32>
    %401 = vector.extract_strided_slice %400 {offsets = [0, 0], sizes = [8, 96], strides = [1, 1]} : vector<8x128xf32> to vector<8x96xf32>
    %402 = arith.negf %401 : vector<8x96xf32>
    %403 = math.exp %402 : vector<8x96xf32>
    %cst_86 = arith.constant 1.000000e+00 : f32
    %404 = vector.broadcast %cst_86 : f32 to vector<8x96xf32>
    %405 = arith.addf %404, %403 : vector<8x96xf32>
    %406 = arith.divf %404, %405 : vector<8x96xf32>
    %407 = vector.extract_strided_slice %400 {offsets = [0, 96], sizes = [8, 32], strides = [1, 1]} : vector<8x128xf32> to vector<8x32xf32>
    %408 = math.tanh %407 : vector<8x32xf32>
    %409 = vector.extract_strided_slice %406 {offsets = [0, 0], sizes = [8, 32], strides = [1, 1]} : vector<8x96xf32> to vector<8x32xf32>
    %410 = vector.extract_strided_slice %406 {offsets = [0, 32], sizes = [8, 32], strides = [1, 1]} : vector<8x96xf32> to vector<8x32xf32>
    %411 = vector.extract_strided_slice %406 {offsets = [0, 64], sizes = [8, 32], strides = [1, 1]} : vector<8x96xf32> to vector<8x32xf32>
    %412 = arith.mulf %410, %395 : vector<8x32xf32>
    %413 = arith.mulf %409, %408 : vector<8x32xf32>
    %414 = arith.addf %412, %413 : vector<8x32xf32>
    %415 = math.tanh %414 : vector<8x32xf32>
    %416 = arith.mulf %411, %415 : vector<8x32xf32>
    %c24_87 = arith.constant 24 : index
    %c0_88 = arith.constant 0 : index
    %417 = vector.load %arg20[%c24_87, %c0_88] : memref<64x32xf32, #tpu.memory_space<vmem>>, vector<8x32xf32>
    tpu.vector_store %arg20[%c24_87, %c0_88], %416 {strides = array<i32>} : memref<64x32xf32, #tpu.memory_space<vmem>>, vector<8x32xf32>,
    %cst_89 = arith.constant dense<0.000000e+00> : vector<8x128xf32>
    %418 = tpu.matmul %416, %338, %cst_89 {dimension_numbers = #tpu.dot_dimension_numbers<[1], [0], [0], [1], [0, 0, 1, 1], [], []>} : vector<8x32xf32>, vector<32x128xf32>, vector<8x128xf32> -> vector<8x128xf32>
    %419 = arith.addf %341, %418 : vector<8x128xf32>
    %420 = vector.extract_strided_slice %419 {offsets = [0, 0], sizes = [8, 96], strides = [1, 1]} : vector<8x128xf32> to vector<8x96xf32>
    %421 = arith.negf %420 : vector<8x96xf32>
    %422 = math.exp %421 : vector<8x96xf32>
    %cst_90 = arith.constant 1.000000e+00 : f32
    %423 = vector.broadcast %cst_90 : f32 to vector<8x96xf32>
    %424 = arith.addf %423, %422 : vector<8x96xf32>
    %425 = arith.divf %423, %424 : vector<8x96xf32>
    %426 = vector.extract_strided_slice %419 {offsets = [0, 96], sizes = [8, 32], strides = [1, 1]} : vector<8x128xf32> to vector<8x32xf32>
    %427 = math.tanh %426 : vector<8x32xf32>
    %428 = vector.extract_strided_slice %425 {offsets = [0, 0], sizes = [8, 32], strides = [1, 1]} : vector<8x96xf32> to vector<8x32xf32>
    %429 = vector.extract_strided_slice %425 {offsets = [0, 32], sizes = [8, 32], strides = [1, 1]} : vector<8x96xf32> to vector<8x32xf32>
    %430 = vector.extract_strided_slice %425 {offsets = [0, 64], sizes = [8, 32], strides = [1, 1]} : vector<8x96xf32> to vector<8x32xf32>
    %431 = arith.mulf %429, %414 : vector<8x32xf32>
    %432 = arith.mulf %428, %427 : vector<8x32xf32>
    %433 = arith.addf %431, %432 : vector<8x32xf32>
    %434 = math.tanh %433 : vector<8x32xf32>
    %435 = arith.mulf %430, %434 : vector<8x32xf32>
    %c32_91 = arith.constant 32 : index
    %c0_92 = arith.constant 0 : index
    %436 = vector.load %arg20[%c32_91, %c0_92] : memref<64x32xf32, #tpu.memory_space<vmem>>, vector<8x32xf32>
    tpu.vector_store %arg20[%c32_91, %c0_92], %435 {strides = array<i32>} : memref<64x32xf32, #tpu.memory_space<vmem>>, vector<8x32xf32>,
    %cst_93 = arith.constant dense<0.000000e+00> : vector<8x128xf32>
    %437 = tpu.matmul %435, %338, %cst_93 {dimension_numbers = #tpu.dot_dimension_numbers<[1], [0], [0], [1], [0, 0, 1, 1], [], []>} : vector<8x32xf32>, vector<32x128xf32>, vector<8x128xf32> -> vector<8x128xf32>
    %438 = arith.addf %341, %437 : vector<8x128xf32>
    %439 = vector.extract_strided_slice %438 {offsets = [0, 0], sizes = [8, 96], strides = [1, 1]} : vector<8x128xf32> to vector<8x96xf32>
    %440 = arith.negf %439 : vector<8x96xf32>
    %441 = math.exp %440 : vector<8x96xf32>
    %cst_94 = arith.constant 1.000000e+00 : f32
    %442 = vector.broadcast %cst_94 : f32 to vector<8x96xf32>
    %443 = arith.addf %442, %441 : vector<8x96xf32>
    %444 = arith.divf %442, %443 : vector<8x96xf32>
    %445 = vector.extract_strided_slice %438 {offsets = [0, 96], sizes = [8, 32], strides = [1, 1]} : vector<8x128xf32> to vector<8x32xf32>
    %446 = math.tanh %445 : vector<8x32xf32>
    %447 = vector.extract_strided_slice %444 {offsets = [0, 0], sizes = [8, 32], strides = [1, 1]} : vector<8x96xf32> to vector<8x32xf32>
    %448 = vector.extract_strided_slice %444 {offsets = [0, 32], sizes = [8, 32], strides = [1, 1]} : vector<8x96xf32> to vector<8x32xf32>
    %449 = vector.extract_strided_slice %444 {offsets = [0, 64], sizes = [8, 32], strides = [1, 1]} : vector<8x96xf32> to vector<8x32xf32>
    %450 = arith.mulf %448, %433 : vector<8x32xf32>
    %451 = arith.mulf %447, %446 : vector<8x32xf32>
    %452 = arith.addf %450, %451 : vector<8x32xf32>
    %453 = math.tanh %452 : vector<8x32xf32>
    %454 = arith.mulf %449, %453 : vector<8x32xf32>
    %c40_95 = arith.constant 40 : index
    %c0_96 = arith.constant 0 : index
    %455 = vector.load %arg20[%c40_95, %c0_96] : memref<64x32xf32, #tpu.memory_space<vmem>>, vector<8x32xf32>
    tpu.vector_store %arg20[%c40_95, %c0_96], %454 {strides = array<i32>} : memref<64x32xf32, #tpu.memory_space<vmem>>, vector<8x32xf32>,
    %cst_97 = arith.constant dense<0.000000e+00> : vector<8x128xf32>
    %456 = tpu.matmul %454, %338, %cst_97 {dimension_numbers = #tpu.dot_dimension_numbers<[1], [0], [0], [1], [0, 0, 1, 1], [], []>} : vector<8x32xf32>, vector<32x128xf32>, vector<8x128xf32> -> vector<8x128xf32>
    %457 = arith.addf %341, %456 : vector<8x128xf32>
    %458 = vector.extract_strided_slice %457 {offsets = [0, 0], sizes = [8, 96], strides = [1, 1]} : vector<8x128xf32> to vector<8x96xf32>
    %459 = arith.negf %458 : vector<8x96xf32>
    %460 = math.exp %459 : vector<8x96xf32>
    %cst_98 = arith.constant 1.000000e+00 : f32
    %461 = vector.broadcast %cst_98 : f32 to vector<8x96xf32>
    %462 = arith.addf %461, %460 : vector<8x96xf32>
    %463 = arith.divf %461, %462 : vector<8x96xf32>
    %464 = vector.extract_strided_slice %457 {offsets = [0, 96], sizes = [8, 32], strides = [1, 1]} : vector<8x128xf32> to vector<8x32xf32>
    %465 = math.tanh %464 : vector<8x32xf32>
    %466 = vector.extract_strided_slice %463 {offsets = [0, 0], sizes = [8, 32], strides = [1, 1]} : vector<8x96xf32> to vector<8x32xf32>
    %467 = vector.extract_strided_slice %463 {offsets = [0, 32], sizes = [8, 32], strides = [1, 1]} : vector<8x96xf32> to vector<8x32xf32>
    %468 = vector.extract_strided_slice %463 {offsets = [0, 64], sizes = [8, 32], strides = [1, 1]} : vector<8x96xf32> to vector<8x32xf32>
    %469 = arith.mulf %467, %452 : vector<8x32xf32>
    %470 = arith.mulf %466, %465 : vector<8x32xf32>
    %471 = arith.addf %469, %470 : vector<8x32xf32>
    %472 = math.tanh %471 : vector<8x32xf32>
    %473 = arith.mulf %468, %472 : vector<8x32xf32>
    %c48_99 = arith.constant 48 : index
    %c0_100 = arith.constant 0 : index
    %474 = vector.load %arg20[%c48_99, %c0_100] : memref<64x32xf32, #tpu.memory_space<vmem>>, vector<8x32xf32>
    tpu.vector_store %arg20[%c48_99, %c0_100], %473 {strides = array<i32>} : memref<64x32xf32, #tpu.memory_space<vmem>>, vector<8x32xf32>,
    %cst_101 = arith.constant dense<0.000000e+00> : vector<8x128xf32>
    %475 = tpu.matmul %473, %338, %cst_101 {dimension_numbers = #tpu.dot_dimension_numbers<[1], [0], [0], [1], [0, 0, 1, 1], [], []>} : vector<8x32xf32>, vector<32x128xf32>, vector<8x128xf32> -> vector<8x128xf32>
    %476 = arith.addf %341, %475 : vector<8x128xf32>
    %477 = vector.extract_strided_slice %476 {offsets = [0, 0], sizes = [8, 96], strides = [1, 1]} : vector<8x128xf32> to vector<8x96xf32>
    %478 = arith.negf %477 : vector<8x96xf32>
    %479 = math.exp %478 : vector<8x96xf32>
    %cst_102 = arith.constant 1.000000e+00 : f32
    %480 = vector.broadcast %cst_102 : f32 to vector<8x96xf32>
    %481 = arith.addf %480, %479 : vector<8x96xf32>
    %482 = arith.divf %480, %481 : vector<8x96xf32>
    %483 = vector.extract_strided_slice %476 {offsets = [0, 96], sizes = [8, 32], strides = [1, 1]} : vector<8x128xf32> to vector<8x32xf32>
    %484 = math.tanh %483 : vector<8x32xf32>
    %485 = vector.extract_strided_slice %482 {offsets = [0, 0], sizes = [8, 32], strides = [1, 1]} : vector<8x96xf32> to vector<8x32xf32>
    %486 = vector.extract_strided_slice %482 {offsets = [0, 32], sizes = [8, 32], strides = [1, 1]} : vector<8x96xf32> to vector<8x32xf32>
    %487 = vector.extract_strided_slice %482 {offsets = [0, 64], sizes = [8, 32], strides = [1, 1]} : vector<8x96xf32> to vector<8x32xf32>
    %488 = arith.mulf %486, %471 : vector<8x32xf32>
    %489 = arith.mulf %485, %484 : vector<8x32xf32>
    %490 = arith.addf %488, %489 : vector<8x32xf32>
    %491 = math.tanh %490 : vector<8x32xf32>
    %492 = arith.mulf %487, %491 : vector<8x32xf32>
    %c56_103 = arith.constant 56 : index
    %c0_104 = arith.constant 0 : index
    %493 = vector.load %arg20[%c56_103, %c0_104] : memref<64x32xf32, #tpu.memory_space<vmem>>, vector<8x32xf32>
    tpu.vector_store %arg20[%c56_103, %c0_104], %492 {strides = array<i32>} : memref<64x32xf32, #tpu.memory_space<vmem>>, vector<8x32xf32>,
    %c0_105 = arith.constant 0 : index
    %c0_106 = arith.constant 0 : index
    %494 = vector.load %arg20[%c0_105, %c0_106] : memref<64x32xf32, #tpu.memory_space<vmem>>, vector<64x32xf32>
    %c0_107 = arith.constant 0 : index
    %c0_108 = arith.constant 0 : index
    %495 = vector.load %arg10[%c0_107, %c0_108] : memref<32x128xf32, #tpu.memory_space<vmem>>, vector<32x128xf32>
    %c0_109 = arith.constant 0 : index
    %c0_110 = arith.constant 0 : index
    %496 = vector.load %arg11[%c0_109, %c0_110] : memref<32x128xf32, #tpu.memory_space<vmem>>, vector<32x128xf32>
    %c0_111 = arith.constant 0 : index
    %c0_112 = arith.constant 0 : index
    %497 = vector.load %arg12[%c0_111, %c0_112] : memref<1x128xf32, #tpu.memory_space<vmem>>, vector<1x128xf32>
    %cst_113 = arith.constant dense<0.000000e+00> : vector<64x128xf32>
    %498 = tpu.matmul %494, %495, %cst_113 {dimension_numbers = #tpu.dot_dimension_numbers<[1], [0], [0], [1], [0, 0, 1, 1], [], []>} : vector<64x32xf32>, vector<32x128xf32>, vector<64x128xf32> -> vector<64x128xf32>
    %499 = vector.broadcast %497 : vector<1x128xf32> to vector<64x128xf32>
    %500 = arith.addf %498, %499 : vector<64x128xf32>
    %501 = vector.extract_strided_slice %500 {offsets = [0, 0], sizes = [8, 128], strides = [1, 1]} : vector<64x128xf32> to vector<8x128xf32>
    %cst_114 = arith.constant dense<0.000000e+00> : vector<8x128xf32>
    %502 = tpu.matmul %336, %496, %cst_114 {dimension_numbers = #tpu.dot_dimension_numbers<[1], [0], [0], [1], [0, 0, 1, 1], [], []>} : vector<8x32xf32>, vector<32x128xf32>, vector<8x128xf32> -> vector<8x128xf32>
    %503 = arith.addf %501, %502 : vector<8x128xf32>
    %504 = vector.extract_strided_slice %503 {offsets = [0, 0], sizes = [8, 96], strides = [1, 1]} : vector<8x128xf32> to vector<8x96xf32>
    %505 = arith.negf %504 : vector<8x96xf32>
    %506 = math.exp %505 : vector<8x96xf32>
    %cst_115 = arith.constant 1.000000e+00 : f32
    %507 = vector.broadcast %cst_115 : f32 to vector<8x96xf32>
    %508 = arith.addf %507, %506 : vector<8x96xf32>
    %509 = arith.divf %507, %508 : vector<8x96xf32>
    %510 = vector.extract_strided_slice %503 {offsets = [0, 96], sizes = [8, 32], strides = [1, 1]} : vector<8x128xf32> to vector<8x32xf32>
    %511 = math.tanh %510 : vector<8x32xf32>
    %512 = vector.extract_strided_slice %509 {offsets = [0, 0], sizes = [8, 32], strides = [1, 1]} : vector<8x96xf32> to vector<8x32xf32>
    %513 = vector.extract_strided_slice %509 {offsets = [0, 32], sizes = [8, 32], strides = [1, 1]} : vector<8x96xf32> to vector<8x32xf32>
    %514 = vector.extract_strided_slice %509 {offsets = [0, 64], sizes = [8, 32], strides = [1, 1]} : vector<8x96xf32> to vector<8x32xf32>
    %515 = arith.mulf %513, %337 : vector<8x32xf32>
    %516 = arith.mulf %512, %511 : vector<8x32xf32>
    %517 = arith.addf %515, %516 : vector<8x32xf32>
    %518 = math.tanh %517 : vector<8x32xf32>
    %519 = arith.mulf %514, %518 : vector<8x32xf32>
    %c0_116 = arith.constant 0 : index
    %c0_117 = arith.constant 0 : index
    %520 = vector.load %arg21[%c0_116, %c0_117] : memref<64x32xf32, #tpu.memory_space<vmem>>, vector<8x32xf32>
    tpu.vector_store %arg21[%c0_116, %c0_117], %519 {strides = array<i32>} : memref<64x32xf32, #tpu.memory_space<vmem>>, vector<8x32xf32>,
    %521 = vector.extract_strided_slice %500 {offsets = [8, 0], sizes = [8, 128], strides = [1, 1]} : vector<64x128xf32> to vector<8x128xf32>
    %cst_118 = arith.constant dense<0.000000e+00> : vector<8x128xf32>
    %522 = tpu.matmul %519, %496, %cst_118 {dimension_numbers = #tpu.dot_dimension_numbers<[1], [0], [0], [1], [0, 0, 1, 1], [], []>} : vector<8x32xf32>, vector<32x128xf32>, vector<8x128xf32> -> vector<8x128xf32>
    %523 = arith.addf %521, %522 : vector<8x128xf32>
    %524 = vector.extract_strided_slice %523 {offsets = [0, 0], sizes = [8, 96], strides = [1, 1]} : vector<8x128xf32> to vector<8x96xf32>
    %525 = arith.negf %524 : vector<8x96xf32>
    %526 = math.exp %525 : vector<8x96xf32>
    %cst_119 = arith.constant 1.000000e+00 : f32
    %527 = vector.broadcast %cst_119 : f32 to vector<8x96xf32>
    %528 = arith.addf %527, %526 : vector<8x96xf32>
    %529 = arith.divf %527, %528 : vector<8x96xf32>
    %530 = vector.extract_strided_slice %523 {offsets = [0, 96], sizes = [8, 32], strides = [1, 1]} : vector<8x128xf32> to vector<8x32xf32>
    %531 = math.tanh %530 : vector<8x32xf32>
    %532 = vector.extract_strided_slice %529 {offsets = [0, 0], sizes = [8, 32], strides = [1, 1]} : vector<8x96xf32> to vector<8x32xf32>
    %533 = vector.extract_strided_slice %529 {offsets = [0, 32], sizes = [8, 32], strides = [1, 1]} : vector<8x96xf32> to vector<8x32xf32>
    %534 = vector.extract_strided_slice %529 {offsets = [0, 64], sizes = [8, 32], strides = [1, 1]} : vector<8x96xf32> to vector<8x32xf32>
    %535 = arith.mulf %533, %517 : vector<8x32xf32>
    %536 = arith.mulf %532, %531 : vector<8x32xf32>
    %537 = arith.addf %535, %536 : vector<8x32xf32>
    %538 = math.tanh %537 : vector<8x32xf32>
    %539 = arith.mulf %534, %538 : vector<8x32xf32>
    %c8_120 = arith.constant 8 : index
    %c0_121 = arith.constant 0 : index
    %540 = vector.load %arg21[%c8_120, %c0_121] : memref<64x32xf32, #tpu.memory_space<vmem>>, vector<8x32xf32>
    tpu.vector_store %arg21[%c8_120, %c0_121], %539 {strides = array<i32>} : memref<64x32xf32, #tpu.memory_space<vmem>>, vector<8x32xf32>,
    %541 = vector.extract_strided_slice %500 {offsets = [16, 0], sizes = [8, 128], strides = [1, 1]} : vector<64x128xf32> to vector<8x128xf32>
    %cst_122 = arith.constant dense<0.000000e+00> : vector<8x128xf32>
    %542 = tpu.matmul %539, %496, %cst_122 {dimension_numbers = #tpu.dot_dimension_numbers<[1], [0], [0], [1], [0, 0, 1, 1], [], []>} : vector<8x32xf32>, vector<32x128xf32>, vector<8x128xf32> -> vector<8x128xf32>
    %543 = arith.addf %541, %542 : vector<8x128xf32>
    %544 = vector.extract_strided_slice %543 {offsets = [0, 0], sizes = [8, 96], strides = [1, 1]} : vector<8x128xf32> to vector<8x96xf32>
    %545 = arith.negf %544 : vector<8x96xf32>
    %546 = math.exp %545 : vector<8x96xf32>
    %cst_123 = arith.constant 1.000000e+00 : f32
    %547 = vector.broadcast %cst_123 : f32 to vector<8x96xf32>
    %548 = arith.addf %547, %546 : vector<8x96xf32>
    %549 = arith.divf %547, %548 : vector<8x96xf32>
    %550 = vector.extract_strided_slice %543 {offsets = [0, 96], sizes = [8, 32], strides = [1, 1]} : vector<8x128xf32> to vector<8x32xf32>
    %551 = math.tanh %550 : vector<8x32xf32>
    %552 = vector.extract_strided_slice %549 {offsets = [0, 0], sizes = [8, 32], strides = [1, 1]} : vector<8x96xf32> to vector<8x32xf32>
    %553 = vector.extract_strided_slice %549 {offsets = [0, 32], sizes = [8, 32], strides = [1, 1]} : vector<8x96xf32> to vector<8x32xf32>
    %554 = vector.extract_strided_slice %549 {offsets = [0, 64], sizes = [8, 32], strides = [1, 1]} : vector<8x96xf32> to vector<8x32xf32>
    %555 = arith.mulf %553, %537 : vector<8x32xf32>
    %556 = arith.mulf %552, %551 : vector<8x32xf32>
    %557 = arith.addf %555, %556 : vector<8x32xf32>
    %558 = math.tanh %557 : vector<8x32xf32>
    %559 = arith.mulf %554, %558 : vector<8x32xf32>
    %c16_124 = arith.constant 16 : index
    %c0_125 = arith.constant 0 : index
    %560 = vector.load %arg21[%c16_124, %c0_125] : memref<64x32xf32, #tpu.memory_space<vmem>>, vector<8x32xf32>
    tpu.vector_store %arg21[%c16_124, %c0_125], %559 {strides = array<i32>} : memref<64x32xf32, #tpu.memory_space<vmem>>, vector<8x32xf32>,
    %561 = vector.extract_strided_slice %500 {offsets = [24, 0], sizes = [8, 128], strides = [1, 1]} : vector<64x128xf32> to vector<8x128xf32>
    %cst_126 = arith.constant dense<0.000000e+00> : vector<8x128xf32>
    %562 = tpu.matmul %559, %496, %cst_126 {dimension_numbers = #tpu.dot_dimension_numbers<[1], [0], [0], [1], [0, 0, 1, 1], [], []>} : vector<8x32xf32>, vector<32x128xf32>, vector<8x128xf32> -> vector<8x128xf32>
    %563 = arith.addf %561, %562 : vector<8x128xf32>
    %564 = vector.extract_strided_slice %563 {offsets = [0, 0], sizes = [8, 96], strides = [1, 1]} : vector<8x128xf32> to vector<8x96xf32>
    %565 = arith.negf %564 : vector<8x96xf32>
    %566 = math.exp %565 : vector<8x96xf32>
    %cst_127 = arith.constant 1.000000e+00 : f32
    %567 = vector.broadcast %cst_127 : f32 to vector<8x96xf32>
    %568 = arith.addf %567, %566 : vector<8x96xf32>
    %569 = arith.divf %567, %568 : vector<8x96xf32>
    %570 = vector.extract_strided_slice %563 {offsets = [0, 96], sizes = [8, 32], strides = [1, 1]} : vector<8x128xf32> to vector<8x32xf32>
    %571 = math.tanh %570 : vector<8x32xf32>
    %572 = vector.extract_strided_slice %569 {offsets = [0, 0], sizes = [8, 32], strides = [1, 1]} : vector<8x96xf32> to vector<8x32xf32>
    %573 = vector.extract_strided_slice %569 {offsets = [0, 32], sizes = [8, 32], strides = [1, 1]} : vector<8x96xf32> to vector<8x32xf32>
    %574 = vector.extract_strided_slice %569 {offsets = [0, 64], sizes = [8, 32], strides = [1, 1]} : vector<8x96xf32> to vector<8x32xf32>
    %575 = arith.mulf %573, %557 : vector<8x32xf32>
    %576 = arith.mulf %572, %571 : vector<8x32xf32>
    %577 = arith.addf %575, %576 : vector<8x32xf32>
    %578 = math.tanh %577 : vector<8x32xf32>
    %579 = arith.mulf %574, %578 : vector<8x32xf32>
    %c24_128 = arith.constant 24 : index
    %c0_129 = arith.constant 0 : index
    %580 = vector.load %arg21[%c24_128, %c0_129] : memref<64x32xf32, #tpu.memory_space<vmem>>, vector<8x32xf32>
    tpu.vector_store %arg21[%c24_128, %c0_129], %579 {strides = array<i32>} : memref<64x32xf32, #tpu.memory_space<vmem>>, vector<8x32xf32>,
    %581 = vector.extract_strided_slice %500 {offsets = [32, 0], sizes = [8, 128], strides = [1, 1]} : vector<64x128xf32> to vector<8x128xf32>
    %cst_130 = arith.constant dense<0.000000e+00> : vector<8x128xf32>
    %582 = tpu.matmul %579, %496, %cst_130 {dimension_numbers = #tpu.dot_dimension_numbers<[1], [0], [0], [1], [0, 0, 1, 1], [], []>} : vector<8x32xf32>, vector<32x128xf32>, vector<8x128xf32> -> vector<8x128xf32>
    %583 = arith.addf %581, %582 : vector<8x128xf32>
    %584 = vector.extract_strided_slice %583 {offsets = [0, 0], sizes = [8, 96], strides = [1, 1]} : vector<8x128xf32> to vector<8x96xf32>
    %585 = arith.negf %584 : vector<8x96xf32>
    %586 = math.exp %585 : vector<8x96xf32>
    %cst_131 = arith.constant 1.000000e+00 : f32
    %587 = vector.broadcast %cst_131 : f32 to vector<8x96xf32>
    %588 = arith.addf %587, %586 : vector<8x96xf32>
    %589 = arith.divf %587, %588 : vector<8x96xf32>
    %590 = vector.extract_strided_slice %583 {offsets = [0, 96], sizes = [8, 32], strides = [1, 1]} : vector<8x128xf32> to vector<8x32xf32>
    %591 = math.tanh %590 : vector<8x32xf32>
    %592 = vector.extract_strided_slice %589 {offsets = [0, 0], sizes = [8, 32], strides = [1, 1]} : vector<8x96xf32> to vector<8x32xf32>
    %593 = vector.extract_strided_slice %589 {offsets = [0, 32], sizes = [8, 32], strides = [1, 1]} : vector<8x96xf32> to vector<8x32xf32>
    %594 = vector.extract_strided_slice %589 {offsets = [0, 64], sizes = [8, 32], strides = [1, 1]} : vector<8x96xf32> to vector<8x32xf32>
    %595 = arith.mulf %593, %577 : vector<8x32xf32>
    %596 = arith.mulf %592, %591 : vector<8x32xf32>
    %597 = arith.addf %595, %596 : vector<8x32xf32>
    %598 = math.tanh %597 : vector<8x32xf32>
    %599 = arith.mulf %594, %598 : vector<8x32xf32>
    %c32_132 = arith.constant 32 : index
    %c0_133 = arith.constant 0 : index
    %600 = vector.load %arg21[%c32_132, %c0_133] : memref<64x32xf32, #tpu.memory_space<vmem>>, vector<8x32xf32>
    tpu.vector_store %arg21[%c32_132, %c0_133], %599 {strides = array<i32>} : memref<64x32xf32, #tpu.memory_space<vmem>>, vector<8x32xf32>,
    %601 = vector.extract_strided_slice %500 {offsets = [40, 0], sizes = [8, 128], strides = [1, 1]} : vector<64x128xf32> to vector<8x128xf32>
    %cst_134 = arith.constant dense<0.000000e+00> : vector<8x128xf32>
    %602 = tpu.matmul %599, %496, %cst_134 {dimension_numbers = #tpu.dot_dimension_numbers<[1], [0], [0], [1], [0, 0, 1, 1], [], []>} : vector<8x32xf32>, vector<32x128xf32>, vector<8x128xf32> -> vector<8x128xf32>
    %603 = arith.addf %601, %602 : vector<8x128xf32>
    %604 = vector.extract_strided_slice %603 {offsets = [0, 0], sizes = [8, 96], strides = [1, 1]} : vector<8x128xf32> to vector<8x96xf32>
    %605 = arith.negf %604 : vector<8x96xf32>
    %606 = math.exp %605 : vector<8x96xf32>
    %cst_135 = arith.constant 1.000000e+00 : f32
    %607 = vector.broadcast %cst_135 : f32 to vector<8x96xf32>
    %608 = arith.addf %607, %606 : vector<8x96xf32>
    %609 = arith.divf %607, %608 : vector<8x96xf32>
    %610 = vector.extract_strided_slice %603 {offsets = [0, 96], sizes = [8, 32], strides = [1, 1]} : vector<8x128xf32> to vector<8x32xf32>
    %611 = math.tanh %610 : vector<8x32xf32>
    %612 = vector.extract_strided_slice %609 {offsets = [0, 0], sizes = [8, 32], strides = [1, 1]} : vector<8x96xf32> to vector<8x32xf32>
    %613 = vector.extract_strided_slice %609 {offsets = [0, 32], sizes = [8, 32], strides = [1, 1]} : vector<8x96xf32> to vector<8x32xf32>
    %614 = vector.extract_strided_slice %609 {offsets = [0, 64], sizes = [8, 32], strides = [1, 1]} : vector<8x96xf32> to vector<8x32xf32>
    %615 = arith.mulf %613, %597 : vector<8x32xf32>
    %616 = arith.mulf %612, %611 : vector<8x32xf32>
    %617 = arith.addf %615, %616 : vector<8x32xf32>
    %618 = math.tanh %617 : vector<8x32xf32>
    %619 = arith.mulf %614, %618 : vector<8x32xf32>
    %c40_136 = arith.constant 40 : index
    %c0_137 = arith.constant 0 : index
    %620 = vector.load %arg21[%c40_136, %c0_137] : memref<64x32xf32, #tpu.memory_space<vmem>>, vector<8x32xf32>
    tpu.vector_store %arg21[%c40_136, %c0_137], %619 {strides = array<i32>} : memref<64x32xf32, #tpu.memory_space<vmem>>, vector<8x32xf32>,
    %621 = vector.extract_strided_slice %500 {offsets = [48, 0], sizes = [8, 128], strides = [1, 1]} : vector<64x128xf32> to vector<8x128xf32>
    %cst_138 = arith.constant dense<0.000000e+00> : vector<8x128xf32>
    %622 = tpu.matmul %619, %496, %cst_138 {dimension_numbers = #tpu.dot_dimension_numbers<[1], [0], [0], [1], [0, 0, 1, 1], [], []>} : vector<8x32xf32>, vector<32x128xf32>, vector<8x128xf32> -> vector<8x128xf32>
    %623 = arith.addf %621, %622 : vector<8x128xf32>
    %624 = vector.extract_strided_slice %623 {offsets = [0, 0], sizes = [8, 96], strides = [1, 1]} : vector<8x128xf32> to vector<8x96xf32>
    %625 = arith.negf %624 : vector<8x96xf32>
    %626 = math.exp %625 : vector<8x96xf32>
    %cst_139 = arith.constant 1.000000e+00 : f32
    %627 = vector.broadcast %cst_139 : f32 to vector<8x96xf32>
    %628 = arith.addf %627, %626 : vector<8x96xf32>
    %629 = arith.divf %627, %628 : vector<8x96xf32>
    %630 = vector.extract_strided_slice %623 {offsets = [0, 96], sizes = [8, 32], strides = [1, 1]} : vector<8x128xf32> to vector<8x32xf32>
    %631 = math.tanh %630 : vector<8x32xf32>
    %632 = vector.extract_strided_slice %629 {offsets = [0, 0], sizes = [8, 32], strides = [1, 1]} : vector<8x96xf32> to vector<8x32xf32>
    %633 = vector.extract_strided_slice %629 {offsets = [0, 32], sizes = [8, 32], strides = [1, 1]} : vector<8x96xf32> to vector<8x32xf32>
    %634 = vector.extract_strided_slice %629 {offsets = [0, 64], sizes = [8, 32], strides = [1, 1]} : vector<8x96xf32> to vector<8x32xf32>
    %635 = arith.mulf %633, %617 : vector<8x32xf32>
    %636 = arith.mulf %632, %631 : vector<8x32xf32>
    %637 = arith.addf %635, %636 : vector<8x32xf32>
    %638 = math.tanh %637 : vector<8x32xf32>
    %639 = arith.mulf %634, %638 : vector<8x32xf32>
    %c48_140 = arith.constant 48 : index
    %c0_141 = arith.constant 0 : index
    %640 = vector.load %arg21[%c48_140, %c0_141] : memref<64x32xf32, #tpu.memory_space<vmem>>, vector<8x32xf32>
    tpu.vector_store %arg21[%c48_140, %c0_141], %639 {strides = array<i32>} : memref<64x32xf32, #tpu.memory_space<vmem>>, vector<8x32xf32>,
    %641 = vector.extract_strided_slice %500 {offsets = [56, 0], sizes = [8, 128], strides = [1, 1]} : vector<64x128xf32> to vector<8x128xf32>
    %cst_142 = arith.constant dense<0.000000e+00> : vector<8x128xf32>
    %642 = tpu.matmul %639, %496, %cst_142 {dimension_numbers = #tpu.dot_dimension_numbers<[1], [0], [0], [1], [0, 0, 1, 1], [], []>} : vector<8x32xf32>, vector<32x128xf32>, vector<8x128xf32> -> vector<8x128xf32>
    %643 = arith.addf %641, %642 : vector<8x128xf32>
    %644 = vector.extract_strided_slice %643 {offsets = [0, 0], sizes = [8, 96], strides = [1, 1]} : vector<8x128xf32> to vector<8x96xf32>
    %645 = arith.negf %644 : vector<8x96xf32>
    %646 = math.exp %645 : vector<8x96xf32>
    %cst_143 = arith.constant 1.000000e+00 : f32
    %647 = vector.broadcast %cst_143 : f32 to vector<8x96xf32>
    %648 = arith.addf %647, %646 : vector<8x96xf32>
    %649 = arith.divf %647, %648 : vector<8x96xf32>
    %650 = vector.extract_strided_slice %643 {offsets = [0, 96], sizes = [8, 32], strides = [1, 1]} : vector<8x128xf32> to vector<8x32xf32>
    %651 = math.tanh %650 : vector<8x32xf32>
    %652 = vector.extract_strided_slice %649 {offsets = [0, 0], sizes = [8, 32], strides = [1, 1]} : vector<8x96xf32> to vector<8x32xf32>
    %653 = vector.extract_strided_slice %649 {offsets = [0, 32], sizes = [8, 32], strides = [1, 1]} : vector<8x96xf32> to vector<8x32xf32>
    %654 = vector.extract_strided_slice %649 {offsets = [0, 64], sizes = [8, 32], strides = [1, 1]} : vector<8x96xf32> to vector<8x32xf32>
    %655 = arith.mulf %653, %637 : vector<8x32xf32>
    %656 = arith.mulf %652, %651 : vector<8x32xf32>
    %657 = arith.addf %655, %656 : vector<8x32xf32>
    %658 = math.tanh %657 : vector<8x32xf32>
    %659 = arith.mulf %654, %658 : vector<8x32xf32>
    %c56_144 = arith.constant 56 : index
    %c0_145 = arith.constant 0 : index
    %660 = vector.load %arg21[%c56_144, %c0_145] : memref<64x32xf32, #tpu.memory_space<vmem>>, vector<8x32xf32>
    tpu.vector_store %arg21[%c56_144, %c0_145], %659 {strides = array<i32>} : memref<64x32xf32, #tpu.memory_space<vmem>>, vector<8x32xf32>,
    %c0_146 = arith.constant 0 : index
    %c0_147 = arith.constant 0 : index
    %661 = vector.load %arg21[%c0_146, %c0_147] : memref<64x32xf32, #tpu.memory_space<vmem>>, vector<64x32xf32>
    %c0_148 = arith.constant 0 : index
    %c0_149 = arith.constant 0 : index
    %662 = vector.load %arg17[%c0_148, %c0_149] : memref<32x128xf32, #tpu.memory_space<vmem>>, vector<32x128xf32>
    %cst_150 = arith.constant dense<0.000000e+00> : vector<64x128xf32>
    %663 = tpu.matmul %661, %662, %cst_150 {dimension_numbers = #tpu.dot_dimension_numbers<[1], [0], [0], [1], [0, 0, 1, 1], [], []>} : vector<64x32xf32>, vector<32x128xf32>, vector<64x128xf32> -> vector<64x128xf32>
    %c0_151 = arith.constant 0 : index
    %c0_152 = arith.constant 0 : index
    %664 = vector.load %arg18[%c0_151, %c0_152] : memref<1x128xf32, #tpu.memory_space<vmem>>, vector<1x128xf32>
    %665 = vector.broadcast %664 : vector<1x128xf32> to vector<64x128xf32>
    %666 = arith.addf %663, %665 : vector<64x128xf32>
    %c0_153 = arith.constant 0 : index
    %c0_154 = arith.constant 0 : index
    %667 = vector.load %arg19[%c0_153, %c0_154] : memref<64x128xf32, #tpu.memory_space<vmem>>, vector<64x128xf32>
    tpu.vector_store %arg19[%c0_153, %c0_154], %666 {strides = array<i32>} : memref<64x128xf32, #tpu.memory_space<vmem>>, vector<64x128xf32>,
    return
  }
}

</mosaic_0001>

<llo_original>
// kernel: lstm_autoencoder_forward.1
$region0: #{lstm_autoencoder_forward.1}
  #allocation0 [shape = 'u32[]', space=smem, size = 0x4, offset = 0x4, fixed_abs, tag = 'smem constant byte address 0x4 - core index']
  #allocation1 [shape = 'u32[144,128]{1,0:T(1,128)}', space=vmem, size = 0x12000, scoped, tag = 'internal scratch']
  #allocation2 [shape = 'f32[64,32]{1,0:T(8,128)}', space=vmem, size = 0x8000, scoped, tag = 'scratch operand']
  #allocation3 [shape = 'f32[64,32]{1,0:T(8,128)}', space=vmem, size = 0x8000, scoped, tag = 'scratch operand']
  %s0 = inlined_call_operand.vmem [shape: f32[64,4], index: 0, kind: input, shape index: {}]
  %s1 = inlined_call_operand.vmem [shape: f32[4,128], index: 1, kind: input, shape index: {}]
  %s2 = inlined_call_operand.vmem [shape: f32[32,128], index: 2, kind: input, shape index: {}]
  %s3 = inlined_call_operand.vmem [shape: f32[1,128], index: 3, kind: input, shape index: {}]
  %s4 = inlined_call_operand.vmem [shape: f32[32,128], index: 4, kind: input, shape index: {}]
  %s5 = inlined_call_operand.vmem [shape: f32[32,128], index: 5, kind: input, shape index: {}]
  %s6 = inlined_call_operand.vmem [shape: f32[1,128], index: 6, kind: input, shape index: {}]
  %s7 = inlined_call_operand.vmem [shape: f32[32,128], index: 7, kind: input, shape index: {}]
  %s8 = inlined_call_operand.vmem [shape: f32[32,128], index: 8, kind: input, shape index: {}]
  %s9 = inlined_call_operand.hbm [shape: f32[1,128], index: 9, kind: input, shape index: {}]
  %s10 = inlined_call_operand.vmem [shape: f32[32,128], index: 10, kind: input, shape index: {}]
  %s11 = inlined_call_operand.vmem [shape: f32[32,128], index: 11, kind: input, shape index: {}]
  %s12 = inlined_call_operand.vmem [shape: f32[1,128], index: 12, kind: input, shape index: {}]
  %s13 = inlined_call_operand.vmem [shape: f32[32,16], index: 13, kind: input, shape index: {}]
  %s14 = inlined_call_operand.vmem [shape: f32[1,16], index: 14, kind: input, shape index: {}]
  %s15 = inlined_call_operand.vmem [shape: f32[16,32], index: 15, kind: input, shape index: {}]
  %s16 = inlined_call_operand.vmem [shape: f32[1,32], index: 16, kind: input, shape index: {}]
  %s17 = inlined_call_operand.vmem [shape: f32[32,128], index: 17, kind: input, shape index: {}]
  %s18 = inlined_call_operand.vmem [shape: f32[1,128], index: 18, kind: input, shape index: {}]
  %s19 = inlined_call_operand.vmem [shape: f32[64,128], index: 19, kind: output, shape index: {}]
  %s20 = sld [smem:[#allocation0]]
  $region90: #{lstm_autoencoder_forward.1} parent=0
    _
  %s22 = ssub.s32 1, %s20
  %s23 = scalar_select 0, %s22, %s20
  $region1: #{lstm_autoencoder_forward.1} parent=0
    #allocation4 [shape = 'u8[512]{0}', space=vmem, size = 0x400, scoped, tag = 'input window, operand 9, single buffered']
    #allocation5 [shape = 's32[1]{0}', space=sflag, size = 0x4, scoped, tag = 'scoped memory for lstm_autoencoder_forward.1']
    %24 = vsyncpa [#allocation5], 0
    // Predicated region
    $region2: #{lstm_autoencoder_forward.1} parent=1 // pred_check
      _
    $region3: #{lstm_autoencoder_forward.1} parent=1 // pred_check_branch
      %26 = sbr.rel (0) target = $region5
    $region4: #{lstm_autoencoder_forward.1} parent=1 // pred_region
      _
    $region5: #{lstm_autoencoder_forward.1} parent=1 // pred_fallthru
      _
    // Predicated region
    $region6: #{lstm_autoencoder_forward.1} parent=1 // pred_check
      _
    $region7: #{lstm_autoencoder_forward.1} parent=1 // pred_check_branch
      %28 = sbr.rel (0) target = $region9
    $region8: #{lstm_autoencoder_forward.1} parent=1 // pred_region
      _
    $region9: #{lstm_autoencoder_forward.1} parent=1 // pred_fallthru
      _
    // Predicated region
    $region10: #{lstm_autoencoder_forward.1} parent=1 // pred_check
      _
    $region11: #{lstm_autoencoder_forward.1} parent=1 // pred_check_branch
      %30 = sbr.rel (0) target = $region13
    $region12: #{lstm_autoencoder_forward.1} parent=1 // pred_region
      _
    $region13: #{lstm_autoencoder_forward.1} parent=1 // pred_fallthru
      _
    // Predicated region
    $region14: #{lstm_autoencoder_forward.1} parent=1 // pred_check
      _
    $region15: #{lstm_autoencoder_forward.1} parent=1 // pred_check_branch
      %32 = sbr.rel (0) target = $region17
    $region16: #{lstm_autoencoder_forward.1} parent=1 // pred_region
      _
    $region17: #{lstm_autoencoder_forward.1} parent=1 // pred_fallthru
      _
    // Predicated region
    $region18: #{lstm_autoencoder_forward.1} parent=1 // pred_check
      _
    $region19: #{lstm_autoencoder_forward.1} parent=1 // pred_check_branch
      %34 = sbr.rel (0) target = $region21
    $region20: #{lstm_autoencoder_forward.1} parent=1 // pred_region
      _
    $region21: #{lstm_autoencoder_forward.1} parent=1 // pred_fallthru
      _
    // Predicated region
    $region22: #{lstm_autoencoder_forward.1} parent=1 // pred_check
      _
    $region23: #{lstm_autoencoder_forward.1} parent=1 // pred_check_branch
      %36 = sbr.rel (0) target = $region25
    $region24: #{lstm_autoencoder_forward.1} parent=1 // pred_region
      _
    $region25: #{lstm_autoencoder_forward.1} parent=1 // pred_fallthru
      _
    // Predicated region
    $region26: #{lstm_autoencoder_forward.1} parent=1 // pred_check
      _
    $region27: #{lstm_autoencoder_forward.1} parent=1 // pred_check_branch
      %38 = sbr.rel (0) target = $region29
    $region28: #{lstm_autoencoder_forward.1} parent=1 // pred_region
      _
    $region29: #{lstm_autoencoder_forward.1} parent=1 // pred_fallthru
      _
    // Predicated region
    $region30: #{lstm_autoencoder_forward.1} parent=1 // pred_check
      _
    $region31: #{lstm_autoencoder_forward.1} parent=1 // pred_check_branch
      %40 = sbr.rel (0) target = $region33
    $region32: #{lstm_autoencoder_forward.1} parent=1 // pred_region
      _
    $region33: #{lstm_autoencoder_forward.1} parent=1 // pred_fallthru
      _
    // Predicated region
    $region34: #{lstm_autoencoder_forward.1} parent=1 // pred_check
      _
    $region35: #{lstm_autoencoder_forward.1} parent=1 // pred_check_branch
      %42 = sbr.rel (0) target = $region37
    $region36: #{lstm_autoencoder_forward.1} parent=1 // pred_region
      _
    $region37: #{lstm_autoencoder_forward.1} parent=1 // pred_fallthru
      _
    // Predicated region
    $region38: #{lstm_autoencoder_forward.1} parent=1 // pred_check
      _
    $region39: #{lstm_autoencoder_forward.1} parent=1 // pred_check_branch
      %44 = sbr.rel (0) target = $region41
    $region40: #{lstm_autoencoder_forward.1} parent=1 // pred_region
      %s46 = ssub.s32 16, 16
      %47 = vsyncadd [#allocation5], %s46
      %s49 = sshll.u32 [#allocation4], 4
      %s50 = int_to_ptr.vmem [resolvable:$true] %s49
      %52 = dma.hbm_to_vmem [thread:$0]  %s9, 16, %s50, [#allocation5]
    $region41: #{lstm_autoencoder_forward.1} parent=1 // pred_fallthru
      _
    // Predicated region
    $region42: #{lstm_autoencoder_forward.1} parent=1 // pred_check
      _
    $region43: #{lstm_autoencoder_forward.1} parent=1 // pred_check_branch
      %54 = sbr.rel (0) target = $region45
    $region44: #{lstm_autoencoder_forward.1} parent=1 // pred_region
      _
    $region45: #{lstm_autoencoder_forward.1} parent=1 // pred_fallthru
      _
    // Predicated region
    $region46: #{lstm_autoencoder_forward.1} parent=1 // pred_check
      _
    $region47: #{lstm_autoencoder_forward.1} parent=1 // pred_check_branch
      %56 = sbr.rel (0) target = $region49
    $region48: #{lstm_autoencoder_forward.1} parent=1 // pred_region
      _
    $region49: #{lstm_autoencoder_forward.1} parent=1 // pred_fallthru
      _
    // Predicated region
    $region50: #{lstm_autoencoder_forward.1} parent=1 // pred_check
      _
    $region51: #{lstm_autoencoder_forward.1} parent=1 // pred_check_branch
      %58 = sbr.rel (0) target = $region53
    $region52: #{lstm_autoencoder_forward.1} parent=1 // pred_region
      _
    $region53: #{lstm_autoencoder_forward.1} parent=1 // pred_fallthru
      _
    // Predicated region
    $region54: #{lstm_autoencoder_forward.1} parent=1 // pred_check
      _
    $region55: #{lstm_autoencoder_forward.1} parent=1 // pred_check_branch
      %60 = sbr.rel (0) target = $region57
    $region56: #{lstm_autoencoder_forward.1} parent=1 // pred_region
      _
    $region57: #{lstm_autoencoder_forward.1} parent=1 // pred_fallthru
      _
    // Predicated region
    $region58: #{lstm_autoencoder_forward.1} parent=1 // pred_check
      _
    $region59: #{lstm_autoencoder_forward.1} parent=1 // pred_check_branch
      %62 = sbr.rel (0) target = $region61
    $region60: #{lstm_autoencoder_forward.1} parent=1 // pred_region
      _
    $region61: #{lstm_autoencoder_forward.1} parent=1 // pred_fallthru
      _
    // Predicated region
    $region62: #{lstm_autoencoder_forward.1} parent=1 // pred_check
      _
    $region63: #{lstm_autoencoder_forward.1} parent=1 // pred_check_branch
      %64 = sbr.rel (0) target = $region65
    $region64: #{lstm_autoencoder_forward.1} parent=1 // pred_region
      _
    $region65: #{lstm_autoencoder_forward.1} parent=1 // pred_fallthru
      _
    // Predicated region
    $region66: #{lstm_autoencoder_forward.1} parent=1 // pred_check
      _
    $region67: #{lstm_autoencoder_forward.1} parent=1 // pred_check_branch
      %66 = sbr.rel (0) target = $region69
    $region68: #{lstm_autoencoder_forward.1} parent=1 // pred_region
      _
    $region69: #{lstm_autoencoder_forward.1} parent=1 // pred_fallthru
      _
    // Predicated region
    $region70: #{lstm_autoencoder_forward.1} parent=1 // pred_check
      _
    $region71: #{lstm_autoencoder_forward.1} parent=1 // pred_check_branch
      %68 = sbr.rel (0) target = $region73
    $region72: #{lstm_autoencoder_forward.1} parent=1 // pred_region
      _
    $region73: #{lstm_autoencoder_forward.1} parent=1 // pred_fallthru
      _
    // Predicated region
    $region74: #{lstm_autoencoder_forward.1} parent=1 // pred_check
      _
    $region75: #{lstm_autoencoder_forward.1} parent=1 // pred_check_branch
      %70 = sbr.rel (0) target = $region77
    $region76: #{lstm_autoencoder_forward.1} parent=1 // pred_region
      _
    $region77: #{lstm_autoencoder_forward.1} parent=1 // pred_fallthru
      _
    // Predicated region
    $region78: #{lstm_autoencoder_forward.1} parent=1 // pred_check
      _
    $region79: #{lstm_autoencoder_forward.1} parent=1 // pred_check_branch
      %72 = sbr.rel (0) target = $region81
    $region80: #{lstm_autoencoder_forward.1} parent=1 // pred_region
      %73 = dma.done [#allocation5], 16
    $region81: #{lstm_autoencoder_forward.1} parent=1 // pred_fallthru
      _
    %v74 = vld [vmem:[%s0] sm:$0xff]
    %v75 = vld [vmem:[%s0 + $0x8] sm:$0xff]
    %v76 = vld [vmem:[%s0 + $0x10] sm:$0xff]
    %v77 = vld [vmem:[%s0 + $0x18] sm:$0xff]
    %v78 = vld [vmem:[%s0 + $0x20] sm:$0xff]
    %v79 = vld [vmem:[%s0 + $0x28] sm:$0xff]
    %v80 = vld [vmem:[%s0 + $0x30] sm:$0xff]
    %v81 = vld [vmem:[%s0 + $0x38] sm:$0xff]
    %v82 = vld [vmem:[%s1] sm:$0xf]
    %v83 = vld [vmem:[%s2] sm:$0xff]
    %v84 = vld [vmem:[%s2 + $0x8] sm:$0xff]
    %v85 = vld [vmem:[%s2 + $0x10] sm:$0xff]
    %v86 = vld [vmem:[%s2 + $0x18] sm:$0xff]
    %v87 = vld [vmem:[%s3] sm:$0x1]
    %v89 = vlaneseq
    %v90 = vshrl.u32 %v89, 7
    %v91 = vsub.s32 0, %v90
    %v92 = vrot.slane %v87, %v91
    %vm94 = vcmask 31744
    %v96 = vsel %vm94, %v74, 0
    %v99 = vsel %vm94, %v75, 0
    %v102 = vsel %vm94, %v76, 0
    %v105 = vsel %vm94, %v77, 0
    %v108 = vsel %vm94, %v78, 0
    %v111 = vsel %vm94, %v79, 0
    %v114 = vsel %vm94, %v80, 0
    %v117 = vsel %vm94, %v81, 0
    %vm119 = vcmask 1043456
    %v121 = vsel %vm119, %v82, 0
    %123 = vmatprep.subr.mxu0 0.0
    %124 = vmatpush1.msra.mxu0 %v121
    %125 = vmatprep.subr.mxu0 0.0
    %126 = vmatpush1.msra.mxu0 0.0
    %127 = vmatprep.subr.mxu0 0.0
    %128 = vmatpush1.msra.mxu0 0.0
    %129 = vmatprep.subr.mxu0 0.0
    %130 = vmatpush1.msra.mxu0 0.0
    %131 = vmatprep.subr.mxu0 0.0
    %132 = vmatpush1.msra.mxu0 0.0
    %133 = vmatprep.subr.mxu0 0.0
    %134 = vmatpush1.msra.mxu0 0.0
    %135 = vmatprep.subr.mxu0 0.0
    %136 = vmatpush1.msra.mxu0 0.0
    %137 = vmatprep.subr.mxu0 0.0
    %138 = vmatpush1.msra.mxu0 0.0
    %139 = vmatprep.subr.mxu0 0.0
    %140 = vmatpush1.msra.mxu0 0.0
    %141 = vmatprep.subr.mxu0 0.0
    %142 = vmatpush1.msra.mxu0 0.0
    %143 = vmatprep.subr.mxu0 0.0
    %144 = vmatpush1.msra.mxu0 0.0
    %145 = vmatprep.subr.mxu0 0.0
    %146 = vmatpush1.msra.mxu0 0.0
    %147 = vmatprep.subr.mxu0 0.0
    %148 = vmatpush1.msra.mxu0 0.0
    %149 = vmatprep.subr.mxu0 0.0
    %150 = vmatpush1.msra.mxu0 0.0
    %151 = vmatprep.subr.mxu0 0.0
    %152 = vmatpush1.msra.mxu0 0.0
    %153 = vmatprep.subr.mxu0 0.0
    %154 = vmatpush1.msra.mxu0 0.0
    %155 = vmatprep.subr.mxu0 0.0
    %156 = vmatpush1.msra.mxu0 0.0
    %157 = vmatprep.subr.mxu0 0.0
    %158 = vmatpush1.msra.mxu0 0.0
    %159 = vmatprep.subr.mxu0 0.0
    %160 = vmatpush1.msra.mxu0 0.0
    %161 = vmatprep.subr.mxu0 0.0
    %162 = vmatpush1.msra.mxu0 0.0
    %163 = vmatprep.subr.mxu0 0.0
    %164 = vmatpush1.msra.mxu0 0.0
    %165 = vmatprep.subr.mxu0 0.0
    %166 = vmatpush1.msra.mxu0 0.0
    %167 = vmatprep.subr.mxu0 0.0
    %168 = vmatpush1.msra.mxu0 0.0
    %169 = vmatprep.subr.mxu0 0.0
    %170 = vmatpush1.msra.mxu0 0.0
    %171 = vmatprep.subr.mxu0 0.0
    %172 = vmatpush1.msra.mxu0 0.0
    %173 = vmatprep.subr.mxu0 0.0
    %174 = vmatpush1.msra.mxu0 0.0
    %175 = vmatprep.subr.mxu0 0.0
    %176 = vmatpush1.msra.mxu0 0.0
    %177 = vmatprep.subr.mxu0 0.0
    %178 = vmatpush1.msra.mxu0 0.0
    %179 = vmatprep.subr.mxu0 0.0
    %180 = vmatpush1.msra.mxu0 0.0
    %181 = vmatprep.subr.mxu0 0.0
    %182 = vmatpush1.msra.mxu0 0.0
    %183 = vmatprep.subr.mxu0 0.0
    %184 = vmatpush1.msra.mxu0 0.0
    %185 = vmatprep.subr.mxu0 0.0
    %186 = vmatpush1.msra.mxu0 0.0
    %187 = vmatprep.mubr.f32.mxu0 0.0
    %188 = vmatmul.mubr.f32.gmra.mrb[0].mxu0 %v96
    %v189 = vpop.f32.mrb[0].mxu0
    %v190 = vadd.f32 %v92, %v189
    %v191 = vpop.f32.mrb[0].mxu0
    %192 = vmatprep.mubr.f32.mxu0 0.0
    %193 = vmatmul.mubr.f32.gmra.mrb[0].mxu0 %v99
    %v194 = vpop.f32.mrb[0].mxu0
    %v195 = vadd.f32 %v92, %v194
    %v196 = vpop.f32.mrb[0].mxu0
    %197 = vmatprep.mubr.f32.mxu0 0.0
    %198 = vmatmul.mubr.f32.gmra.mrb[0].mxu0 %v102
    %v199 = vpop.f32.mrb[0].mxu0
    %v200 = vadd.f32 %v92, %v199
    %v201 = vpop.f32.mrb[0].mxu0
    %202 = vmatprep.mubr.f32.mxu0 0.0
    %203 = vmatmul.mubr.f32.gmra.mrb[0].mxu0 %v105
    %v204 = vpop.f32.mrb[0].mxu0
    %v205 = vadd.f32 %v92, %v204
    %v206 = vpop.f32.mrb[0].mxu0
    %207 = vmatprep.mubr.f32.mxu0 0.0
    %208 = vmatmul.mubr.f32.gmra.mrb[0].mxu0 %v108
    %v209 = vpop.f32.mrb[0].mxu0
    %v210 = vadd.f32 %v92, %v209
    %v211 = vpop.f32.mrb[0].mxu0
    %212 = vmatprep.mubr.f32.mxu0 0.0
    %213 = vmatmul.mubr.f32.gmra.mrb[0].mxu0 %v111
    %v214 = vpop.f32.mrb[0].mxu0
    %v215 = vadd.f32 %v92, %v214
    %v216 = vpop.f32.mrb[0].mxu0
    %217 = vmatprep.mubr.f32.mxu0 0.0
    %218 = vmatmul.mubr.f32.gmra.mrb[0].mxu0 %v114
    %v219 = vpop.f32.mrb[0].mxu0
    %v220 = vadd.f32 %v92, %v219
    %v221 = vpop.f32.mrb[0].mxu0
    %222 = vmatprep.mubr.f32.mxu0 0.0
    %223 = vmatmul.mubr.f32.gmra.mrb[0].mxu0 %v117
    %v224 = vpop.f32.mrb[0].mxu0
    %v225 = vadd.f32 %v92, %v224
    %v226 = vpop.f32.mrb[0].mxu0
    %227 = vdwg.mxu0
    %vm228 = vcmask 261120
    %v230 = vsel %vm228, 0.0, 0
    %232 = vmatprep.subr.mxu0 0.0
    %233 = vmatpush1.msra.mxu0 %v83
    %234 = vmatprep.subr.mxu0 0.0
    %235 = vmatpush1.msra.mxu0 %v84
    %236 = vmatprep.subr.mxu0 0.0
    %237 = vmatpush1.msra.mxu0 %v85
    %238 = vmatprep.subr.mxu0 0.0
    %239 = vmatpush1.msra.mxu0 %v86
    %240 = vmatprep.subr.mxu0 0.0
    %241 = vmatpush1.msra.mxu0 0.0
    %242 = vmatprep.subr.mxu0 0.0
    %243 = vmatpush1.msra.mxu0 0.0
    %244 = vmatprep.subr.mxu0 0.0
    %245 = vmatpush1.msra.mxu0 0.0
    %246 = vmatprep.subr.mxu0 0.0
    %247 = vmatpush1.msra.mxu0 0.0
    %248 = vmatprep.subr.mxu0 0.0
    %249 = vmatpush1.msra.mxu0 0.0
    %250 = vmatprep.subr.mxu0 0.0
    %251 = vmatpush1.msra.mxu0 0.0
    %252 = vmatprep.subr.mxu0 0.0
    %253 = vmatpush1.msra.mxu0 0.0
    %254 = vmatprep.subr.mxu0 0.0
    %255 = vmatpush1.msra.mxu0 0.0
    %256 = vmatprep.subr.mxu0 0.0
    %257 = vmatpush1.msra.mxu0 0.0
    %258 = vmatprep.subr.mxu0 0.0
    %259 = vmatpush1.msra.mxu0 0.0
    %260 = vmatprep.subr.mxu0 0.0
    %261 = vmatpush1.msra.mxu0 0.0
    %262 = vmatprep.subr.mxu0 0.0
    %263 = vmatpush1.msra.mxu0 0.0
    %264 = vmatprep.subr.mxu0 0.0
    %265 = vmatpush1.msra.mxu0 0.0
    %266 = vmatprep.subr.mxu0 0.0
    %267 = vmatpush1.msra.mxu0 0.0
    %268 = vmatprep.subr.mxu0 0.0
    %269 = vmatpush1.msra.mxu0 0.0
    %270 = vmatprep.subr.mxu0 0.0
    %271 = vmatpush1.msra.mxu0 0.0
    %272 = vmatprep.subr.mxu0 0.0
    %273 = vmatpush1.msra.mxu0 0.0
    %274 = vmatprep.subr.mxu0 0.0
    %275 = vmatpush1.msra.mxu0 0.0
    %276 = vmatprep.subr.mxu0 0.0
    %277 = vmatpush1.msra.mxu0 0.0
    %278 = vmatprep.subr.mxu0 0.0
    %279 = vmatpush1.msra.mxu0 0.0
    %280 = vmatprep.subr.mxu0 0.0
    %281 = vmatpush1.msra.mxu0 0.0
    %282 = vmatprep.subr.mxu0 0.0
    %283 = vmatpush1.msra.mxu0 0.0
    %284 = vmatprep.subr.mxu0 0.0
    %285 = vmatpush1.msra.mxu0 0.0
    %286 = vmatprep.subr.mxu0 0.0
    %287 = vmatpush1.msra.mxu0 0.0
    %288 = vmatprep.subr.mxu0 0.0
    %289 = vmatpush1.msra.mxu0 0.0
    %290 = vmatprep.subr.mxu0 0.0
    %291 = vmatpush1.msra.mxu0 0.0
    %292 = vmatprep.subr.mxu0 0.0
    %293 = vmatpush1.msra.mxu0 0.0
    %294 = vmatprep.subr.mxu0 0.0
    %295 = vmatpush1.msra.mxu0 0.0
    %296 = vmatprep.mubr.f32.mxu0 0.0
    %297 = vmatmul.mubr.f32.gmra.mrb[0].mxu0 %v230
    %v298 = vpop.f32.mrb[0].mxu0
    %v299 = vadd.f32 0.0, %v298
    %v300 = vpop.f32.mrb[0].mxu0
    %301 = vdwg.mxu0
    %v302 = vadd.f32 %v190, %v299
    %v303 = vxor.u32 %v302, 2147483648
    %v304 = vmul.f32 %v303, 1.442695
    %v305 = vpow.pop %v304
    %v306 = vadd.f32 %v305, 1.0
    %v307 = vrcp.pop %v306
    %v308 = vmul.f32 1.0, %v307
    %v309 = vtanh.pop %v302
    %v310 = vmul.f32 %v308, 0.0
    %312 = vrot.lane.b32.xlu0 %v309, 32
    %v313 = vpop.permute.xlu0 %312
    %v315 = vmul.f32 %v308, %v313
    %317 = vrot.lane.b32.xlu0 %v315, 32
    %v318 = vpop.permute.xlu0 %317
    %v320 = vadd.f32 %v310, %v318
    %v321 = vtanh.pop %v320
    %323 = vrot.lane.b32.xlu0 %v321, 32
    %v324 = vpop.permute.xlu0 %323
    %v326 = vmul.f32 %v308, %v324
    %328 = vrot.lane.b32.xlu0 %v326, 64
    %v329 = vpop.permute.xlu0 %328
    %331 = vst.msk [vmem:[#allocation2] sm:$0xff] %vm228, %v329
    %v332 = vsel %vm228, %v329, 0
    %334 = vmatprep.subr.mxu0 0.0
    %335 = vmatpush1.msra.mxu0 %v83
    %336 = vmatprep.subr.mxu0 0.0
    %337 = vmatpush1.msra.mxu0 %v84
    %338 = vmatprep.subr.mxu0 0.0
    %339 = vmatpush1.msra.mxu0 %v85
    %340 = vmatprep.subr.mxu0 0.0
    %341 = vmatpush1.msra.mxu0 %v86
    %342 = vmatprep.subr.mxu0 0.0
    %343 = vmatpush1.msra.mxu0 0.0
    %344 = vmatprep.subr.mxu0 0.0
    %345 = vmatpush1.msra.mxu0 0.0
    %346 = vmatprep.subr.mxu0 0.0
    %347 = vmatpush1.msra.mxu0 0.0
    %348 = vmatprep.subr.mxu0 0.0
    %349 = vmatpush1.msra.mxu0 0.0
    %350 = vmatprep.subr.mxu0 0.0
    %351 = vmatpush1.msra.mxu0 0.0
    %352 = vmatprep.subr.mxu0 0.0
    %353 = vmatpush1.msra.mxu0 0.0
    %354 = vmatprep.subr.mxu0 0.0
    %355 = vmatpush1.msra.mxu0 0.0
    %356 = vmatprep.subr.mxu0 0.0
    %357 = vmatpush1.msra.mxu0 0.0
    %358 = vmatprep.subr.mxu0 0.0
    %359 = vmatpush1.msra.mxu0 0.0
    %360 = vmatprep.subr.mxu0 0.0
    %361 = vmatpush1.msra.mxu0 0.0
    %362 = vmatprep.subr.mxu0 0.0
    %363 = vmatpush1.msra.mxu0 0.0
    %364 = vmatprep.subr.mxu0 0.0
    %365 = vmatpush1.msra.mxu0 0.0
    %366 = vmatprep.subr.mxu0 0.0
    %367 = vmatpush1.msra.mxu0 0.0
    %368 = vmatprep.subr.mxu0 0.0
    %369 = vmatpush1.msra.mxu0 0.0
    %370 = vmatprep.subr.mxu0 0.0
    %371 = vmatpush1.msra.mxu0 0.0
    %372 = vmatprep.subr.mxu0 0.0
    %373 = vmatpush1.msra.mxu0 0.0
    %374 = vmatprep.subr.mxu0 0.0
    %375 = vmatpush1.msra.mxu0 0.0
    %376 = vmatprep.subr.mxu0 0.0
    %377 = vmatpush1.msra.mxu0 0.0
    %378 = vmatprep.subr.mxu0 0.0
    %379 = vmatpush1.msra.mxu0 0.0
    %380 = vmatprep.subr.mxu0 0.0
    %381 = vmatpush1.msra.mxu0 0.0
    %382 = vmatprep.subr.mxu0 0.0
    %383 = vmatpush1.msra.mxu0 0.0
    %384 = vmatprep.subr.mxu0 0.0
    %385 = vmatpush1.msra.mxu0 0.0
    %386 = vmatprep.subr.mxu0 0.0
    %387 = vmatpush1.msra.mxu0 0.0
    %388 = vmatprep.subr.mxu0 0.0
    %389 = vmatpush1.msra.mxu0 0.0
    %390 = vmatprep.subr.mxu0 0.0
    %391 = vmatpush1.msra.mxu0 0.0
    %392 = vmatprep.subr.mxu0 0.0
    %393 = vmatpush1.msra.mxu0 0.0
    %394 = vmatprep.subr.mxu0 0.0
    %395 = vmatpush1.msra.mxu0 0.0
    %396 = vmatprep.subr.mxu0 0.0
    %397 = vmatpush1.msra.mxu0 0.0
    %398 = vmatprep.mubr.f32.mxu0 0.0
    %399 = vmatmul.mubr.f32.gmra.mrb[0].mxu0 %v332
    %v400 = vpop.f32.mrb[0].mxu0
    %v401 = vadd.f32 0.0, %v400
    %v402 = vpop.f32.mrb[0].mxu0
    %403 = vdwg.mxu0
    %v404 = vadd.f32 %v195, %v401
    %v405 = vxor.u32 %v404, 2147483648
    %v406 = vmul.f32 %v405, 1.442695
    %v407 = vpow.pop %v406
    %v408 = vadd.f32 %v407, 1.0
    %v409 = vrcp.pop %v408
    %v410 = vmul.f32 1.0, %v409
    %v411 = vtanh.pop %v404
    %v412 = vmul.f32 %v410, %v320
    %414 = vrot.lane.b32.xlu0 %v411, 32
    %v415 = vpop.permute.xlu0 %414
    %v417 = vmul.f32 %v410, %v415
    %419 = vrot.lane.b32.xlu0 %v417, 32
    %v420 = vpop.permute.xlu0 %419
    %v422 = vadd.f32 %v412, %v420
    %v423 = vtanh.pop %v422
    %425 = vrot.lane.b32.xlu0 %v423, 32
    %v426 = vpop.permute.xlu0 %425
    %v428 = vmul.f32 %v410, %v426
    %430 = vrot.lane.b32.xlu0 %v428, 64
    %v431 = vpop.permute.xlu0 %430
    %433 = vst.msk [vmem:[#allocation2 + $0x8] sm:$0xff] %vm228, %v431
    %v434 = vsel %vm228, %v431, 0
    %436 = vmatprep.subr.mxu0 0.0
    %437 = vmatpush1.msra.mxu0 %v83
    %438 = vmatprep.subr.mxu0 0.0
    %439 = vmatpush1.msra.mxu0 %v84
    %440 = vmatprep.subr.mxu0 0.0
    %441 = vmatpush1.msra.mxu0 %v85
    %442 = vmatprep.subr.mxu0 0.0
    %443 = vmatpush1.msra.mxu0 %v86
    %444 = vmatprep.subr.mxu0 0.0
    %445 = vmatpush1.msra.mxu0 0.0
    %446 = vmatprep.subr.mxu0 0.0
    %447 = vmatpush1.msra.mxu0 0.0
    %448 = vmatprep.subr.mxu0 0.0
    %449 = vmatpush1.msra.mxu0 0.0
    %450 = vmatprep.subr.mxu0 0.0
    %451 = vmatpush1.msra.mxu0 0.0
    %452 = vmatprep.subr.mxu0 0.0
    %453 = vmatpush1.msra.mxu0 0.0
    %454 = vmatprep.subr.mxu0 0.0
    %455 = vmatpush1.msra.mxu0 0.0
    %456 = vmatprep.subr.mxu0 0.0
    %457 = vmatpush1.msra.mxu0 0.0
    %458 = vmatprep.subr.mxu0 0.0
    %459 = vmatpush1.msra.mxu0 0.0
    %460 = vmatprep.subr.mxu0 0.0
    %461 = vmatpush1.msra.mxu0 0.0
    %462 = vmatprep.subr.mxu0 0.0
    %463 = vmatpush1.msra.mxu0 0.0
    %464 = vmatprep.subr.mxu0 0.0
    %465 = vmatpush1.msra.mxu0 0.0
    %466 = vmatprep.subr.mxu0 0.0
    %467 = vmatpush1.msra.mxu0 0.0
    %468 = vmatprep.subr.mxu0 0.0
    %469 = vmatpush1.msra.mxu0 0.0
    %470 = vmatprep.subr.mxu0 0.0
    %471 = vmatpush1.msra.mxu0 0.0
    %472 = vmatprep.subr.mxu0 0.0
    %473 = vmatpush1.msra.mxu0 0.0
    %474 = vmatprep.subr.mxu0 0.0
    %475 = vmatpush1.msra.mxu0 0.0
    %476 = vmatprep.subr.mxu0 0.0
    %477 = vmatpush1.msra.mxu0 0.0
    %478 = vmatprep.subr.mxu0 0.0
    %479 = vmatpush1.msra.mxu0 0.0
    %480 = vmatprep.subr.mxu0 0.0
    %481 = vmatpush1.msra.mxu0 0.0
    %482 = vmatprep.subr.mxu0 0.0
    %483 = vmatpush1.msra.mxu0 0.0
    %484 = vmatprep.subr.mxu0 0.0
    %485 = vmatpush1.msra.mxu0 0.0
    %486 = vmatprep.subr.mxu0 0.0
    %487 = vmatpush1.msra.mxu0 0.0
    %488 = vmatprep.subr.mxu0 0.0
    %489 = vmatpush1.msra.mxu0 0.0
    %490 = vmatprep.subr.mxu0 0.0
    %491 = vmatpush1.msra.mxu0 0.0
    %492 = vmatprep.subr.mxu0 0.0
    %493 = vmatpush1.msra.mxu0 0.0
    %494 = vmatprep.subr.mxu0 0.0
    %495 = vmatpush1.msra.mxu0 0.0
    %496 = vmatprep.subr.mxu0 0.0
    %497 = vmatpush1.msra.mxu0 0.0
    %498 = vmatprep.subr.mxu0 0.0
    %499 = vmatpush1.msra.mxu0 0.0
    %500 = vmatprep.mubr.f32.mxu0 0.0
    %501 = vmatmul.mubr.f32.gmra.mrb[0].mxu0 %v434
    %v502 = vpop.f32.mrb[0].mxu0
    %v503 = vadd.f32 0.0, %v502
    %v504 = vpop.f32.mrb[0].mxu0
    %505 = vdwg.mxu0
    %v506 = vadd.f32 %v200, %v503
    %v507 = vxor.u32 %v506, 2147483648
    %v508 = vmul.f32 %v507, 1.442695
    %v509 = vpow.pop %v508
    %v510 = vadd.f32 %v509, 1.0
    %v511 = vrcp.pop %v510
    %v512 = vmul.f32 1.0, %v511
    %v513 = vtanh.pop %v506
    %v514 = vmul.f32 %v512, %v422
    %516 = vrot.lane.b32.xlu0 %v513, 32
    %v517 = vpop.permute.xlu0 %516
    %v519 = vmul.f32 %v512, %v517
    %521 = vrot.lane.b32.xlu0 %v519, 32
    %v522 = vpop.permute.xlu0 %521
    %v524 = vadd.f32 %v514, %v522
    %v525 = vtanh.pop %v524
    %527 = vrot.lane.b32.xlu0 %v525, 32
    %v528 = vpop.permute.xlu0 %527
    %v530 = vmul.f32 %v512, %v528
    %532 = vrot.lane.b32.xlu0 %v530, 64
    %v533 = vpop.permute.xlu0 %532
    %535 = vst.msk [vmem:[#allocation2 + $0x10] sm:$0xff] %vm228, %v533
    %v536 = vsel %vm228, %v533, 0
    %538 = vmatprep.subr.mxu0 0.0
    %539 = vmatpush1.msra.mxu0 %v83
    %540 = vmatprep.subr.mxu0 0.0
    %541 = vmatpush1.msra.mxu0 %v84
    %542 = vmatprep.subr.mxu0 0.0
    %543 = vmatpush1.msra.mxu0 %v85
    %544 = vmatprep.subr.mxu0 0.0
    %545 = vmatpush1.msra.mxu0 %v86
    %546 = vmatprep.subr.mxu0 0.0
    %547 = vmatpush1.msra.mxu0 0.0
    %548 = vmatprep.subr.mxu0 0.0
    %549 = vmatpush1.msra.mxu0 0.0
    %550 = vmatprep.subr.mxu0 0.0
    %551 = vmatpush1.msra.mxu0 0.0
    %552 = vmatprep.subr.mxu0 0.0
    %553 = vmatpush1.msra.mxu0 0.0
    %554 = vmatprep.subr.mxu0 0.0
    %555 = vmatpush1.msra.mxu0 0.0
    %556 = vmatprep.subr.mxu0 0.0
    %557 = vmatpush1.msra.mxu0 0.0
    %558 = vmatprep.subr.mxu0 0.0
    %559 = vmatpush1.msra.mxu0 0.0
    %560 = vmatprep.subr.mxu0 0.0
    %561 = vmatpush1.msra.mxu0 0.0
    %562 = vmatprep.subr.mxu0 0.0
    %563 = vmatpush1.msra.mxu0 0.0
    %564 = vmatprep.subr.mxu0 0.0
    %565 = vmatpush1.msra.mxu0 0.0
    %566 = vmatprep.subr.mxu0 0.0
    %567 = vmatpush1.msra.mxu0 0.0
    %568 = vmatprep.subr.mxu0 0.0
    %569 = vmatpush1.msra.mxu0 0.0
    %570 = vmatprep.subr.mxu0 0.0
    %571 = vmatpush1.msra.mxu0 0.0
    %572 = vmatprep.subr.mxu0 0.0
    %573 = vmatpush1.msra.mxu0 0.0
    %574 = vmatprep.subr.mxu0 0.0
    %575 = vmatpush1.msra.mxu0 0.0
    %576 = vmatprep.subr.mxu0 0.0
    %577 = vmatpush1.msra.mxu0 0.0
    %578 = vmatprep.subr.mxu0 0.0
    %579 = vmatpush1.msra.mxu0 0.0
    %580 = vmatprep.subr.mxu0 0.0
    %581 = vmatpush1.msra.mxu0 0.0
    %582 = vmatprep.subr.mxu0 0.0
    %583 = vmatpush1.msra.mxu0 0.0
    %584 = vmatprep.subr.mxu0 0.0
    %585 = vmatpush1.msra.mxu0 0.0
    %586 = vmatprep.subr.mxu0 0.0
    %587 = vmatpush1.msra.mxu0 0.0
    %588 = vmatprep.subr.mxu0 0.0
    %589 = vmatpush1.msra.mxu0 0.0
    %590 = vmatprep.subr.mxu0 0.0
    %591 = vmatpush1.msra.mxu0 0.0
    %592 = vmatprep.subr.mxu0 0.0
    %593 = vmatpush1.msra.mxu0 0.0
    %594 = vmatprep.subr.mxu0 0.0
    %595 = vmatpush1.msra.mxu0 0.0
    %596 = vmatprep.subr.mxu0 0.0
    %597 = vmatpush1.msra.mxu0 0.0
    %598 = vmatprep.subr.mxu0 0.0
    %599 = vmatpush1.msra.mxu0 0.0
    %600 = vmatprep.subr.mxu0 0.0
    %601 = vmatpush1.msra.mxu0 0.0
    %602 = vmatprep.mubr.f32.mxu0 0.0
    %603 = vmatmul.mubr.f32.gmra.mrb[0].mxu0 %v536
    %v604 = vpop.f32.mrb[0].mxu0
    %v605 = vadd.f32 0.0, %v604
    %v606 = vpop.f32.mrb[0].mxu0
    %607 = vdwg.mxu0
    %v608 = vadd.f32 %v205, %v605
    %v609 = vxor.u32 %v608, 2147483648
    %v610 = vmul.f32 %v609, 1.442695
    %v611 = vpow.pop %v610
    %v612 = vadd.f32 %v611, 1.0
    %v613 = vrcp.pop %v612
    %v614 = vmul.f32 1.0, %v613
    %v615 = vtanh.pop %v608
    %v616 = vmul.f32 %v614, %v524
    %618 = vrot.lane.b32.xlu0 %v615, 32
    %v619 = vpop.permute.xlu0 %618
    %v621 = vmul.f32 %v614, %v619
    %623 = vrot.lane.b32.xlu0 %v621, 32
    %v624 = vpop.permute.xlu0 %623
    %v626 = vadd.f32 %v616, %v624
    %v627 = vtanh.pop %v626
    %629 = vrot.lane.b32.xlu0 %v627, 32
    %v630 = vpop.permute.xlu0 %629
    %v632 = vmul.f32 %v614, %v630
    %634 = vrot.lane.b32.xlu0 %v632, 64
    %v635 = vpop.permute.xlu0 %634
    %637 = vst.msk [vmem:[#allocation2 + $0x18] sm:$0xff] %vm228, %v635
    %v638 = vsel %vm228, %v635, 0
    %640 = vmatprep.subr.mxu0 0.0
    %641 = vmatpush1.msra.mxu0 %v83
    %642 = vmatprep.subr.mxu0 0.0
    %643 = vmatpush1.msra.mxu0 %v84
    %644 = vmatprep.subr.mxu0 0.0
    %645 = vmatpush1.msra.mxu0 %v85
    %646 = vmatprep.subr.mxu0 0.0
    %647 = vmatpush1.msra.mxu0 %v86
    %648 = vmatprep.subr.mxu0 0.0
    %649 = vmatpush1.msra.mxu0 0.0
    %650 = vmatprep.subr.mxu0 0.0
    %651 = vmatpush1.msra.mxu0 0.0
    %652 = vmatprep.subr.mxu0 0.0
    %653 = vmatpush1.msra.mxu0 0.0
    %654 = vmatprep.subr.mxu0 0.0
    %655 = vmatpush1.msra.mxu0 0.0
    %656 = vmatprep.subr.mxu0 0.0
    %657 = vmatpush1.msra.mxu0 0.0
    %658 = vmatprep.subr.mxu0 0.0
    %659 = vmatpush1.msra.mxu0 0.0
    %660 = vmatprep.subr.mxu0 0.0
    %661 = vmatpush1.msra.mxu0 0.0
    %662 = vmatprep.subr.mxu0 0.0
    %663 = vmatpush1.msra.mxu0 0.0
    %664 = vmatprep.subr.mxu0 0.0
    %665 = vmatpush1.msra.mxu0 0.0
    %666 = vmatprep.subr.mxu0 0.0
    %667 = vmatpush1.msra.mxu0 0.0
    %668 = vmatprep.subr.mxu0 0.0
    %669 = vmatpush1.msra.mxu0 0.0
    %670 = vmatprep.subr.mxu0 0.0
    %671 = vmatpush1.msra.mxu0 0.0
    %672 = vmatprep.subr.mxu0 0.0
    %673 = vmatpush1.msra.mxu0 0.0
    %674 = vmatprep.subr.mxu0 0.0
    %675 = vmatpush1.msra.mxu0 0.0
    %676 = vmatprep.subr.mxu0 0.0
    %677 = vmatpush1.msra.mxu0 0.0
    %678 = vmatprep.subr.mxu0 0.0
    %679 = vmatpush1.msra.mxu0 0.0
    %680 = vmatprep.subr.mxu0 0.0
    %681 = vmatpush1.msra.mxu0 0.0
    %682 = vmatprep.subr.mxu0 0.0
    %683 = vmatpush1.msra.mxu0 0.0
    %684 = vmatprep.subr.mxu0 0.0
    %685 = vmatpush1.msra.mxu0 0.0
    %686 = vmatprep.subr.mxu0 0.0
    %687 = vmatpush1.msra.mxu0 0.0
    %688 = vmatprep.subr.mxu0 0.0
    %689 = vmatpush1.msra.mxu0 0.0
    %690 = vmatprep.subr.mxu0 0.0
    %691 = vmatpush1.msra.mxu0 0.0
    %692 = vmatprep.subr.mxu0 0.0
    %693 = vmatpush1.msra.mxu0 0.0
    %694 = vmatprep.subr.mxu0 0.0
    %695 = vmatpush1.msra.mxu0 0.0
    %696 = vmatprep.subr.mxu0 0.0
    %697 = vmatpush1.msra.mxu0 0.0
    %698 = vmatprep.subr.mxu0 0.0
    %699 = vmatpush1.msra.mxu0 0.0
    %700 = vmatprep.subr.mxu0 0.0
    %701 = vmatpush1.msra.mxu0 0.0
    %702 = vmatprep.subr.mxu0 0.0
    %703 = vmatpush1.msra.mxu0 0.0
    %704 = vmatprep.mubr.f32.mxu0 0.0
    %705 = vmatmul.mubr.f32.gmra.mrb[0].mxu0 %v638
    %v706 = vpop.f32.mrb[0].mxu0
    %v707 = vadd.f32 0.0, %v706
    %v708 = vpop.f32.mrb[0].mxu0
    %709 = vdwg.mxu0
    %v710 = vadd.f32 %v210, %v707
    %v711 = vxor.u32 %v710, 2147483648
    %v712 = vmul.f32 %v711, 1.442695
    %v713 = vpow.pop %v712
    %v714 = vadd.f32 %v713, 1.0
    %v715 = vrcp.pop %v714
    %v716 = vmul.f32 1.0, %v715
    %v717 = vtanh.pop %v710
    %v718 = vmul.f32 %v716, %v626
    %720 = vrot.lane.b32.xlu0 %v717, 32
    %v721 = vpop.permute.xlu0 %720
    %v723 = vmul.f32 %v716, %v721
    %725 = vrot.lane.b32.xlu0 %v723, 32
    %v726 = vpop.permute.xlu0 %725
    %v728 = vadd.f32 %v718, %v726
    %v729 = vtanh.pop %v728
    %731 = vrot.lane.b32.xlu0 %v729, 32
    %v732 = vpop.permute.xlu0 %731
    %v734 = vmul.f32 %v716, %v732
    %736 = vrot.lane.b32.xlu0 %v734, 64
    %v737 = vpop.permute.xlu0 %736
    %739 = vst.msk [vmem:[#allocation2 + $0x20] sm:$0xff] %vm228, %v737
    %v740 = vsel %vm228, %v737, 0
    %742 = vmatprep.subr.mxu0 0.0
    %743 = vmatpush1.msra.mxu0 %v83
    %744 = vmatprep.subr.mxu0 0.0
    %745 = vmatpush1.msra.mxu0 %v84
    %746 = vmatprep.subr.mxu0 0.0
    %747 = vmatpush1.msra.mxu0 %v85
    %748 = vmatprep.subr.mxu0 0.0
    %749 = vmatpush1.msra.mxu0 %v86
    %750 = vmatprep.subr.mxu0 0.0
    %751 = vmatpush1.msra.mxu0 0.0
    %752 = vmatprep.subr.mxu0 0.0
    %753 = vmatpush1.msra.mxu0 0.0
    %754 = vmatprep.subr.mxu0 0.0
    %755 = vmatpush1.msra.mxu0 0.0
    %756 = vmatprep.subr.mxu0 0.0
    %757 = vmatpush1.msra.mxu0 0.0
    %758 = vmatprep.subr.mxu0 0.0
    %759 = vmatpush1.msra.mxu0 0.0
    %760 = vmatprep.subr.mxu0 0.0
    %761 = vmatpush1.msra.mxu0 0.0
    %762 = vmatprep.subr.mxu0 0.0
    %763 = vmatpush1.msra.mxu0 0.0
    %764 = vmatprep.subr.mxu0 0.0
    %765 = vmatpush1.msra.mxu0 0.0
    %766 = vmatprep.subr.mxu0 0.0
    %767 = vmatpush1.msra.mxu0 0.0
    %768 = vmatprep.subr.mxu0 0.0
    %769 = vmatpush1.msra.mxu0 0.0
    %770 = vmatprep.subr.mxu0 0.0
    %771 = vmatpush1.msra.mxu0 0.0
    %772 = vmatprep.subr.mxu0 0.0
    %773 = vmatpush1.msra.mxu0 0.0
    %774 = vmatprep.subr.mxu0 0.0
    %775 = vmatpush1.msra.mxu0 0.0
    %776 = vmatprep.subr.mxu0 0.0
    %777 = vmatpush1.msra.mxu0 0.0
    %778 = vmatprep.subr.mxu0 0.0
    %779 = vmatpush1.msra.mxu0 0.0
    %780 = vmatprep.subr.mxu0 0.0
    %781 = vmatpush1.msra.mxu0 0.0
    %782 = vmatprep.subr.mxu0 0.0
    %783 = vmatpush1.msra.mxu0 0.0
    %784 = vmatprep.subr.mxu0 0.0
    %785 = vmatpush1.msra.mxu0 0.0
    %786 = vmatprep.subr.mxu0 0.0
    %787 = vmatpush1.msra.mxu0 0.0
    %788 = vmatprep.subr.mxu0 0.0
    %789 = vmatpush1.msra.mxu0 0.0
    %790 = vmatprep.subr.mxu0 0.0
    %791 = vmatpush1.msra.mxu0 0.0
    %792 = vmatprep.subr.mxu0 0.0
    %793 = vmatpush1.msra.mxu0 0.0
    %794 = vmatprep.subr.mxu0 0.0
    %795 = vmatpush1.msra.mxu0 0.0
    %796 = vmatprep.subr.mxu0 0.0
    %797 = vmatpush1.msra.mxu0 0.0
    %798 = vmatprep.subr.mxu0 0.0
    %799 = vmatpush1.msra.mxu0 0.0
    %800 = vmatprep.subr.mxu0 0.0
    %801 = vmatpush1.msra.mxu0 0.0
    %802 = vmatprep.subr.mxu0 0.0
    %803 = vmatpush1.msra.mxu0 0.0
    %804 = vmatprep.subr.mxu0 0.0
    %805 = vmatpush1.msra.mxu0 0.0
    %806 = vmatprep.mubr.f32.mxu0 0.0
    %807 = vmatmul.mubr.f32.gmra.mrb[0].mxu0 %v740
    %v808 = vpop.f32.mrb[0].mxu0
    %v809 = vadd.f32 0.0, %v808
    %v810 = vpop.f32.mrb[0].mxu0
    %811 = vdwg.mxu0
    %v812 = vadd.f32 %v215, %v809
    %v813 = vxor.u32 %v812, 2147483648
    %v814 = vmul.f32 %v813, 1.442695
    %v815 = vpow.pop %v814
    %v816 = vadd.f32 %v815, 1.0
    %v817 = vrcp.pop %v816
    %v818 = vmul.f32 1.0, %v817
    %v819 = vtanh.pop %v812
    %v820 = vmul.f32 %v818, %v728
    %822 = vrot.lane.b32.xlu0 %v819, 32
    %v823 = vpop.permute.xlu0 %822
    %v825 = vmul.f32 %v818, %v823
    %827 = vrot.lane.b32.xlu0 %v825, 32
    %v828 = vpop.permute.xlu0 %827
    %v830 = vadd.f32 %v820, %v828
    %v831 = vtanh.pop %v830
    %833 = vrot.lane.b32.xlu0 %v831, 32
    %v834 = vpop.permute.xlu0 %833
    %v836 = vmul.f32 %v818, %v834
    %838 = vrot.lane.b32.xlu0 %v836, 64
    %v839 = vpop.permute.xlu0 %838
    %841 = vst.msk [vmem:[#allocation2 + $0x28] sm:$0xff] %vm228, %v839
    %v842 = vsel %vm228, %v839, 0
    %844 = vmatprep.subr.mxu0 0.0
    %845 = vmatpush1.msra.mxu0 %v83
    %846 = vmatprep.subr.mxu0 0.0
    %847 = vmatpush1.msra.mxu0 %v84
    %848 = vmatprep.subr.mxu0 0.0
    %849 = vmatpush1.msra.mxu0 %v85
    %850 = vmatprep.subr.mxu0 0.0
    %851 = vmatpush1.msra.mxu0 %v86
    %852 = vmatprep.subr.mxu0 0.0
    %853 = vmatpush1.msra.mxu0 0.0
    %854 = vmatprep.subr.mxu0 0.0
    %855 = vmatpush1.msra.mxu0 0.0
    %856 = vmatprep.subr.mxu0 0.0
    %857 = vmatpush1.msra.mxu0 0.0
    %858 = vmatprep.subr.mxu0 0.0
    %859 = vmatpush1.msra.mxu0 0.0
    %860 = vmatprep.subr.mxu0 0.0
    %861 = vmatpush1.msra.mxu0 0.0
    %862 = vmatprep.subr.mxu0 0.0
    %863 = vmatpush1.msra.mxu0 0.0
    %864 = vmatprep.subr.mxu0 0.0
    %865 = vmatpush1.msra.mxu0 0.0
    %866 = vmatprep.subr.mxu0 0.0
    %867 = vmatpush1.msra.mxu0 0.0
    %868 = vmatprep.subr.mxu0 0.0
    %869 = vmatpush1.msra.mxu0 0.0
    %870 = vmatprep.subr.mxu0 0.0
    %871 = vmatpush1.msra.mxu0 0.0
    %872 = vmatprep.subr.mxu0 0.0
    %873 = vmatpush1.msra.mxu0 0.0
    %874 = vmatprep.subr.mxu0 0.0
    %875 = vmatpush1.msra.mxu0 0.0
    %876 = vmatprep.subr.mxu0 0.0
    %877 = vmatpush1.msra.mxu0 0.0
    %878 = vmatprep.subr.mxu0 0.0
    %879 = vmatpush1.msra.mxu0 0.0
    %880 = vmatprep.subr.mxu0 0.0
    %881 = vmatpush1.msra.mxu0 0.0
    %882 = vmatprep.subr.mxu0 0.0
    %883 = vmatpush1.msra.mxu0 0.0
    %884 = vmatprep.subr.mxu0 0.0
    %885 = vmatpush1.msra.mxu0 0.0
    %886 = vmatprep.subr.mxu0 0.0
    %887 = vmatpush1.msra.mxu0 0.0
    %888 = vmatprep.subr.mxu0 0.0
    %889 = vmatpush1.msra.mxu0 0.0
    %890 = vmatprep.subr.mxu0 0.0
    %891 = vmatpush1.msra.mxu0 0.0
    %892 = vmatprep.subr.mxu0 0.0
    %893 = vmatpush1.msra.mxu0 0.0
    %894 = vmatprep.subr.mxu0 0.0
    %895 = vmatpush1.msra.mxu0 0.0
    %896 = vmatprep.subr.mxu0 0.0
    %897 = vmatpush1.msra.mxu0 0.0
    %898 = vmatprep.subr.mxu0 0.0
    %899 = vmatpush1.msra.mxu0 0.0
    %900 = vmatprep.subr.mxu0 0.0
    %901 = vmatpush1.msra.mxu0 0.0
    %902 = vmatprep.subr.mxu0 0.0
    %903 = vmatpush1.msra.mxu0 0.0
    %904 = vmatprep.subr.mxu0 0.0
    %905 = vmatpush1.msra.mxu0 0.0
    %906 = vmatprep.subr.mxu0 0.0
    %907 = vmatpush1.msra.mxu0 0.0
    %908 = vmatprep.mubr.f32.mxu0 0.0
    %909 = vmatmul.mubr.f32.gmra.mrb[0].mxu0 %v842
    %v910 = vpop.f32.mrb[0].mxu0
    %v911 = vadd.f32 0.0, %v910
    %v912 = vpop.f32.mrb[0].mxu0
    %913 = vdwg.mxu0
    %v914 = vadd.f32 %v220, %v911
    %v915 = vxor.u32 %v914, 2147483648
    %v916 = vmul.f32 %v915, 1.442695
    %v917 = vpow.pop %v916
    %v918 = vadd.f32 %v917, 1.0
    %v919 = vrcp.pop %v918
    %v920 = vmul.f32 1.0, %v919
    %v921 = vtanh.pop %v914
    %v922 = vmul.f32 %v920, %v830
    %924 = vrot.lane.b32.xlu0 %v921, 32
    %v925 = vpop.permute.xlu0 %924
    %v927 = vmul.f32 %v920, %v925
    %929 = vrot.lane.b32.xlu0 %v927, 32
    %v930 = vpop.permute.xlu0 %929
    %v932 = vadd.f32 %v922, %v930
    %v933 = vtanh.pop %v932
    %935 = vrot.lane.b32.xlu0 %v933, 32
    %v936 = vpop.permute.xlu0 %935
    %v938 = vmul.f32 %v920, %v936
    %940 = vrot.lane.b32.xlu0 %v938, 64
    %v941 = vpop.permute.xlu0 %940
    %943 = vst.msk [vmem:[#allocation2 + $0x30] sm:$0xff] %vm228, %v941
    %v944 = vsel %vm228, %v941, 0
    %946 = vmatprep.subr.mxu0 0.0
    %947 = vmatpush1.msra.mxu0 %v83
    %948 = vmatprep.subr.mxu0 0.0
    %949 = vmatpush1.msra.mxu0 %v84
    %950 = vmatprep.subr.mxu0 0.0
    %951 = vmatpush1.msra.mxu0 %v85
    %952 = vmatprep.subr.mxu0 0.0
    %953 = vmatpush1.msra.mxu0 %v86
    %954 = vmatprep.subr.mxu0 0.0
    %955 = vmatpush1.msra.mxu0 0.0
    %956 = vmatprep.subr.mxu0 0.0
    %957 = vmatpush1.msra.mxu0 0.0
    %958 = vmatprep.subr.mxu0 0.0
    %959 = vmatpush1.msra.mxu0 0.0
    %960 = vmatprep.subr.mxu0 0.0
    %961 = vmatpush1.msra.mxu0 0.0
    %962 = vmatprep.subr.mxu0 0.0
    %963 = vmatpush1.msra.mxu0 0.0
    %964 = vmatprep.subr.mxu0 0.0
    %965 = vmatpush1.msra.mxu0 0.0
    %966 = vmatprep.subr.mxu0 0.0
    %967 = vmatpush1.msra.mxu0 0.0
    %968 = vmatprep.subr.mxu0 0.0
    %969 = vmatpush1.msra.mxu0 0.0
    %970 = vmatprep.subr.mxu0 0.0
    %971 = vmatpush1.msra.mxu0 0.0
    %972 = vmatprep.subr.mxu0 0.0
    %973 = vmatpush1.msra.mxu0 0.0
    %974 = vmatprep.subr.mxu0 0.0
    %975 = vmatpush1.msra.mxu0 0.0
    %976 = vmatprep.subr.mxu0 0.0
    %977 = vmatpush1.msra.mxu0 0.0
    %978 = vmatprep.subr.mxu0 0.0
    %979 = vmatpush1.msra.mxu0 0.0
    %980 = vmatprep.subr.mxu0 0.0
    %981 = vmatpush1.msra.mxu0 0.0
    %982 = vmatprep.subr.mxu0 0.0
    %983 = vmatpush1.msra.mxu0 0.0
    %984 = vmatprep.subr.mxu0 0.0
    %985 = vmatpush1.msra.mxu0 0.0
    %986 = vmatprep.subr.mxu0 0.0
    %987 = vmatpush1.msra.mxu0 0.0
    %988 = vmatprep.subr.mxu0 0.0
    %989 = vmatpush1.msra.mxu0 0.0
    %990 = vmatprep.subr.mxu0 0.0
    %991 = vmatpush1.msra.mxu0 0.0
    %992 = vmatprep.subr.mxu0 0.0
    %993 = vmatpush1.msra.mxu0 0.0
    %994 = vmatprep.subr.mxu0 0.0
    %995 = vmatpush1.msra.mxu0 0.0
    %996 = vmatprep.subr.mxu0 0.0
    %997 = vmatpush1.msra.mxu0 0.0
    %998 = vmatprep.subr.mxu0 0.0
    %999 = vmatpush1.msra.mxu0 0.0
    %1000 = vmatprep.subr.mxu0 0.0
    %1001 = vmatpush1.msra.mxu0 0.0
    %1002 = vmatprep.subr.mxu0 0.0
    %1003 = vmatpush1.msra.mxu0 0.0
    %1004 = vmatprep.subr.mxu0 0.0
    %1005 = vmatpush1.msra.mxu0 0.0
    %1006 = vmatprep.subr.mxu0 0.0
    %1007 = vmatpush1.msra.mxu0 0.0
    %1008 = vmatprep.subr.mxu0 0.0
    %1009 = vmatpush1.msra.mxu0 0.0
    %1010 = vmatprep.mubr.f32.mxu0 0.0
    %1011 = vmatmul.mubr.f32.gmra.mrb[0].mxu0 %v944
    %v1012 = vpop.f32.mrb[0].mxu0
    %v1013 = vadd.f32 0.0, %v1012
    %v1014 = vpop.f32.mrb[0].mxu0
    %1015 = vdwg.mxu0
    %v1016 = vadd.f32 %v225, %v1013
    %v1017 = vxor.u32 %v1016, 2147483648
    %v1018 = vmul.f32 %v1017, 1.442695
    %v1019 = vpow.pop %v1018
    %v1020 = vadd.f32 %v1019, 1.0
    %v1021 = vrcp.pop %v1020
    %v1022 = vmul.f32 1.0, %v1021
    %v1023 = vtanh.pop %v1016
    %v1024 = vmul.f32 %v1022, %v932
    %1026 = vrot.lane.b32.xlu0 %v1023, 32
    %v1027 = vpop.permute.xlu0 %1026
    %v1029 = vmul.f32 %v1022, %v1027
    %1031 = vrot.lane.b32.xlu0 %v1029, 32
    %v1032 = vpop.permute.xlu0 %1031
    %v1034 = vadd.f32 %v1024, %v1032
    %v1035 = vtanh.pop %v1034
    %1037 = vrot.lane.b32.xlu0 %v1035, 32
    %v1038 = vpop.permute.xlu0 %1037
    %v1040 = vmul.f32 %v1022, %v1038
    %1042 = vrot.lane.b32.xlu0 %v1040, 64
    %v1043 = vpop.permute.xlu0 %1042
    %1045 = vst.msk [vmem:[#allocation2 + $0x38] sm:$0xff] %vm228, %v1043
    %v1046 = vld [vmem:[#allocation2] sm:$0xff]
    %v1047 = vld [vmem:[#allocation2 + $0x8] sm:$0xff]
    %v1048 = vld [vmem:[#allocation2 + $0x10] sm:$0xff]
    %v1049 = vld [vmem:[#allocation2 + $0x18] sm:$0xff]
    %v1050 = vld [vmem:[#allocation2 + $0x20] sm:$0xff]
    %v1051 = vld [vmem:[#allocation2 + $0x28] sm:$0xff]
    %v1052 = vld [vmem:[#allocation2 + $0x30] sm:$0xff]
    %v1053 = vld [vmem:[#allocation2 + $0x38] sm:$0xff]
    %v1054 = vld [vmem:[%s4] sm:$0xff]
    %v1055 = vld [vmem:[%s4 + $0x8] sm:$0xff]
    %v1056 = vld [vmem:[%s4 + $0x10] sm:$0xff]
    %v1057 = vld [vmem:[%s4 + $0x18] sm:$0xff]
    %v1058 = vld [vmem:[%s5] sm:$0xff]
    %v1059 = vld [vmem:[%s5 + $0x8] sm:$0xff]
    %v1060 = vld [vmem:[%s5 + $0x10] sm:$0xff]
    %v1061 = vld [vmem:[%s5 + $0x18] sm:$0xff]
    %v1062 = vld [vmem:[%s6] sm:$0x1]
    %v1064 = vlaneseq
    %v1065 = vshrl.u32 %v1064, 7
    %v1066 = vsub.s32 0, %v1065
    %v1067 = vrot.slane %v1062, %v1066
    %v1070 = vsel %vm228, %v1046, 0
    %v1073 = vsel %vm228, %v1047, 0
    %v1076 = vsel %vm228, %v1048, 0
    %v1079 = vsel %vm228, %v1049, 0
    %v1082 = vsel %vm228, %v1050, 0
    %v1085 = vsel %vm228, %v1051, 0
    %v1088 = vsel %vm228, %v1052, 0
    %v1091 = vsel %vm228, %v1053, 0
    %1093 = vmatprep.subr.mxu0 0.0
    %1094 = vmatpush1.msra.mxu0 %v1054
    %1095 = vmatprep.subr.mxu0 0.0
    %1096 = vmatpush1.msra.mxu0 %v1055
    %1097 = vmatprep.subr.mxu0 0.0
    %1098 = vmatpush1.msra.mxu0 %v1056
    %1099 = vmatprep.subr.mxu0 0.0
    %1100 = vmatpush1.msra.mxu0 %v1057
    %1101 = vmatprep.subr.mxu0 0.0
    %1102 = vmatpush1.msra.mxu0 0.0
    %1103 = vmatprep.subr.mxu0 0.0
    %1104 = vmatpush1.msra.mxu0 0.0
    %1105 = vmatprep.subr.mxu0 0.0
    %1106 = vmatpush1.msra.mxu0 0.0
    %1107 = vmatprep.subr.mxu0 0.0
    %1108 = vmatpush1.msra.mxu0 0.0
    %1109 = vmatprep.subr.mxu0 0.0
    %1110 = vmatpush1.msra.mxu0 0.0
    %1111 = vmatprep.subr.mxu0 0.0
    %1112 = vmatpush1.msra.mxu0 0.0
    %1113 = vmatprep.subr.mxu0 0.0
    %1114 = vmatpush1.msra.mxu0 0.0
    %1115 = vmatprep.subr.mxu0 0.0
    %1116 = vmatpush1.msra.mxu0 0.0
    %1117 = vmatprep.subr.mxu0 0.0
    %1118 = vmatpush1.msra.mxu0 0.0
    %1119 = vmatprep.subr.mxu0 0.0
    %1120 = vmatpush1.msra.mxu0 0.0
    %1121 = vmatprep.subr.mxu0 0.0
    %1122 = vmatpush1.msra.mxu0 0.0
    %1123 = vmatprep.subr.mxu0 0.0
    %1124 = vmatpush1.msra.mxu0 0.0
    %1125 = vmatprep.subr.mxu0 0.0
    %1126 = vmatpush1.msra.mxu0 0.0
    %1127 = vmatprep.subr.mxu0 0.0
    %1128 = vmatpush1.msra.mxu0 0.0
    %1129 = vmatprep.subr.mxu0 0.0
    %1130 = vmatpush1.msra.mxu0 0.0
    %1131 = vmatprep.subr.mxu0 0.0
    %1132 = vmatpush1.msra.mxu0 0.0
    %1133 = vmatprep.subr.mxu0 0.0
    %1134 = vmatpush1.msra.mxu0 0.0
    %1135 = vmatprep.subr.mxu0 0.0
    %1136 = vmatpush1.msra.mxu0 0.0
    %1137 = vmatprep.subr.mxu0 0.0
    %1138 = vmatpush1.msra.mxu0 0.0
    %1139 = vmatprep.subr.mxu0 0.0
    %1140 = vmatpush1.msra.mxu0 0.0
    %1141 = vmatprep.subr.mxu0 0.0
    %1142 = vmatpush1.msra.mxu0 0.0
    %1143 = vmatprep.subr.mxu0 0.0
    %1144 = vmatpush1.msra.mxu0 0.0
    %1145 = vmatprep.subr.mxu0 0.0
    %1146 = vmatpush1.msra.mxu0 0.0
    %1147 = vmatprep.subr.mxu0 0.0
    %1148 = vmatpush1.msra.mxu0 0.0
    %1149 = vmatprep.subr.mxu0 0.0
    %1150 = vmatpush1.msra.mxu0 0.0
    %1151 = vmatprep.subr.mxu0 0.0
    %1152 = vmatpush1.msra.mxu0 0.0
    %1153 = vmatprep.subr.mxu0 0.0
    %1154 = vmatpush1.msra.mxu0 0.0
    %1155 = vmatprep.subr.mxu0 0.0
    %1156 = vmatpush1.msra.mxu0 0.0
    %1157 = vmatprep.mubr.f32.mxu0 0.0
    %1158 = vmatmul.mubr.f32.gmra.mrb[0].mxu0 %v1070
    %v1159 = vpop.f32.mrb[0].mxu0
    %v1160 = vadd.f32 %v1067, %v1159
    %v1161 = vpop.f32.mrb[0].mxu0
    %1162 = vmatprep.mubr.f32.mxu0 0.0
    %1163 = vmatmul.mubr.f32.gmra.mrb[0].mxu0 %v1073
    %v1164 = vpop.f32.mrb[0].mxu0
    %v1165 = vadd.f32 %v1067, %v1164
    %v1166 = vpop.f32.mrb[0].mxu0
    %1167 = vmatprep.mubr.f32.mxu0 0.0
    %1168 = vmatmul.mubr.f32.gmra.mrb[0].mxu0 %v1076
    %v1169 = vpop.f32.mrb[0].mxu0
    %v1170 = vadd.f32 %v1067, %v1169
    %v1171 = vpop.f32.mrb[0].mxu0
    %1172 = vmatprep.mubr.f32.mxu0 0.0
    %1173 = vmatmul.mubr.f32.gmra.mrb[0].mxu0 %v1079
    %v1174 = vpop.f32.mrb[0].mxu0
    %v1175 = vadd.f32 %v1067, %v1174
    %v1176 = vpop.f32.mrb[0].mxu0
    %1177 = vmatprep.mubr.f32.mxu0 0.0
    %1178 = vmatmul.mubr.f32.gmra.mrb[0].mxu0 %v1082
    %v1179 = vpop.f32.mrb[0].mxu0
    %v1180 = vadd.f32 %v1067, %v1179
    %v1181 = vpop.f32.mrb[0].mxu0
    %1182 = vmatprep.mubr.f32.mxu0 0.0
    %1183 = vmatmul.mubr.f32.gmra.mrb[0].mxu0 %v1085
    %v1184 = vpop.f32.mrb[0].mxu0
    %v1185 = vadd.f32 %v1067, %v1184
    %v1186 = vpop.f32.mrb[0].mxu0
    %1187 = vmatprep.mubr.f32.mxu0 0.0
    %1188 = vmatmul.mubr.f32.gmra.mrb[0].mxu0 %v1088
    %v1189 = vpop.f32.mrb[0].mxu0
    %v1190 = vadd.f32 %v1067, %v1189
    %v1191 = vpop.f32.mrb[0].mxu0
    %1192 = vmatprep.mubr.f32.mxu0 0.0
    %1193 = vmatmul.mubr.f32.gmra.mrb[0].mxu0 %v1091
    %v1194 = vpop.f32.mrb[0].mxu0
    %v1195 = vadd.f32 %v1067, %v1194
    %v1196 = vpop.f32.mrb[0].mxu0
    %1197 = vdwg.mxu0
    %1198 = vmatprep.subr.mxu0 0.0
    %1199 = vmatpush1.msra.mxu0 %v1058
    %1200 = vmatprep.subr.mxu0 0.0
    %1201 = vmatpush1.msra.mxu0 %v1059
    %1202 = vmatprep.subr.mxu0 0.0
    %1203 = vmatpush1.msra.mxu0 %v1060
    %1204 = vmatprep.subr.mxu0 0.0
    %1205 = vmatpush1.msra.mxu0 %v1061
    %1206 = vmatprep.subr.mxu0 0.0
    %1207 = vmatpush1.msra.mxu0 0.0
    %1208 = vmatprep.subr.mxu0 0.0
    %1209 = vmatpush1.msra.mxu0 0.0
    %1210 = vmatprep.subr.mxu0 0.0
    %1211 = vmatpush1.msra.mxu0 0.0
    %1212 = vmatprep.subr.mxu0 0.0
    %1213 = vmatpush1.msra.mxu0 0.0
    %1214 = vmatprep.subr.mxu0 0.0
    %1215 = vmatpush1.msra.mxu0 0.0
    %1216 = vmatprep.subr.mxu0 0.0
    %1217 = vmatpush1.msra.mxu0 0.0
    %1218 = vmatprep.subr.mxu0 0.0
    %1219 = vmatpush1.msra.mxu0 0.0
    %1220 = vmatprep.subr.mxu0 0.0
    %1221 = vmatpush1.msra.mxu0 0.0
    %1222 = vmatprep.subr.mxu0 0.0
    %1223 = vmatpush1.msra.mxu0 0.0
    %1224 = vmatprep.subr.mxu0 0.0
    %1225 = vmatpush1.msra.mxu0 0.0
    %1226 = vmatprep.subr.mxu0 0.0
    %1227 = vmatpush1.msra.mxu0 0.0
    %1228 = vmatprep.subr.mxu0 0.0
    %1229 = vmatpush1.msra.mxu0 0.0
    %1230 = vmatprep.subr.mxu0 0.0
    %1231 = vmatpush1.msra.mxu0 0.0
    %1232 = vmatprep.subr.mxu0 0.0
    %1233 = vmatpush1.msra.mxu0 0.0
    %1234 = vmatprep.subr.mxu0 0.0
    %1235 = vmatpush1.msra.mxu0 0.0
    %1236 = vmatprep.subr.mxu0 0.0
    %1237 = vmatpush1.msra.mxu0 0.0
    %1238 = vmatprep.subr.mxu0 0.0
    %1239 = vmatpush1.msra.mxu0 0.0
    %1240 = vmatprep.subr.mxu0 0.0
    %1241 = vmatpush1.msra.mxu0 0.0
    %1242 = vmatprep.subr.mxu0 0.0
    %1243 = vmatpush1.msra.mxu0 0.0
    %1244 = vmatprep.subr.mxu0 0.0
    %1245 = vmatpush1.msra.mxu0 0.0
    %1246 = vmatprep.subr.mxu0 0.0
    %1247 = vmatpush1.msra.mxu0 0.0
    %1248 = vmatprep.subr.mxu0 0.0
    %1249 = vmatpush1.msra.mxu0 0.0
    %1250 = vmatprep.subr.mxu0 0.0
    %1251 = vmatpush1.msra.mxu0 0.0
    %1252 = vmatprep.subr.mxu0 0.0
    %1253 = vmatpush1.msra.mxu0 0.0
    %1254 = vmatprep.subr.mxu0 0.0
    %1255 = vmatpush1.msra.mxu0 0.0
    %1256 = vmatprep.subr.mxu0 0.0
    %1257 = vmatpush1.msra.mxu0 0.0
    %1258 = vmatprep.subr.mxu0 0.0
    %1259 = vmatpush1.msra.mxu0 0.0
    %1260 = vmatprep.subr.mxu0 0.0
    %1261 = vmatpush1.msra.mxu0 0.0
    %1262 = vmatprep.mubr.f32.mxu0 0.0
    %1263 = vmatmul.mubr.f32.gmra.mrb[0].mxu0 %v230
    %v1264 = vpop.f32.mrb[0].mxu0
    %v1265 = vadd.f32 0.0, %v1264
    %v1266 = vpop.f32.mrb[0].mxu0
    %1267 = vdwg.mxu0
    %v1268 = vadd.f32 %v1160, %v1265
    %v1269 = vxor.u32 %v1268, 2147483648
    %v1270 = vmul.f32 %v1269, 1.442695
    %v1271 = vpow.pop %v1270
    %v1272 = vadd.f32 %v1271, 1.0
    %v1273 = vrcp.pop %v1272
    %v1274 = vmul.f32 1.0, %v1273
    %v1275 = vtanh.pop %v1268
    %v1276 = vmul.f32 %v1274, 0.0
    %1278 = vrot.lane.b32.xlu0 %v1275, 32
    %v1279 = vpop.permute.xlu0 %1278
    %v1281 = vmul.f32 %v1274, %v1279
    %1283 = vrot.lane.b32.xlu0 %v1281, 32
    %v1284 = vpop.permute.xlu0 %1283
    %v1286 = vadd.f32 %v1276, %v1284
    %v1287 = vtanh.pop %v1286
    %1289 = vrot.lane.b32.xlu0 %v1287, 32
    %v1290 = vpop.permute.xlu0 %1289
    %v1292 = vmul.f32 %v1274, %v1290
    %1294 = vrot.lane.b32.xlu0 %v1292, 64
    %v1295 = vpop.permute.xlu0 %1294
    %v1296 = vsel %vm228, %v1295, 0
    %1298 = vmatprep.subr.mxu0 0.0
    %1299 = vmatpush1.msra.mxu0 %v1058
    %1300 = vmatprep.subr.mxu0 0.0
    %1301 = vmatpush1.msra.mxu0 %v1059
    %1302 = vmatprep.subr.mxu0 0.0
    %1303 = vmatpush1.msra.mxu0 %v1060
    %1304 = vmatprep.subr.mxu0 0.0
    %1305 = vmatpush1.msra.mxu0 %v1061
    %1306 = vmatprep.subr.mxu0 0.0
    %1307 = vmatpush1.msra.mxu0 0.0
    %1308 = vmatprep.subr.mxu0 0.0
    %1309 = vmatpush1.msra.mxu0 0.0
    %1310 = vmatprep.subr.mxu0 0.0
    %1311 = vmatpush1.msra.mxu0 0.0
    %1312 = vmatprep.subr.mxu0 0.0
    %1313 = vmatpush1.msra.mxu0 0.0
    %1314 = vmatprep.subr.mxu0 0.0
    %1315 = vmatpush1.msra.mxu0 0.0
    %1316 = vmatprep.subr.mxu0 0.0
    %1317 = vmatpush1.msra.mxu0 0.0
    %1318 = vmatprep.subr.mxu0 0.0
    %1319 = vmatpush1.msra.mxu0 0.0
    %1320 = vmatprep.subr.mxu0 0.0
    %1321 = vmatpush1.msra.mxu0 0.0
    %1322 = vmatprep.subr.mxu0 0.0
    %1323 = vmatpush1.msra.mxu0 0.0
    %1324 = vmatprep.subr.mxu0 0.0
    %1325 = vmatpush1.msra.mxu0 0.0
    %1326 = vmatprep.subr.mxu0 0.0
    %1327 = vmatpush1.msra.mxu0 0.0
    %1328 = vmatprep.subr.mxu0 0.0
    %1329 = vmatpush1.msra.mxu0 0.0
    %1330 = vmatprep.subr.mxu0 0.0
    %1331 = vmatpush1.msra.mxu0 0.0
    %1332 = vmatprep.subr.mxu0 0.0
    %1333 = vmatpush1.msra.mxu0 0.0
    %1334 = vmatprep.subr.mxu0 0.0
    %1335 = vmatpush1.msra.mxu0 0.0
    %1336 = vmatprep.subr.mxu0 0.0
    %1337 = vmatpush1.msra.mxu0 0.0
    %1338 = vmatprep.subr.mxu0 0.0
    %1339 = vmatpush1.msra.mxu0 0.0
    %1340 = vmatprep.subr.mxu0 0.0
    %1341 = vmatpush1.msra.mxu0 0.0
    %1342 = vmatprep.subr.mxu0 0.0
    %1343 = vmatpush1.msra.mxu0 0.0
    %1344 = vmatprep.subr.mxu0 0.0
    %1345 = vmatpush1.msra.mxu0 0.0
    %1346 = vmatprep.subr.mxu0 0.0
    %1347 = vmatpush1.msra.mxu0 0.0
    %1348 = vmatprep.subr.mxu0 0.0
    %1349 = vmatpush1.msra.mxu0 0.0
    %1350 = vmatprep.subr.mxu0 0.0
    %1351 = vmatpush1.msra.mxu0 0.0
    %1352 = vmatprep.subr.mxu0 0.0
    %1353 = vmatpush1.msra.mxu0 0.0
    %1354 = vmatprep.subr.mxu0 0.0
    %1355 = vmatpush1.msra.mxu0 0.0
    %1356 = vmatprep.subr.mxu0 0.0
    %1357 = vmatpush1.msra.mxu0 0.0
    %1358 = vmatprep.subr.mxu0 0.0
    %1359 = vmatpush1.msra.mxu0 0.0
    %1360 = vmatprep.subr.mxu0 0.0
    %1361 = vmatpush1.msra.mxu0 0.0
    %1362 = vmatprep.mubr.f32.mxu0 0.0
    %1363 = vmatmul.mubr.f32.gmra.mrb[0].mxu0 %v1296
    %v1364 = vpop.f32.mrb[0].mxu0
    %v1365 = vadd.f32 0.0, %v1364
    %v1366 = vpop.f32.mrb[0].mxu0
    %1367 = vdwg.mxu0
    %v1368 = vadd.f32 %v1165, %v1365
    %v1369 = vxor.u32 %v1368, 2147483648
    %v1370 = vmul.f32 %v1369, 1.442695
    %v1371 = vpow.pop %v1370
    %v1372 = vadd.f32 %v1371, 1.0
    %v1373 = vrcp.pop %v1372
    %v1374 = vmul.f32 1.0, %v1373
    %v1375 = vtanh.pop %v1368
    %v1376 = vmul.f32 %v1374, %v1286
    %1378 = vrot.lane.b32.xlu0 %v1375, 32
    %v1379 = vpop.permute.xlu0 %1378
    %v1381 = vmul.f32 %v1374, %v1379
    %1383 = vrot.lane.b32.xlu0 %v1381, 32
    %v1384 = vpop.permute.xlu0 %1383
    %v1386 = vadd.f32 %v1376, %v1384
    %v1387 = vtanh.pop %v1386
    %1389 = vrot.lane.b32.xlu0 %v1387, 32
    %v1390 = vpop.permute.xlu0 %1389
    %v1392 = vmul.f32 %v1374, %v1390
    %1394 = vrot.lane.b32.xlu0 %v1392, 64
    %v1395 = vpop.permute.xlu0 %1394
    %v1396 = vsel %vm228, %v1395, 0
    %1398 = vmatprep.subr.mxu0 0.0
    %1399 = vmatpush1.msra.mxu0 %v1058
    %1400 = vmatprep.subr.mxu0 0.0
    %1401 = vmatpush1.msra.mxu0 %v1059
    %1402 = vmatprep.subr.mxu0 0.0
    %1403 = vmatpush1.msra.mxu0 %v1060
    %1404 = vmatprep.subr.mxu0 0.0
    %1405 = vmatpush1.msra.mxu0 %v1061
    %1406 = vmatprep.subr.mxu0 0.0
    %1407 = vmatpush1.msra.mxu0 0.0
    %1408 = vmatprep.subr.mxu0 0.0
    %1409 = vmatpush1.msra.mxu0 0.0
    %1410 = vmatprep.subr.mxu0 0.0
    %1411 = vmatpush1.msra.mxu0 0.0
    %1412 = vmatprep.subr.mxu0 0.0
    %1413 = vmatpush1.msra.mxu0 0.0
    %1414 = vmatprep.subr.mxu0 0.0
    %1415 = vmatpush1.msra.mxu0 0.0
    %1416 = vmatprep.subr.mxu0 0.0
    %1417 = vmatpush1.msra.mxu0 0.0
    %1418 = vmatprep.subr.mxu0 0.0
    %1419 = vmatpush1.msra.mxu0 0.0
    %1420 = vmatprep.subr.mxu0 0.0
    %1421 = vmatpush1.msra.mxu0 0.0
    %1422 = vmatprep.subr.mxu0 0.0
    %1423 = vmatpush1.msra.mxu0 0.0
    %1424 = vmatprep.subr.mxu0 0.0
    %1425 = vmatpush1.msra.mxu0 0.0
    %1426 = vmatprep.subr.mxu0 0.0
    %1427 = vmatpush1.msra.mxu0 0.0
    %1428 = vmatprep.subr.mxu0 0.0
    %1429 = vmatpush1.msra.mxu0 0.0
    %1430 = vmatprep.subr.mxu0 0.0
    %1431 = vmatpush1.msra.mxu0 0.0
    %1432 = vmatprep.subr.mxu0 0.0
    %1433 = vmatpush1.msra.mxu0 0.0
    %1434 = vmatprep.subr.mxu0 0.0
    %1435 = vmatpush1.msra.mxu0 0.0
    %1436 = vmatprep.subr.mxu0 0.0
    %1437 = vmatpush1.msra.mxu0 0.0
    %1438 = vmatprep.subr.mxu0 0.0
    %1439 = vmatpush1.msra.mxu0 0.0
    %1440 = vmatprep.subr.mxu0 0.0
    %1441 = vmatpush1.msra.mxu0 0.0
    %1442 = vmatprep.subr.mxu0 0.0
    %1443 = vmatpush1.msra.mxu0 0.0
    %1444 = vmatprep.subr.mxu0 0.0
    %1445 = vmatpush1.msra.mxu0 0.0
    %1446 = vmatprep.subr.mxu0 0.0
    %1447 = vmatpush1.msra.mxu0 0.0
    %1448 = vmatprep.subr.mxu0 0.0
    %1449 = vmatpush1.msra.mxu0 0.0
    %1450 = vmatprep.subr.mxu0 0.0
    %1451 = vmatpush1.msra.mxu0 0.0
    %1452 = vmatprep.subr.mxu0 0.0
    %1453 = vmatpush1.msra.mxu0 0.0
    %1454 = vmatprep.subr.mxu0 0.0
    %1455 = vmatpush1.msra.mxu0 0.0
    %1456 = vmatprep.subr.mxu0 0.0
    %1457 = vmatpush1.msra.mxu0 0.0
    %1458 = vmatprep.subr.mxu0 0.0
    %1459 = vmatpush1.msra.mxu0 0.0
    %1460 = vmatprep.subr.mxu0 0.0
    %1461 = vmatpush1.msra.mxu0 0.0
    %1462 = vmatprep.mubr.f32.mxu0 0.0
    %1463 = vmatmul.mubr.f32.gmra.mrb[0].mxu0 %v1396
    %v1464 = vpop.f32.mrb[0].mxu0
    %v1465 = vadd.f32 0.0, %v1464
    %v1466 = vpop.f32.mrb[0].mxu0
    %1467 = vdwg.mxu0
    %v1468 = vadd.f32 %v1170, %v1465
    %v1469 = vxor.u32 %v1468, 2147483648
    %v1470 = vmul.f32 %v1469, 1.442695
    %v1471 = vpow.pop %v1470
    %v1472 = vadd.f32 %v1471, 1.0
    %v1473 = vrcp.pop %v1472
    %v1474 = vmul.f32 1.0, %v1473
    %v1475 = vtanh.pop %v1468
    %v1476 = vmul.f32 %v1474, %v1386
    %1478 = vrot.lane.b32.xlu0 %v1475, 32
    %v1479 = vpop.permute.xlu0 %1478
    %v1481 = vmul.f32 %v1474, %v1479
    %1483 = vrot.lane.b32.xlu0 %v1481, 32
    %v1484 = vpop.permute.xlu0 %1483
    %v1486 = vadd.f32 %v1476, %v1484
    %v1487 = vtanh.pop %v1486
    %1489 = vrot.lane.b32.xlu0 %v1487, 32
    %v1490 = vpop.permute.xlu0 %1489
    %v1492 = vmul.f32 %v1474, %v1490
    %1494 = vrot.lane.b32.xlu0 %v1492, 64
    %v1495 = vpop.permute.xlu0 %1494
    %v1496 = vsel %vm228, %v1495, 0
    %1498 = vmatprep.subr.mxu0 0.0
    %1499 = vmatpush1.msra.mxu0 %v1058
    %1500 = vmatprep.subr.mxu0 0.0
    %1501 = vmatpush1.msra.mxu0 %v1059
    %1502 = vmatprep.subr.mxu0 0.0
    %1503 = vmatpush1.msra.mxu0 %v1060
    %1504 = vmatprep.subr.mxu0 0.0
    %1505 = vmatpush1.msra.mxu0 %v1061
    %1506 = vmatprep.subr.mxu0 0.0
    %1507 = vmatpush1.msra.mxu0 0.0
    %1508 = vmatprep.subr.mxu0 0.0
    %1509 = vmatpush1.msra.mxu0 0.0
    %1510 = vmatprep.subr.mxu0 0.0
    %1511 = vmatpush1.msra.mxu0 0.0
    %1512 = vmatprep.subr.mxu0 0.0
    %1513 = vmatpush1.msra.mxu0 0.0
    %1514 = vmatprep.subr.mxu0 0.0
    %1515 = vmatpush1.msra.mxu0 0.0
    %1516 = vmatprep.subr.mxu0 0.0
    %1517 = vmatpush1.msra.mxu0 0.0
    %1518 = vmatprep.subr.mxu0 0.0
    %1519 = vmatpush1.msra.mxu0 0.0
    %1520 = vmatprep.subr.mxu0 0.0
    %1521 = vmatpush1.msra.mxu0 0.0
    %1522 = vmatprep.subr.mxu0 0.0
    %1523 = vmatpush1.msra.mxu0 0.0
    %1524 = vmatprep.subr.mxu0 0.0
    %1525 = vmatpush1.msra.mxu0 0.0
    %1526 = vmatprep.subr.mxu0 0.0
    %1527 = vmatpush1.msra.mxu0 0.0
    %1528 = vmatprep.subr.mxu0 0.0
    %1529 = vmatpush1.msra.mxu0 0.0
    %1530 = vmatprep.subr.mxu0 0.0
    %1531 = vmatpush1.msra.mxu0 0.0
    %1532 = vmatprep.subr.mxu0 0.0
    %1533 = vmatpush1.msra.mxu0 0.0
    %1534 = vmatprep.subr.mxu0 0.0
    %1535 = vmatpush1.msra.mxu0 0.0
    %1536 = vmatprep.subr.mxu0 0.0
    %1537 = vmatpush1.msra.mxu0 0.0
    %1538 = vmatprep.subr.mxu0 0.0
    %1539 = vmatpush1.msra.mxu0 0.0
    %1540 = vmatprep.subr.mxu0 0.0
    %1541 = vmatpush1.msra.mxu0 0.0
    %1542 = vmatprep.subr.mxu0 0.0
    %1543 = vmatpush1.msra.mxu0 0.0
    %1544 = vmatprep.subr.mxu0 0.0
    %1545 = vmatpush1.msra.mxu0 0.0
    %1546 = vmatprep.subr.mxu0 0.0
    %1547 = vmatpush1.msra.mxu0 0.0
    %1548 = vmatprep.subr.mxu0 0.0
    %1549 = vmatpush1.msra.mxu0 0.0
    %1550 = vmatprep.subr.mxu0 0.0
    %1551 = vmatpush1.msra.mxu0 0.0
    %1552 = vmatprep.subr.mxu0 0.0
    %1553 = vmatpush1.msra.mxu0 0.0
    %1554 = vmatprep.subr.mxu0 0.0
    %1555 = vmatpush1.msra.mxu0 0.0
    %1556 = vmatprep.subr.mxu0 0.0
    %1557 = vmatpush1.msra.mxu0 0.0
    %1558 = vmatprep.subr.mxu0 0.0
    %1559 = vmatpush1.msra.mxu0 0.0
    %1560 = vmatprep.subr.mxu0 0.0
    %1561 = vmatpush1.msra.mxu0 0.0
    %1562 = vmatprep.mubr.f32.mxu0 0.0
    %1563 = vmatmul.mubr.f32.gmra.mrb[0].mxu0 %v1496
    %v1564 = vpop.f32.mrb[0].mxu0
    %v1565 = vadd.f32 0.0, %v1564
    %v1566 = vpop.f32.mrb[0].mxu0
    %1567 = vdwg.mxu0
    %v1568 = vadd.f32 %v1175, %v1565
    %v1569 = vxor.u32 %v1568, 2147483648
    %v1570 = vmul.f32 %v1569, 1.442695
    %v1571 = vpow.pop %v1570
    %v1572 = vadd.f32 %v1571, 1.0
    %v1573 = vrcp.pop %v1572
    %v1574 = vmul.f32 1.0, %v1573
    %v1575 = vtanh.pop %v1568
    %v1576 = vmul.f32 %v1574, %v1486
    %1578 = vrot.lane.b32.xlu0 %v1575, 32
    %v1579 = vpop.permute.xlu0 %1578
    %v1581 = vmul.f32 %v1574, %v1579
    %1583 = vrot.lane.b32.xlu0 %v1581, 32
    %v1584 = vpop.permute.xlu0 %1583
    %v1586 = vadd.f32 %v1576, %v1584
    %v1587 = vtanh.pop %v1586
    %1589 = vrot.lane.b32.xlu0 %v1587, 32
    %v1590 = vpop.permute.xlu0 %1589
    %v1592 = vmul.f32 %v1574, %v1590
    %1594 = vrot.lane.b32.xlu0 %v1592, 64
    %v1595 = vpop.permute.xlu0 %1594
    %v1596 = vsel %vm228, %v1595, 0
    %1598 = vmatprep.subr.mxu0 0.0
    %1599 = vmatpush1.msra.mxu0 %v1058
    %1600 = vmatprep.subr.mxu0 0.0
    %1601 = vmatpush1.msra.mxu0 %v1059
    %1602 = vmatprep.subr.mxu0 0.0
    %1603 = vmatpush1.msra.mxu0 %v1060
    %1604 = vmatprep.subr.mxu0 0.0
    %1605 = vmatpush1.msra.mxu0 %v1061
    %1606 = vmatprep.subr.mxu0 0.0
    %1607 = vmatpush1.msra.mxu0 0.0
    %1608 = vmatprep.subr.mxu0 0.0
    %1609 = vmatpush1.msra.mxu0 0.0
    %1610 = vmatprep.subr.mxu0 0.0
    %1611 = vmatpush1.msra.mxu0 0.0
    %1612 = vmatprep.subr.mxu0 0.0
    %1613 = vmatpush1.msra.mxu0 0.0
    %1614 = vmatprep.subr.mxu0 0.0
    %1615 = vmatpush1.msra.mxu0 0.0
    %1616 = vmatprep.subr.mxu0 0.0
    %1617 = vmatpush1.msra.mxu0 0.0
    %1618 = vmatprep.subr.mxu0 0.0
    %1619 = vmatpush1.msra.mxu0 0.0
    %1620 = vmatprep.subr.mxu0 0.0
    %1621 = vmatpush1.msra.mxu0 0.0
    %1622 = vmatprep.subr.mxu0 0.0
    %1623 = vmatpush1.msra.mxu0 0.0
    %1624 = vmatprep.subr.mxu0 0.0
    %1625 = vmatpush1.msra.mxu0 0.0
    %1626 = vmatprep.subr.mxu0 0.0
    %1627 = vmatpush1.msra.mxu0 0.0
    %1628 = vmatprep.subr.mxu0 0.0
    %1629 = vmatpush1.msra.mxu0 0.0
    %1630 = vmatprep.subr.mxu0 0.0
    %1631 = vmatpush1.msra.mxu0 0.0
    %1632 = vmatprep.subr.mxu0 0.0
    %1633 = vmatpush1.msra.mxu0 0.0
    %1634 = vmatprep.subr.mxu0 0.0
    %1635 = vmatpush1.msra.mxu0 0.0
    %1636 = vmatprep.subr.mxu0 0.0
    %1637 = vmatpush1.msra.mxu0 0.0
    %1638 = vmatprep.subr.mxu0 0.0
    %1639 = vmatpush1.msra.mxu0 0.0
    %1640 = vmatprep.subr.mxu0 0.0
    %1641 = vmatpush1.msra.mxu0 0.0
    %1642 = vmatprep.subr.mxu0 0.0
    %1643 = vmatpush1.msra.mxu0 0.0
    %1644 = vmatprep.subr.mxu0 0.0
    %1645 = vmatpush1.msra.mxu0 0.0
    %1646 = vmatprep.subr.mxu0 0.0
    %1647 = vmatpush1.msra.mxu0 0.0
    %1648 = vmatprep.subr.mxu0 0.0
    %1649 = vmatpush1.msra.mxu0 0.0
    %1650 = vmatprep.subr.mxu0 0.0
    %1651 = vmatpush1.msra.mxu0 0.0
    %1652 = vmatprep.subr.mxu0 0.0
    %1653 = vmatpush1.msra.mxu0 0.0
    %1654 = vmatprep.subr.mxu0 0.0
    %1655 = vmatpush1.msra.mxu0 0.0
    %1656 = vmatprep.subr.mxu0 0.0
    %1657 = vmatpush1.msra.mxu0 0.0
    %1658 = vmatprep.subr.mxu0 0.0
    %1659 = vmatpush1.msra.mxu0 0.0
    %1660 = vmatprep.subr.mxu0 0.0
    %1661 = vmatpush1.msra.mxu0 0.0
    %1662 = vmatprep.mubr.f32.mxu0 0.0
    %1663 = vmatmul.mubr.f32.gmra.mrb[0].mxu0 %v1596
    %v1664 = vpop.f32.mrb[0].mxu0
    %v1665 = vadd.f32 0.0, %v1664
    %v1666 = vpop.f32.mrb[0].mxu0
    %1667 = vdwg.mxu0
    %v1668 = vadd.f32 %v1180, %v1665
    %v1669 = vxor.u32 %v1668, 2147483648
    %v1670 = vmul.f32 %v1669, 1.442695
    %v1671 = vpow.pop %v1670
    %v1672 = vadd.f32 %v1671, 1.0
    %v1673 = vrcp.pop %v1672
    %v1674 = vmul.f32 1.0, %v1673
    %v1675 = vtanh.pop %v1668
    %v1676 = vmul.f32 %v1674, %v1586
    %1678 = vrot.lane.b32.xlu0 %v1675, 32
    %v1679 = vpop.permute.xlu0 %1678
    %v1681 = vmul.f32 %v1674, %v1679
    %1683 = vrot.lane.b32.xlu0 %v1681, 32
    %v1684 = vpop.permute.xlu0 %1683
    %v1686 = vadd.f32 %v1676, %v1684
    %v1687 = vtanh.pop %v1686
    %1689 = vrot.lane.b32.xlu0 %v1687, 32
    %v1690 = vpop.permute.xlu0 %1689
    %v1692 = vmul.f32 %v1674, %v1690
    %1694 = vrot.lane.b32.xlu0 %v1692, 64
    %v1695 = vpop.permute.xlu0 %1694
    %v1696 = vsel %vm228, %v1695, 0
    %1698 = vmatprep.subr.mxu0 0.0
    %1699 = vmatpush1.msra.mxu0 %v1058
    %1700 = vmatprep.subr.mxu0 0.0
    %1701 = vmatpush1.msra.mxu0 %v1059
    %1702 = vmatprep.subr.mxu0 0.0
    %1703 = vmatpush1.msra.mxu0 %v1060
    %1704 = vmatprep.subr.mxu0 0.0
    %1705 = vmatpush1.msra.mxu0 %v1061
    %1706 = vmatprep.subr.mxu0 0.0
    %1707 = vmatpush1.msra.mxu0 0.0
    %1708 = vmatprep.subr.mxu0 0.0
    %1709 = vmatpush1.msra.mxu0 0.0
    %1710 = vmatprep.subr.mxu0 0.0
    %1711 = vmatpush1.msra.mxu0 0.0
    %1712 = vmatprep.subr.mxu0 0.0
    %1713 = vmatpush1.msra.mxu0 0.0
    %1714 = vmatprep.subr.mxu0 0.0
    %1715 = vmatpush1.msra.mxu0 0.0
    %1716 = vmatprep.subr.mxu0 0.0
    %1717 = vmatpush1.msra.mxu0 0.0
    %1718 = vmatprep.subr.mxu0 0.0
    %1719 = vmatpush1.msra.mxu0 0.0
    %1720 = vmatprep.subr.mxu0 0.0
    %1721 = vmatpush1.msra.mxu0 0.0
    %1722 = vmatprep.subr.mxu0 0.0
    %1723 = vmatpush1.msra.mxu0 0.0
    %1724 = vmatprep.subr.mxu0 0.0
    %1725 = vmatpush1.msra.mxu0 0.0
    %1726 = vmatprep.subr.mxu0 0.0
    %1727 = vmatpush1.msra.mxu0 0.0
    %1728 = vmatprep.subr.mxu0 0.0
    %1729 = vmatpush1.msra.mxu0 0.0
    %1730 = vmatprep.subr.mxu0 0.0
    %1731 = vmatpush1.msra.mxu0 0.0
    %1732 = vmatprep.subr.mxu0 0.0
    %1733 = vmatpush1.msra.mxu0 0.0
    %1734 = vmatprep.subr.mxu0 0.0
    %1735 = vmatpush1.msra.mxu0 0.0
    %1736 = vmatprep.subr.mxu0 0.0
    %1737 = vmatpush1.msra.mxu0 0.0
    %1738 = vmatprep.subr.mxu0 0.0
    %1739 = vmatpush1.msra.mxu0 0.0
    %1740 = vmatprep.subr.mxu0 0.0
    %1741 = vmatpush1.msra.mxu0 0.0
    %1742 = vmatprep.subr.mxu0 0.0
    %1743 = vmatpush1.msra.mxu0 0.0
    %1744 = vmatprep.subr.mxu0 0.0
    %1745 = vmatpush1.msra.mxu0 0.0
    %1746 = vmatprep.subr.mxu0 0.0
    %1747 = vmatpush1.msra.mxu0 0.0
    %1748 = vmatprep.subr.mxu0 0.0
    %1749 = vmatpush1.msra.mxu0 0.0
    %1750 = vmatprep.subr.mxu0 0.0
    %1751 = vmatpush1.msra.mxu0 0.0
    %1752 = vmatprep.subr.mxu0 0.0
    %1753 = vmatpush1.msra.mxu0 0.0
    %1754 = vmatprep.subr.mxu0 0.0
    %1755 = vmatpush1.msra.mxu0 0.0
    %1756 = vmatprep.subr.mxu0 0.0
    %1757 = vmatpush1.msra.mxu0 0.0
    %1758 = vmatprep.subr.mxu0 0.0
    %1759 = vmatpush1.msra.mxu0 0.0
    %1760 = vmatprep.subr.mxu0 0.0
    %1761 = vmatpush1.msra.mxu0 0.0
    %1762 = vmatprep.mubr.f32.mxu0 0.0
    %1763 = vmatmul.mubr.f32.gmra.mrb[0].mxu0 %v1696
    %v1764 = vpop.f32.mrb[0].mxu0
    %v1765 = vadd.f32 0.0, %v1764
    %v1766 = vpop.f32.mrb[0].mxu0
    %1767 = vdwg.mxu0
    %v1768 = vadd.f32 %v1185, %v1765
    %v1769 = vxor.u32 %v1768, 2147483648
    %v1770 = vmul.f32 %v1769, 1.442695
    %v1771 = vpow.pop %v1770
    %v1772 = vadd.f32 %v1771, 1.0
    %v1773 = vrcp.pop %v1772
    %v1774 = vmul.f32 1.0, %v1773
    %v1775 = vtanh.pop %v1768
    %v1776 = vmul.f32 %v1774, %v1686
    %1778 = vrot.lane.b32.xlu0 %v1775, 32
    %v1779 = vpop.permute.xlu0 %1778
    %v1781 = vmul.f32 %v1774, %v1779
    %1783 = vrot.lane.b32.xlu0 %v1781, 32
    %v1784 = vpop.permute.xlu0 %1783
    %v1786 = vadd.f32 %v1776, %v1784
    %v1787 = vtanh.pop %v1786
    %1789 = vrot.lane.b32.xlu0 %v1787, 32
    %v1790 = vpop.permute.xlu0 %1789
    %v1792 = vmul.f32 %v1774, %v1790
    %1794 = vrot.lane.b32.xlu0 %v1792, 64
    %v1795 = vpop.permute.xlu0 %1794
    %v1796 = vsel %vm228, %v1795, 0
    %1798 = vmatprep.subr.mxu0 0.0
    %1799 = vmatpush1.msra.mxu0 %v1058
    %1800 = vmatprep.subr.mxu0 0.0
    %1801 = vmatpush1.msra.mxu0 %v1059
    %1802 = vmatprep.subr.mxu0 0.0
    %1803 = vmatpush1.msra.mxu0 %v1060
    %1804 = vmatprep.subr.mxu0 0.0
    %1805 = vmatpush1.msra.mxu0 %v1061
    %1806 = vmatprep.subr.mxu0 0.0
    %1807 = vmatpush1.msra.mxu0 0.0
    %1808 = vmatprep.subr.mxu0 0.0
    %1809 = vmatpush1.msra.mxu0 0.0
    %1810 = vmatprep.subr.mxu0 0.0
    %1811 = vmatpush1.msra.mxu0 0.0
    %1812 = vmatprep.subr.mxu0 0.0
    %1813 = vmatpush1.msra.mxu0 0.0
    %1814 = vmatprep.subr.mxu0 0.0
    %1815 = vmatpush1.msra.mxu0 0.0
    %1816 = vmatprep.subr.mxu0 0.0
    %1817 = vmatpush1.msra.mxu0 0.0
    %1818 = vmatprep.subr.mxu0 0.0
    %1819 = vmatpush1.msra.mxu0 0.0
    %1820 = vmatprep.subr.mxu0 0.0
    %1821 = vmatpush1.msra.mxu0 0.0
    %1822 = vmatprep.subr.mxu0 0.0
    %1823 = vmatpush1.msra.mxu0 0.0
    %1824 = vmatprep.subr.mxu0 0.0
    %1825 = vmatpush1.msra.mxu0 0.0
    %1826 = vmatprep.subr.mxu0 0.0
    %1827 = vmatpush1.msra.mxu0 0.0
    %1828 = vmatprep.subr.mxu0 0.0
    %1829 = vmatpush1.msra.mxu0 0.0
    %1830 = vmatprep.subr.mxu0 0.0
    %1831 = vmatpush1.msra.mxu0 0.0
    %1832 = vmatprep.subr.mxu0 0.0
    %1833 = vmatpush1.msra.mxu0 0.0
    %1834 = vmatprep.subr.mxu0 0.0
    %1835 = vmatpush1.msra.mxu0 0.0
    %1836 = vmatprep.subr.mxu0 0.0
    %1837 = vmatpush1.msra.mxu0 0.0
    %1838 = vmatprep.subr.mxu0 0.0
    %1839 = vmatpush1.msra.mxu0 0.0
    %1840 = vmatprep.subr.mxu0 0.0
    %1841 = vmatpush1.msra.mxu0 0.0
    %1842 = vmatprep.subr.mxu0 0.0
    %1843 = vmatpush1.msra.mxu0 0.0
    %1844 = vmatprep.subr.mxu0 0.0
    %1845 = vmatpush1.msra.mxu0 0.0
    %1846 = vmatprep.subr.mxu0 0.0
    %1847 = vmatpush1.msra.mxu0 0.0
    %1848 = vmatprep.subr.mxu0 0.0
    %1849 = vmatpush1.msra.mxu0 0.0
    %1850 = vmatprep.subr.mxu0 0.0
    %1851 = vmatpush1.msra.mxu0 0.0
    %1852 = vmatprep.subr.mxu0 0.0
    %1853 = vmatpush1.msra.mxu0 0.0
    %1854 = vmatprep.subr.mxu0 0.0
    %1855 = vmatpush1.msra.mxu0 0.0
    %1856 = vmatprep.subr.mxu0 0.0
    %1857 = vmatpush1.msra.mxu0 0.0
    %1858 = vmatprep.subr.mxu0 0.0
    %1859 = vmatpush1.msra.mxu0 0.0
    %1860 = vmatprep.subr.mxu0 0.0
    %1861 = vmatpush1.msra.mxu0 0.0
    %1862 = vmatprep.mubr.f32.mxu0 0.0
    %1863 = vmatmul.mubr.f32.gmra.mrb[0].mxu0 %v1796
    %v1864 = vpop.f32.mrb[0].mxu0
    %v1865 = vadd.f32 0.0, %v1864
    %v1866 = vpop.f32.mrb[0].mxu0
    %1867 = vdwg.mxu0
    %v1868 = vadd.f32 %v1190, %v1865
    %v1869 = vxor.u32 %v1868, 2147483648
    %v1870 = vmul.f32 %v1869, 1.442695
    %v1871 = vpow.pop %v1870
    %v1872 = vadd.f32 %v1871, 1.0
    %v1873 = vrcp.pop %v1872
    %v1874 = vmul.f32 1.0, %v1873
    %v1875 = vtanh.pop %v1868
    %v1876 = vmul.f32 %v1874, %v1786
    %1878 = vrot.lane.b32.xlu0 %v1875, 32
    %v1879 = vpop.permute.xlu0 %1878
    %v1881 = vmul.f32 %v1874, %v1879
    %1883 = vrot.lane.b32.xlu0 %v1881, 32
    %v1884 = vpop.permute.xlu0 %1883
    %v1886 = vadd.f32 %v1876, %v1884
    %v1887 = vtanh.pop %v1886
    %1889 = vrot.lane.b32.xlu0 %v1887, 32
    %v1890 = vpop.permute.xlu0 %1889
    %v1892 = vmul.f32 %v1874, %v1890
    %1894 = vrot.lane.b32.xlu0 %v1892, 64
    %v1895 = vpop.permute.xlu0 %1894
    %v1896 = vsel %vm228, %v1895, 0
    %1898 = vmatprep.subr.mxu0 0.0
    %1899 = vmatpush1.msra.mxu0 %v1058
    %1900 = vmatprep.subr.mxu0 0.0
    %1901 = vmatpush1.msra.mxu0 %v1059
    %1902 = vmatprep.subr.mxu0 0.0
    %1903 = vmatpush1.msra.mxu0 %v1060
    %1904 = vmatprep.subr.mxu0 0.0
    %1905 = vmatpush1.msra.mxu0 %v1061
    %1906 = vmatprep.subr.mxu0 0.0
    %1907 = vmatpush1.msra.mxu0 0.0
    %1908 = vmatprep.subr.mxu0 0.0
    %1909 = vmatpush1.msra.mxu0 0.0
    %1910 = vmatprep.subr.mxu0 0.0
    %1911 = vmatpush1.msra.mxu0 0.0
    %1912 = vmatprep.subr.mxu0 0.0
    %1913 = vmatpush1.msra.mxu0 0.0
    %1914 = vmatprep.subr.mxu0 0.0
    %1915 = vmatpush1.msra.mxu0 0.0
    %1916 = vmatprep.subr.mxu0 0.0
    %1917 = vmatpush1.msra.mxu0 0.0
    %1918 = vmatprep.subr.mxu0 0.0
    %1919 = vmatpush1.msra.mxu0 0.0
    %1920 = vmatprep.subr.mxu0 0.0
    %1921 = vmatpush1.msra.mxu0 0.0
    %1922 = vmatprep.subr.mxu0 0.0
    %1923 = vmatpush1.msra.mxu0 0.0
    %1924 = vmatprep.subr.mxu0 0.0
    %1925 = vmatpush1.msra.mxu0 0.0
    %1926 = vmatprep.subr.mxu0 0.0
    %1927 = vmatpush1.msra.mxu0 0.0
    %1928 = vmatprep.subr.mxu0 0.0
    %1929 = vmatpush1.msra.mxu0 0.0
    %1930 = vmatprep.subr.mxu0 0.0
    %1931 = vmatpush1.msra.mxu0 0.0
    %1932 = vmatprep.subr.mxu0 0.0
    %1933 = vmatpush1.msra.mxu0 0.0
    %1934 = vmatprep.subr.mxu0 0.0
    %1935 = vmatpush1.msra.mxu0 0.0
    %1936 = vmatprep.subr.mxu0 0.0
    %1937 = vmatpush1.msra.mxu0 0.0
    %1938 = vmatprep.subr.mxu0 0.0
    %1939 = vmatpush1.msra.mxu0 0.0
    %1940 = vmatprep.subr.mxu0 0.0
    %1941 = vmatpush1.msra.mxu0 0.0
    %1942 = vmatprep.subr.mxu0 0.0
    %1943 = vmatpush1.msra.mxu0 0.0
    %1944 = vmatprep.subr.mxu0 0.0
    %1945 = vmatpush1.msra.mxu0 0.0
    %1946 = vmatprep.subr.mxu0 0.0
    %1947 = vmatpush1.msra.mxu0 0.0
    %1948 = vmatprep.subr.mxu0 0.0
    %1949 = vmatpush1.msra.mxu0 0.0
    %1950 = vmatprep.subr.mxu0 0.0
    %1951 = vmatpush1.msra.mxu0 0.0
    %1952 = vmatprep.subr.mxu0 0.0
    %1953 = vmatpush1.msra.mxu0 0.0
    %1954 = vmatprep.subr.mxu0 0.0
    %1955 = vmatpush1.msra.mxu0 0.0
    %1956 = vmatprep.subr.mxu0 0.0
    %1957 = vmatpush1.msra.mxu0 0.0
    %1958 = vmatprep.subr.mxu0 0.0
    %1959 = vmatpush1.msra.mxu0 0.0
    %1960 = vmatprep.subr.mxu0 0.0
    %1961 = vmatpush1.msra.mxu0 0.0
    %1962 = vmatprep.mubr.f32.mxu0 0.0
    %1963 = vmatmul.mubr.f32.gmra.mrb[0].mxu0 %v1896
    %v1964 = vpop.f32.mrb[0].mxu0
    %v1965 = vadd.f32 0.0, %v1964
    %v1966 = vpop.f32.mrb[0].mxu0
    %1967 = vdwg.mxu0
    %v1968 = vadd.f32 %v1195, %v1965
    %v1969 = vxor.u32 %v1968, 2147483648
    %v1970 = vmul.f32 %v1969, 1.442695
    %v1971 = vpow.pop %v1970
    %v1972 = vadd.f32 %v1971, 1.0
    %v1973 = vrcp.pop %v1972
    %v1974 = vmul.f32 1.0, %v1973
    %v1975 = vtanh.pop %v1968
    %v1976 = vmul.f32 %v1974, %v1886
    %1978 = vrot.lane.b32.xlu0 %v1975, 32
    %v1979 = vpop.permute.xlu0 %1978
    %v1981 = vmul.f32 %v1974, %v1979
    %1983 = vrot.lane.b32.xlu0 %v1981, 32
    %v1984 = vpop.permute.xlu0 %1983
    %v1986 = vadd.f32 %v1976, %v1984
    %v1987 = vtanh.pop %v1986
    %1989 = vrot.lane.b32.xlu0 %v1987, 32
    %v1990 = vpop.permute.xlu0 %1989
    %v1992 = vmul.f32 %v1974, %v1990
    %v1993 = vld [vmem:[%s13] sm:$0xff]
    %v1994 = vld [vmem:[%s13 + $0x8] sm:$0xff]
    %v1995 = vld [vmem:[%s13 + $0x10] sm:$0xff]
    %v1996 = vld [vmem:[%s13 + $0x18] sm:$0xff]
    %v1997 = vld [vmem:[%s14] sm:$0x1]
    %v1999 = vlaneseq
    %v2000 = vshrl.u32 %v1999, 7
    %v2001 = vsub.s32 0, %v2000
    %v2002 = vrot.slane %v1997, %v2001
    %2005 = vrot.lane.b32.xlu0 %v1992, 64
    %v2006 = vpop.permute.xlu0 %2005
    %v2007 = vsel %vm228, %v2006, 0
    %2009 = vmatprep.subr.mxu0 0.0
    %2010 = vmatpush1.msra.mxu0 %v1993
    %2011 = vmatprep.subr.mxu0 0.0
    %2012 = vmatpush1.msra.mxu0 %v1994
    %2013 = vmatprep.subr.mxu0 0.0
    %2014 = vmatpush1.msra.mxu0 %v1995
    %2015 = vmatprep.subr.mxu0 0.0
    %2016 = vmatpush1.msra.mxu0 %v1996
    %2017 = vmatprep.subr.mxu0 0.0
    %2018 = vmatpush1.msra.mxu0 0.0
    %2019 = vmatprep.subr.mxu0 0.0
    %2020 = vmatpush1.msra.mxu0 0.0
    %2021 = vmatprep.subr.mxu0 0.0
    %2022 = vmatpush1.msra.mxu0 0.0
    %2023 = vmatprep.subr.mxu0 0.0
    %2024 = vmatpush1.msra.mxu0 0.0
    %2025 = vmatprep.subr.mxu0 0.0
    %2026 = vmatpush1.msra.mxu0 0.0
    %2027 = vmatprep.subr.mxu0 0.0
    %2028 = vmatpush1.msra.mxu0 0.0
    %2029 = vmatprep.subr.mxu0 0.0
    %2030 = vmatpush1.msra.mxu0 0.0
    %2031 = vmatprep.subr.mxu0 0.0
    %2032 = vmatpush1.msra.mxu0 0.0
    %2033 = vmatprep.subr.mxu0 0.0
    %2034 = vmatpush1.msra.mxu0 0.0
    %2035 = vmatprep.subr.mxu0 0.0
    %2036 = vmatpush1.msra.mxu0 0.0
    %2037 = vmatprep.subr.mxu0 0.0
    %2038 = vmatpush1.msra.mxu0 0.0
    %2039 = vmatprep.subr.mxu0 0.0
    %2040 = vmatpush1.msra.mxu0 0.0
    %2041 = vmatprep.subr.mxu0 0.0
    %2042 = vmatpush1.msra.mxu0 0.0
    %2043 = vmatprep.subr.mxu0 0.0
    %2044 = vmatpush1.msra.mxu0 0.0
    %2045 = vmatprep.subr.mxu0 0.0
    %2046 = vmatpush1.msra.mxu0 0.0
    %2047 = vmatprep.subr.mxu0 0.0
    %2048 = vmatpush1.msra.mxu0 0.0
    %2049 = vmatprep.subr.mxu0 0.0
    %2050 = vmatpush1.msra.mxu0 0.0
    %2051 = vmatprep.subr.mxu0 0.0
    %2052 = vmatpush1.msra.mxu0 0.0
    %2053 = vmatprep.subr.mxu0 0.0
    %2054 = vmatpush1.msra.mxu0 0.0
    %2055 = vmatprep.subr.mxu0 0.0
    %2056 = vmatpush1.msra.mxu0 0.0
    %2057 = vmatprep.subr.mxu0 0.0
    %2058 = vmatpush1.msra.mxu0 0.0
    %2059 = vmatprep.subr.mxu0 0.0
    %2060 = vmatpush1.msra.mxu0 0.0
    %2061 = vmatprep.subr.mxu0 0.0
    %2062 = vmatpush1.msra.mxu0 0.0
    %2063 = vmatprep.subr.mxu0 0.0
    %2064 = vmatpush1.msra.mxu0 0.0
    %2065 = vmatprep.subr.mxu0 0.0
    %2066 = vmatpush1.msra.mxu0 0.0
    %2067 = vmatprep.subr.mxu0 0.0
    %2068 = vmatpush1.msra.mxu0 0.0
    %2069 = vmatprep.subr.mxu0 0.0
    %2070 = vmatpush1.msra.mxu0 0.0
    %2071 = vmatprep.subr.mxu0 0.0
    %2072 = vmatpush1.msra.mxu0 0.0
    %2073 = vmatprep.mubr.f32.mxu0 0.0
    %2074 = vmatmul.mubr.f32.gmra.mrb[0].mxu0 %v2007
    %v2075 = vpop.f32.mrb[0].mxu0
    %v2076 = vadd.f32 %v2002, %v2075
    %v2077 = vpop.f32.mrb[0].mxu0
    %2078 = vdwg.mxu0
    %v2079 = vld [vmem:[%s15] sm:$0xff]
    %v2080 = vld [vmem:[%s15 + $0x8] sm:$0xff]
    %v2081 = vld [vmem:[%s16] sm:$0x1]
    %v2083 = vlaneseq
    %v2084 = vshrl.u32 %v2083, 7
    %v2085 = vsub.s32 0, %v2084
    %v2086 = vrot.slane %v2081, %v2085
    %vm2088 = vcmask 130048
    %v2090 = vsel %vm2088, %v2076, 0
    %2092 = vmatprep.subr.mxu0 0.0
    %2093 = vmatpush1.msra.mxu0 %v2079
    %2094 = vmatprep.subr.mxu0 0.0
    %2095 = vmatpush1.msra.mxu0 %v2080
    %2096 = vmatprep.subr.mxu0 0.0
    %2097 = vmatpush1.msra.mxu0 0.0
    %2098 = vmatprep.subr.mxu0 0.0
    %2099 = vmatpush1.msra.mxu0 0.0
    %2100 = vmatprep.subr.mxu0 0.0
    %2101 = vmatpush1.msra.mxu0 0.0
    %2102 = vmatprep.subr.mxu0 0.0
    %2103 = vmatpush1.msra.mxu0 0.0
    %2104 = vmatprep.subr.mxu0 0.0
    %2105 = vmatpush1.msra.mxu0 0.0
    %2106 = vmatprep.subr.mxu0 0.0
    %2107 = vmatpush1.msra.mxu0 0.0
    %2108 = vmatprep.subr.mxu0 0.0
    %2109 = vmatpush1.msra.mxu0 0.0
    %2110 = vmatprep.subr.mxu0 0.0
    %2111 = vmatpush1.msra.mxu0 0.0
    %2112 = vmatprep.subr.mxu0 0.0
    %2113 = vmatpush1.msra.mxu0 0.0
    %2114 = vmatprep.subr.mxu0 0.0
    %2115 = vmatpush1.msra.mxu0 0.0
    %2116 = vmatprep.subr.mxu0 0.0
    %2117 = vmatpush1.msra.mxu0 0.0
    %2118 = vmatprep.subr.mxu0 0.0
    %2119 = vmatpush1.msra.mxu0 0.0
    %2120 = vmatprep.subr.mxu0 0.0
    %2121 = vmatpush1.msra.mxu0 0.0
    %2122 = vmatprep.subr.mxu0 0.0
    %2123 = vmatpush1.msra.mxu0 0.0
    %2124 = vmatprep.subr.mxu0 0.0
    %2125 = vmatpush1.msra.mxu0 0.0
    %2126 = vmatprep.subr.mxu0 0.0
    %2127 = vmatpush1.msra.mxu0 0.0
    %2128 = vmatprep.subr.mxu0 0.0
    %2129 = vmatpush1.msra.mxu0 0.0
    %2130 = vmatprep.subr.mxu0 0.0
    %2131 = vmatpush1.msra.mxu0 0.0
    %2132 = vmatprep.subr.mxu0 0.0
    %2133 = vmatpush1.msra.mxu0 0.0
    %2134 = vmatprep.subr.mxu0 0.0
    %2135 = vmatpush1.msra.mxu0 0.0
    %2136 = vmatprep.subr.mxu0 0.0
    %2137 = vmatpush1.msra.mxu0 0.0
    %2138 = vmatprep.subr.mxu0 0.0
    %2139 = vmatpush1.msra.mxu0 0.0
    %2140 = vmatprep.subr.mxu0 0.0
    %2141 = vmatpush1.msra.mxu0 0.0
    %2142 = vmatprep.subr.mxu0 0.0
    %2143 = vmatpush1.msra.mxu0 0.0
    %2144 = vmatprep.subr.mxu0 0.0
    %2145 = vmatpush1.msra.mxu0 0.0
    %2146 = vmatprep.subr.mxu0 0.0
    %2147 = vmatpush1.msra.mxu0 0.0
    %2148 = vmatprep.subr.mxu0 0.0
    %2149 = vmatpush1.msra.mxu0 0.0
    %2150 = vmatprep.subr.mxu0 0.0
    %2151 = vmatpush1.msra.mxu0 0.0
    %2152 = vmatprep.subr.mxu0 0.0
    %2153 = vmatpush1.msra.mxu0 0.0
    %2154 = vmatprep.subr.mxu0 0.0
    %2155 = vmatpush1.msra.mxu0 0.0
    %2156 = vmatprep.mubr.f32.mxu0 0.0
    %2157 = vmatmul.mubr.f32.gmra.mrb[0].mxu0 %v2090
    %v2158 = vpop.f32.mrb[0].mxu0
    %v2159 = vadd.f32 %v2086, %v2158
    %v2160 = vpop.f32.mrb[0].mxu0
    %2161 = vdwg.mxu0
    %v2162 = vld [vmem:[%s8] sm:$0xff]
    %v2163 = vld [vmem:[%s8 + $0x8] sm:$0xff]
    %v2164 = vld [vmem:[%s8 + $0x10] sm:$0xff]
    %v2165 = vld [vmem:[%s8 + $0x18] sm:$0xff]
    %v2166 = vld [vmem:[#allocation4] sm:$0x1]
    %v2168 = vlaneseq
    %v2169 = vshrl.u32 %v2168, 7
    %v2170 = vsub.s32 0, %v2169
    %v2171 = vrot.slane %v2166, %v2170
    %v2174 = vsel %vm228, %v2159, 0
    %2176 = vmatprep.subr.mxu0 0.0
    %2177 = vmatpush1.msra.mxu0 %v2162
    %2178 = vmatprep.subr.mxu0 0.0
    %2179 = vmatpush1.msra.mxu0 %v2163
    %2180 = vmatprep.subr.mxu0 0.0
    %2181 = vmatpush1.msra.mxu0 %v2164
    %2182 = vmatprep.subr.mxu0 0.0
    %2183 = vmatpush1.msra.mxu0 %v2165
    %2184 = vmatprep.subr.mxu0 0.0
    %2185 = vmatpush1.msra.mxu0 0.0
    %2186 = vmatprep.subr.mxu0 0.0
    %2187 = vmatpush1.msra.mxu0 0.0
    %2188 = vmatprep.subr.mxu0 0.0
    %2189 = vmatpush1.msra.mxu0 0.0
    %2190 = vmatprep.subr.mxu0 0.0
    %2191 = vmatpush1.msra.mxu0 0.0
    %2192 = vmatprep.subr.mxu0 0.0
    %2193 = vmatpush1.msra.mxu0 0.0
    %2194 = vmatprep.subr.mxu0 0.0
    %2195 = vmatpush1.msra.mxu0 0.0
    %2196 = vmatprep.subr.mxu0 0.0
    %2197 = vmatpush1.msra.mxu0 0.0
    %2198 = vmatprep.subr.mxu0 0.0
    %2199 = vmatpush1.msra.mxu0 0.0
    %2200 = vmatprep.subr.mxu0 0.0
    %2201 = vmatpush1.msra.mxu0 0.0
    %2202 = vmatprep.subr.mxu0 0.0
    %2203 = vmatpush1.msra.mxu0 0.0
    %2204 = vmatprep.subr.mxu0 0.0
    %2205 = vmatpush1.msra.mxu0 0.0
    %2206 = vmatprep.subr.mxu0 0.0
    %2207 = vmatpush1.msra.mxu0 0.0
    %2208 = vmatprep.subr.mxu0 0.0
    %2209 = vmatpush1.msra.mxu0 0.0
    %2210 = vmatprep.subr.mxu0 0.0
    %2211 = vmatpush1.msra.mxu0 0.0
    %2212 = vmatprep.subr.mxu0 0.0
    %2213 = vmatpush1.msra.mxu0 0.0
    %2214 = vmatprep.subr.mxu0 0.0
    %2215 = vmatpush1.msra.mxu0 0.0
    %2216 = vmatprep.subr.mxu0 0.0
    %2217 = vmatpush1.msra.mxu0 0.0
    %2218 = vmatprep.subr.mxu0 0.0
    %2219 = vmatpush1.msra.mxu0 0.0
    %2220 = vmatprep.subr.mxu0 0.0
    %2221 = vmatpush1.msra.mxu0 0.0
    %2222 = vmatprep.subr.mxu0 0.0
    %2223 = vmatpush1.msra.mxu0 0.0
    %2224 = vmatprep.subr.mxu0 0.0
    %2225 = vmatpush1.msra.mxu0 0.0
    %2226 = vmatprep.subr.mxu0 0.0
    %2227 = vmatpush1.msra.mxu0 0.0
    %2228 = vmatprep.subr.mxu0 0.0
    %2229 = vmatpush1.msra.mxu0 0.0
    %2230 = vmatprep.subr.mxu0 0.0
    %2231 = vmatpush1.msra.mxu0 0.0
    %2232 = vmatprep.subr.mxu0 0.0
    %2233 = vmatpush1.msra.mxu0 0.0
    %2234 = vmatprep.subr.mxu0 0.0
    %2235 = vmatpush1.msra.mxu0 0.0
    %2236 = vmatprep.subr.mxu0 0.0
    %2237 = vmatpush1.msra.mxu0 0.0
    %2238 = vmatprep.subr.mxu0 0.0
    %2239 = vmatpush1.msra.mxu0 0.0
    %2240 = vmatprep.mubr.f32.mxu0 0.0
    %2241 = vmatmul.mubr.f32.gmra.mrb[0].mxu0 %v2174
    %v2242 = vpop.f32.mrb[0].mxu0
    %v2243 = vadd.f32 0.0, %v2242
    %v2244 = vpop.f32.mrb[0].mxu0
    %2245 = vdwg.mxu0
    %v2246 = vadd.f32 %v2171, %v2243
    %v2247 = vxor.u32 %v2246, 2147483648
    %v2248 = vmul.f32 %v2247, 1.442695
    %v2249 = vpow.pop %v2248
    %v2250 = vadd.f32 %v2249, 1.0
    %v2251 = vrcp.pop %v2250
    %v2252 = vmul.f32 1.0, %v2251
    %v2253 = vtanh.pop %v2246
    %v2254 = vmul.f32 %v2252, 0.0
    %2256 = vrot.lane.b32.xlu0 %v2253, 32
    %v2257 = vpop.permute.xlu0 %2256
    %v2259 = vmul.f32 %v2252, %v2257
    %2261 = vrot.lane.b32.xlu0 %v2259, 32
    %v2262 = vpop.permute.xlu0 %2261
    %v2264 = vadd.f32 %v2254, %v2262
    %v2265 = vtanh.pop %v2264
    %2267 = vrot.lane.b32.xlu0 %v2265, 32
    %v2268 = vpop.permute.xlu0 %2267
    %v2270 = vmul.f32 %v2252, %v2268
    %2272 = vrot.lane.b32.xlu0 %v2270, 64
    %v2273 = vpop.permute.xlu0 %2272
    %2275 = vst.msk [vmem:[#allocation2] sm:$0xff] %vm228, %v2273
    %v2276 = vsel %vm228, %v2273, 0
    %2278 = vmatprep.subr.mxu0 0.0
    %2279 = vmatpush1.msra.mxu0 %v2162
    %2280 = vmatprep.subr.mxu0 0.0
    %2281 = vmatpush1.msra.mxu0 %v2163
    %2282 = vmatprep.subr.mxu0 0.0
    %2283 = vmatpush1.msra.mxu0 %v2164
    %2284 = vmatprep.subr.mxu0 0.0
    %2285 = vmatpush1.msra.mxu0 %v2165
    %2286 = vmatprep.subr.mxu0 0.0
    %2287 = vmatpush1.msra.mxu0 0.0
    %2288 = vmatprep.subr.mxu0 0.0
    %2289 = vmatpush1.msra.mxu0 0.0
    %2290 = vmatprep.subr.mxu0 0.0
    %2291 = vmatpush1.msra.mxu0 0.0
    %2292 = vmatprep.subr.mxu0 0.0
    %2293 = vmatpush1.msra.mxu0 0.0
    %2294 = vmatprep.subr.mxu0 0.0
    %2295 = vmatpush1.msra.mxu0 0.0
    %2296 = vmatprep.subr.mxu0 0.0
    %2297 = vmatpush1.msra.mxu0 0.0
    %2298 = vmatprep.subr.mxu0 0.0
    %2299 = vmatpush1.msra.mxu0 0.0
    %2300 = vmatprep.subr.mxu0 0.0
    %2301 = vmatpush1.msra.mxu0 0.0
    %2302 = vmatprep.subr.mxu0 0.0
    %2303 = vmatpush1.msra.mxu0 0.0
    %2304 = vmatprep.subr.mxu0 0.0
    %2305 = vmatpush1.msra.mxu0 0.0
    %2306 = vmatprep.subr.mxu0 0.0
    %2307 = vmatpush1.msra.mxu0 0.0
    %2308 = vmatprep.subr.mxu0 0.0
    %2309 = vmatpush1.msra.mxu0 0.0
    %2310 = vmatprep.subr.mxu0 0.0
    %2311 = vmatpush1.msra.mxu0 0.0
    %2312 = vmatprep.subr.mxu0 0.0
    %2313 = vmatpush1.msra.mxu0 0.0
    %2314 = vmatprep.subr.mxu0 0.0
    %2315 = vmatpush1.msra.mxu0 0.0
    %2316 = vmatprep.subr.mxu0 0.0
    %2317 = vmatpush1.msra.mxu0 0.0
    %2318 = vmatprep.subr.mxu0 0.0
    %2319 = vmatpush1.msra.mxu0 0.0
    %2320 = vmatprep.subr.mxu0 0.0
    %2321 = vmatpush1.msra.mxu0 0.0
    %2322 = vmatprep.subr.mxu0 0.0
    %2323 = vmatpush1.msra.mxu0 0.0
    %2324 = vmatprep.subr.mxu0 0.0
    %2325 = vmatpush1.msra.mxu0 0.0
    %2326 = vmatprep.subr.mxu0 0.0
    %2327 = vmatpush1.msra.mxu0 0.0
    %2328 = vmatprep.subr.mxu0 0.0
    %2329 = vmatpush1.msra.mxu0 0.0
    %2330 = vmatprep.subr.mxu0 0.0
    %2331 = vmatpush1.msra.mxu0 0.0
    %2332 = vmatprep.subr.mxu0 0.0
    %2333 = vmatpush1.msra.mxu0 0.0
    %2334 = vmatprep.subr.mxu0 0.0
    %2335 = vmatpush1.msra.mxu0 0.0
    %2336 = vmatprep.subr.mxu0 0.0
    %2337 = vmatpush1.msra.mxu0 0.0
    %2338 = vmatprep.subr.mxu0 0.0
    %2339 = vmatpush1.msra.mxu0 0.0
    %2340 = vmatprep.subr.mxu0 0.0
    %2341 = vmatpush1.msra.mxu0 0.0
    %2342 = vmatprep.mubr.f32.mxu0 0.0
    %2343 = vmatmul.mubr.f32.gmra.mrb[0].mxu0 %v2276
    %v2344 = vpop.f32.mrb[0].mxu0
    %v2345 = vadd.f32 0.0, %v2344
    %v2346 = vpop.f32.mrb[0].mxu0
    %2347 = vdwg.mxu0
    %v2348 = vadd.f32 %v2171, %v2345
    %v2349 = vxor.u32 %v2348, 2147483648
    %v2350 = vmul.f32 %v2349, 1.442695
    %v2351 = vpow.pop %v2350
    %v2352 = vadd.f32 %v2351, 1.0
    %v2353 = vrcp.pop %v2352
    %v2354 = vmul.f32 1.0, %v2353
    %v2355 = vtanh.pop %v2348
    %v2356 = vmul.f32 %v2354, %v2264
    %2358 = vrot.lane.b32.xlu0 %v2355, 32
    %v2359 = vpop.permute.xlu0 %2358
    %v2361 = vmul.f32 %v2354, %v2359
    %2363 = vrot.lane.b32.xlu0 %v2361, 32
    %v2364 = vpop.permute.xlu0 %2363
    %v2366 = vadd.f32 %v2356, %v2364
    %v2367 = vtanh.pop %v2366
    %2369 = vrot.lane.b32.xlu0 %v2367, 32
    %v2370 = vpop.permute.xlu0 %2369
    %v2372 = vmul.f32 %v2354, %v2370
    %2374 = vrot.lane.b32.xlu0 %v2372, 64
    %v2375 = vpop.permute.xlu0 %2374
    %2377 = vst.msk [vmem:[#allocation2 + $0x8] sm:$0xff] %vm228, %v2375
    %v2378 = vsel %vm228, %v2375, 0
    %2380 = vmatprep.subr.mxu0 0.0
    %2381 = vmatpush1.msra.mxu0 %v2162
    %2382 = vmatprep.subr.mxu0 0.0
    %2383 = vmatpush1.msra.mxu0 %v2163
    %2384 = vmatprep.subr.mxu0 0.0
    %2385 = vmatpush1.msra.mxu0 %v2164
    %2386 = vmatprep.subr.mxu0 0.0
    %2387 = vmatpush1.msra.mxu0 %v2165
    %2388 = vmatprep.subr.mxu0 0.0
    %2389 = vmatpush1.msra.mxu0 0.0
    %2390 = vmatprep.subr.mxu0 0.0
    %2391 = vmatpush1.msra.mxu0 0.0
    %2392 = vmatprep.subr.mxu0 0.0
    %2393 = vmatpush1.msra.mxu0 0.0
    %2394 = vmatprep.subr.mxu0 0.0
    %2395 = vmatpush1.msra.mxu0 0.0
    %2396 = vmatprep.subr.mxu0 0.0
    %2397 = vmatpush1.msra.mxu0 0.0
    %2398 = vmatprep.subr.mxu0 0.0
    %2399 = vmatpush1.msra.mxu0 0.0
    %2400 = vmatprep.subr.mxu0 0.0
    %2401 = vmatpush1.msra.mxu0 0.0
    %2402 = vmatprep.subr.mxu0 0.0
    %2403 = vmatpush1.msra.mxu0 0.0
    %2404 = vmatprep.subr.mxu0 0.0
    %2405 = vmatpush1.msra.mxu0 0.0
    %2406 = vmatprep.subr.mxu0 0.0
    %2407 = vmatpush1.msra.mxu0 0.0
    %2408 = vmatprep.subr.mxu0 0.0
    %2409 = vmatpush1.msra.mxu0 0.0
    %2410 = vmatprep.subr.mxu0 0.0
    %2411 = vmatpush1.msra.mxu0 0.0
    %2412 = vmatprep.subr.mxu0 0.0
    %2413 = vmatpush1.msra.mxu0 0.0
    %2414 = vmatprep.subr.mxu0 0.0
    %2415 = vmatpush1.msra.mxu0 0.0
    %2416 = vmatprep.subr.mxu0 0.0
    %2417 = vmatpush1.msra.mxu0 0.0
    %2418 = vmatprep.subr.mxu0 0.0
    %2419 = vmatpush1.msra.mxu0 0.0
    %2420 = vmatprep.subr.mxu0 0.0
    %2421 = vmatpush1.msra.mxu0 0.0
    %2422 = vmatprep.subr.mxu0 0.0
    %2423 = vmatpush1.msra.mxu0 0.0
    %2424 = vmatprep.subr.mxu0 0.0
    %2425 = vmatpush1.msra.mxu0 0.0
    %2426 = vmatprep.subr.mxu0 0.0
    %2427 = vmatpush1.msra.mxu0 0.0
    %2428 = vmatprep.subr.mxu0 0.0
    %2429 = vmatpush1.msra.mxu0 0.0
    %2430 = vmatprep.subr.mxu0 0.0
    %2431 = vmatpush1.msra.mxu0 0.0
    %2432 = vmatprep.subr.mxu0 0.0
    %2433 = vmatpush1.msra.mxu0 0.0
    %2434 = vmatprep.subr.mxu0 0.0
    %2435 = vmatpush1.msra.mxu0 0.0
    %2436 = vmatprep.subr.mxu0 0.0
    %2437 = vmatpush1.msra.mxu0 0.0
    %2438 = vmatprep.subr.mxu0 0.0
    %2439 = vmatpush1.msra.mxu0 0.0
    %2440 = vmatprep.subr.mxu0 0.0
    %2441 = vmatpush1.msra.mxu0 0.0
    %2442 = vmatprep.subr.mxu0 0.0
    %2443 = vmatpush1.msra.mxu0 0.0
    %2444 = vmatprep.mubr.f32.mxu0 0.0
    %2445 = vmatmul.mubr.f32.gmra.mrb[0].mxu0 %v2378
    %v2446 = vpop.f32.mrb[0].mxu0
    %v2447 = vadd.f32 0.0, %v2446
    %v2448 = vpop.f32.mrb[0].mxu0
    %2449 = vdwg.mxu0
    %v2450 = vadd.f32 %v2171, %v2447
    %v2451 = vxor.u32 %v2450, 2147483648
    %v2452 = vmul.f32 %v2451, 1.442695
    %v2453 = vpow.pop %v2452
    %v2454 = vadd.f32 %v2453, 1.0
    %v2455 = vrcp.pop %v2454
    %v2456 = vmul.f32 1.0, %v2455
    %v2457 = vtanh.pop %v2450
    %v2458 = vmul.f32 %v2456, %v2366
    %2460 = vrot.lane.b32.xlu0 %v2457, 32
    %v2461 = vpop.permute.xlu0 %2460
    %v2463 = vmul.f32 %v2456, %v2461
    %2465 = vrot.lane.b32.xlu0 %v2463, 32
    %v2466 = vpop.permute.xlu0 %2465
    %v2468 = vadd.f32 %v2458, %v2466
    %v2469 = vtanh.pop %v2468
    %2471 = vrot.lane.b32.xlu0 %v2469, 32
    %v2472 = vpop.permute.xlu0 %2471
    %v2474 = vmul.f32 %v2456, %v2472
    %2476 = vrot.lane.b32.xlu0 %v2474, 64
    %v2477 = vpop.permute.xlu0 %2476
    %2479 = vst.msk [vmem:[#allocation2 + $0x10] sm:$0xff] %vm228, %v2477
    %v2480 = vsel %vm228, %v2477, 0
    %2482 = vmatprep.subr.mxu0 0.0
    %2483 = vmatpush1.msra.mxu0 %v2162
    %2484 = vmatprep.subr.mxu0 0.0
    %2485 = vmatpush1.msra.mxu0 %v2163
    %2486 = vmatprep.subr.mxu0 0.0
    %2487 = vmatpush1.msra.mxu0 %v2164
    %2488 = vmatprep.subr.mxu0 0.0
    %2489 = vmatpush1.msra.mxu0 %v2165
    %2490 = vmatprep.subr.mxu0 0.0
    %2491 = vmatpush1.msra.mxu0 0.0
    %2492 = vmatprep.subr.mxu0 0.0
    %2493 = vmatpush1.msra.mxu0 0.0
    %2494 = vmatprep.subr.mxu0 0.0
    %2495 = vmatpush1.msra.mxu0 0.0
    %2496 = vmatprep.subr.mxu0 0.0
    %2497 = vmatpush1.msra.mxu0 0.0
    %2498 = vmatprep.subr.mxu0 0.0
    %2499 = vmatpush1.msra.mxu0 0.0
    %2500 = vmatprep.subr.mxu0 0.0
    %2501 = vmatpush1.msra.mxu0 0.0
    %2502 = vmatprep.subr.mxu0 0.0
    %2503 = vmatpush1.msra.mxu0 0.0
    %2504 = vmatprep.subr.mxu0 0.0
    %2505 = vmatpush1.msra.mxu0 0.0
    %2506 = vmatprep.subr.mxu0 0.0
    %2507 = vmatpush1.msra.mxu0 0.0
    %2508 = vmatprep.subr.mxu0 0.0
    %2509 = vmatpush1.msra.mxu0 0.0
    %2510 = vmatprep.subr.mxu0 0.0
    %2511 = vmatpush1.msra.mxu0 0.0
    %2512 = vmatprep.subr.mxu0 0.0
    %2513 = vmatpush1.msra.mxu0 0.0
    %2514 = vmatprep.subr.mxu0 0.0
    %2515 = vmatpush1.msra.mxu0 0.0
    %2516 = vmatprep.subr.mxu0 0.0
    %2517 = vmatpush1.msra.mxu0 0.0
    %2518 = vmatprep.subr.mxu0 0.0
    %2519 = vmatpush1.msra.mxu0 0.0
    %2520 = vmatprep.subr.mxu0 0.0
    %2521 = vmatpush1.msra.mxu0 0.0
    %2522 = vmatprep.subr.mxu0 0.0
    %2523 = vmatpush1.msra.mxu0 0.0
    %2524 = vmatprep.subr.mxu0 0.0
    %2525 = vmatpush1.msra.mxu0 0.0
    %2526 = vmatprep.subr.mxu0 0.0
    %2527 = vmatpush1.msra.mxu0 0.0
    %2528 = vmatprep.subr.mxu0 0.0
    %2529 = vmatpush1.msra.mxu0 0.0
    %2530 = vmatprep.subr.mxu0 0.0
    %2531 = vmatpush1.msra.mxu0 0.0
    %2532 = vmatprep.subr.mxu0 0.0
    %2533 = vmatpush1.msra.mxu0 0.0
    %2534 = vmatprep.subr.mxu0 0.0
    %2535 = vmatpush1.msra.mxu0 0.0
    %2536 = vmatprep.subr.mxu0 0.0
    %2537 = vmatpush1.msra.mxu0 0.0
    %2538 = vmatprep.subr.mxu0 0.0
    %2539 = vmatpush1.msra.mxu0 0.0
    %2540 = vmatprep.subr.mxu0 0.0
    %2541 = vmatpush1.msra.mxu0 0.0
    %2542 = vmatprep.subr.mxu0 0.0
    %2543 = vmatpush1.msra.mxu0 0.0
    %2544 = vmatprep.subr.mxu0 0.0
    %2545 = vmatpush1.msra.mxu0 0.0
    %2546 = vmatprep.mubr.f32.mxu0 0.0
    %2547 = vmatmul.mubr.f32.gmra.mrb[0].mxu0 %v2480
    %v2548 = vpop.f32.mrb[0].mxu0
    %v2549 = vadd.f32 0.0, %v2548
    %v2550 = vpop.f32.mrb[0].mxu0
    %2551 = vdwg.mxu0
    %v2552 = vadd.f32 %v2171, %v2549
    %v2553 = vxor.u32 %v2552, 2147483648
    %v2554 = vmul.f32 %v2553, 1.442695
    %v2555 = vpow.pop %v2554
    %v2556 = vadd.f32 %v2555, 1.0
    %v2557 = vrcp.pop %v2556
    %v2558 = vmul.f32 1.0, %v2557
    %v2559 = vtanh.pop %v2552
    %v2560 = vmul.f32 %v2558, %v2468
    %2562 = vrot.lane.b32.xlu0 %v2559, 32
    %v2563 = vpop.permute.xlu0 %2562
    %v2565 = vmul.f32 %v2558, %v2563
    %2567 = vrot.lane.b32.xlu0 %v2565, 32
    %v2568 = vpop.permute.xlu0 %2567
    %v2570 = vadd.f32 %v2560, %v2568
    %v2571 = vtanh.pop %v2570
    %2573 = vrot.lane.b32.xlu0 %v2571, 32
    %v2574 = vpop.permute.xlu0 %2573
    %v2576 = vmul.f32 %v2558, %v2574
    %2578 = vrot.lane.b32.xlu0 %v2576, 64
    %v2579 = vpop.permute.xlu0 %2578
    %2581 = vst.msk [vmem:[#allocation2 + $0x18] sm:$0xff] %vm228, %v2579
    %v2582 = vsel %vm228, %v2579, 0
    %2584 = vmatprep.subr.mxu0 0.0
    %2585 = vmatpush1.msra.mxu0 %v2162
    %2586 = vmatprep.subr.mxu0 0.0
    %2587 = vmatpush1.msra.mxu0 %v2163
    %2588 = vmatprep.subr.mxu0 0.0
    %2589 = vmatpush1.msra.mxu0 %v2164
    %2590 = vmatprep.subr.mxu0 0.0
    %2591 = vmatpush1.msra.mxu0 %v2165
    %2592 = vmatprep.subr.mxu0 0.0
    %2593 = vmatpush1.msra.mxu0 0.0
    %2594 = vmatprep.subr.mxu0 0.0
    %2595 = vmatpush1.msra.mxu0 0.0
    %2596 = vmatprep.subr.mxu0 0.0
    %2597 = vmatpush1.msra.mxu0 0.0
    %2598 = vmatprep.subr.mxu0 0.0
    %2599 = vmatpush1.msra.mxu0 0.0
    %2600 = vmatprep.subr.mxu0 0.0
    %2601 = vmatpush1.msra.mxu0 0.0
    %2602 = vmatprep.subr.mxu0 0.0
    %2603 = vmatpush1.msra.mxu0 0.0
    %2604 = vmatprep.subr.mxu0 0.0
    %2605 = vmatpush1.msra.mxu0 0.0
    %2606 = vmatprep.subr.mxu0 0.0
    %2607 = vmatpush1.msra.mxu0 0.0
    %2608 = vmatprep.subr.mxu0 0.0
    %2609 = vmatpush1.msra.mxu0 0.0
    %2610 = vmatprep.subr.mxu0 0.0
    %2611 = vmatpush1.msra.mxu0 0.0
    %2612 = vmatprep.subr.mxu0 0.0
    %2613 = vmatpush1.msra.mxu0 0.0
    %2614 = vmatprep.subr.mxu0 0.0
    %2615 = vmatpush1.msra.mxu0 0.0
    %2616 = vmatprep.subr.mxu0 0.0
    %2617 = vmatpush1.msra.mxu0 0.0
    %2618 = vmatprep.subr.mxu0 0.0
    %2619 = vmatpush1.msra.mxu0 0.0
    %2620 = vmatprep.subr.mxu0 0.0
    %2621 = vmatpush1.msra.mxu0 0.0
    %2622 = vmatprep.subr.mxu0 0.0
    %2623 = vmatpush1.msra.mxu0 0.0
    %2624 = vmatprep.subr.mxu0 0.0
    %2625 = vmatpush1.msra.mxu0 0.0
    %2626 = vmatprep.subr.mxu0 0.0
    %2627 = vmatpush1.msra.mxu0 0.0
    %2628 = vmatprep.subr.mxu0 0.0
    %2629 = vmatpush1.msra.mxu0 0.0
    %2630 = vmatprep.subr.mxu0 0.0
    %2631 = vmatpush1.msra.mxu0 0.0
    %2632 = vmatprep.subr.mxu0 0.0
    %2633 = vmatpush1.msra.mxu0 0.0
    %2634 = vmatprep.subr.mxu0 0.0
    %2635 = vmatpush1.msra.mxu0 0.0
    %2636 = vmatprep.subr.mxu0 0.0
    %2637 = vmatpush1.msra.mxu0 0.0
    %2638 = vmatprep.subr.mxu0 0.0
    %2639 = vmatpush1.msra.mxu0 0.0
    %2640 = vmatprep.subr.mxu0 0.0
    %2641 = vmatpush1.msra.mxu0 0.0
    %2642 = vmatprep.subr.mxu0 0.0
    %2643 = vmatpush1.msra.mxu0 0.0
    %2644 = vmatprep.subr.mxu0 0.0
    %2645 = vmatpush1.msra.mxu0 0.0
    %2646 = vmatprep.subr.mxu0 0.0
    %2647 = vmatpush1.msra.mxu0 0.0
    %2648 = vmatprep.mubr.f32.mxu0 0.0
    %2649 = vmatmul.mubr.f32.gmra.mrb[0].mxu0 %v2582
    %v2650 = vpop.f32.mrb[0].mxu0
    %v2651 = vadd.f32 0.0, %v2650
    %v2652 = vpop.f32.mrb[0].mxu0
    %2653 = vdwg.mxu0
    %v2654 = vadd.f32 %v2171, %v2651
    %v2655 = vxor.u32 %v2654, 2147483648
    %v2656 = vmul.f32 %v2655, 1.442695
    %v2657 = vpow.pop %v2656
    %v2658 = vadd.f32 %v2657, 1.0
    %v2659 = vrcp.pop %v2658
    %v2660 = vmul.f32 1.0, %v2659
    %v2661 = vtanh.pop %v2654
    %v2662 = vmul.f32 %v2660, %v2570
    %2664 = vrot.lane.b32.xlu0 %v2661, 32
    %v2665 = vpop.permute.xlu0 %2664
    %v2667 = vmul.f32 %v2660, %v2665
    %2669 = vrot.lane.b32.xlu0 %v2667, 32
    %v2670 = vpop.permute.xlu0 %2669
    %v2672 = vadd.f32 %v2662, %v2670
    %v2673 = vtanh.pop %v2672
    %2675 = vrot.lane.b32.xlu0 %v2673, 32
    %v2676 = vpop.permute.xlu0 %2675
    %v2678 = vmul.f32 %v2660, %v2676
    %2680 = vrot.lane.b32.xlu0 %v2678, 64
    %v2681 = vpop.permute.xlu0 %2680
    %2683 = vst.msk [vmem:[#allocation2 + $0x20] sm:$0xff] %vm228, %v2681
    %v2684 = vsel %vm228, %v2681, 0
    %2686 = vmatprep.subr.mxu0 0.0
    %2687 = vmatpush1.msra.mxu0 %v2162
    %2688 = vmatprep.subr.mxu0 0.0
    %2689 = vmatpush1.msra.mxu0 %v2163
    %2690 = vmatprep.subr.mxu0 0.0
    %2691 = vmatpush1.msra.mxu0 %v2164
    %2692 = vmatprep.subr.mxu0 0.0
    %2693 = vmatpush1.msra.mxu0 %v2165
    %2694 = vmatprep.subr.mxu0 0.0
    %2695 = vmatpush1.msra.mxu0 0.0
    %2696 = vmatprep.subr.mxu0 0.0
    %2697 = vmatpush1.msra.mxu0 0.0
    %2698 = vmatprep.subr.mxu0 0.0
    %2699 = vmatpush1.msra.mxu0 0.0
    %2700 = vmatprep.subr.mxu0 0.0
    %2701 = vmatpush1.msra.mxu0 0.0
    %2702 = vmatprep.subr.mxu0 0.0
    %2703 = vmatpush1.msra.mxu0 0.0
    %2704 = vmatprep.subr.mxu0 0.0
    %2705 = vmatpush1.msra.mxu0 0.0
    %2706 = vmatprep.subr.mxu0 0.0
    %2707 = vmatpush1.msra.mxu0 0.0
    %2708 = vmatprep.subr.mxu0 0.0
    %2709 = vmatpush1.msra.mxu0 0.0
    %2710 = vmatprep.subr.mxu0 0.0
    %2711 = vmatpush1.msra.mxu0 0.0
    %2712 = vmatprep.subr.mxu0 0.0
    %2713 = vmatpush1.msra.mxu0 0.0
    %2714 = vmatprep.subr.mxu0 0.0
    %2715 = vmatpush1.msra.mxu0 0.0
    %2716 = vmatprep.subr.mxu0 0.0
    %2717 = vmatpush1.msra.mxu0 0.0
    %2718 = vmatprep.subr.mxu0 0.0
    %2719 = vmatpush1.msra.mxu0 0.0
    %2720 = vmatprep.subr.mxu0 0.0
    %2721 = vmatpush1.msra.mxu0 0.0
    %2722 = vmatprep.subr.mxu0 0.0
    %2723 = vmatpush1.msra.mxu0 0.0
    %2724 = vmatprep.subr.mxu0 0.0
    %2725 = vmatpush1.msra.mxu0 0.0
    %2726 = vmatprep.subr.mxu0 0.0
    %2727 = vmatpush1.msra.mxu0 0.0
    %2728 = vmatprep.subr.mxu0 0.0
    %2729 = vmatpush1.msra.mxu0 0.0
    %2730 = vmatprep.subr.mxu0 0.0
    %2731 = vmatpush1.msra.mxu0 0.0
    %2732 = vmatprep.subr.mxu0 0.0
    %2733 = vmatpush1.msra.mxu0 0.0
    %2734 = vmatprep.subr.mxu0 0.0
    %2735 = vmatpush1.msra.mxu0 0.0
    %2736 = vmatprep.subr.mxu0 0.0
    %2737 = vmatpush1.msra.mxu0 0.0
    %2738 = vmatprep.subr.mxu0 0.0
    %2739 = vmatpush1.msra.mxu0 0.0
    %2740 = vmatprep.subr.mxu0 0.0
    %2741 = vmatpush1.msra.mxu0 0.0
    %2742 = vmatprep.subr.mxu0 0.0
    %2743 = vmatpush1.msra.mxu0 0.0
    %2744 = vmatprep.subr.mxu0 0.0
    %2745 = vmatpush1.msra.mxu0 0.0
    %2746 = vmatprep.subr.mxu0 0.0
    %2747 = vmatpush1.msra.mxu0 0.0
    %2748 = vmatprep.subr.mxu0 0.0
    %2749 = vmatpush1.msra.mxu0 0.0
    %2750 = vmatprep.mubr.f32.mxu0 0.0
    %2751 = vmatmul.mubr.f32.gmra.mrb[0].mxu0 %v2684
    %v2752 = vpop.f32.mrb[0].mxu0
    %v2753 = vadd.f32 0.0, %v2752
    %v2754 = vpop.f32.mrb[0].mxu0
    %2755 = vdwg.mxu0
    %v2756 = vadd.f32 %v2171, %v2753
    %v2757 = vxor.u32 %v2756, 2147483648
    %v2758 = vmul.f32 %v2757, 1.442695
    %v2759 = vpow.pop %v2758
    %v2760 = vadd.f32 %v2759, 1.0
    %v2761 = vrcp.pop %v2760
    %v2762 = vmul.f32 1.0, %v2761
    %v2763 = vtanh.pop %v2756
    %v2764 = vmul.f32 %v2762, %v2672
    %2766 = vrot.lane.b32.xlu0 %v2763, 32
    %v2767 = vpop.permute.xlu0 %2766
    %v2769 = vmul.f32 %v2762, %v2767
    %2771 = vrot.lane.b32.xlu0 %v2769, 32
    %v2772 = vpop.permute.xlu0 %2771
    %v2774 = vadd.f32 %v2764, %v2772
    %v2775 = vtanh.pop %v2774
    %2777 = vrot.lane.b32.xlu0 %v2775, 32
    %v2778 = vpop.permute.xlu0 %2777
    %v2780 = vmul.f32 %v2762, %v2778
    %2782 = vrot.lane.b32.xlu0 %v2780, 64
    %v2783 = vpop.permute.xlu0 %2782
    %2785 = vst.msk [vmem:[#allocation2 + $0x28] sm:$0xff] %vm228, %v2783
    %v2786 = vsel %vm228, %v2783, 0
    %2788 = vmatprep.subr.mxu0 0.0
    %2789 = vmatpush1.msra.mxu0 %v2162
    %2790 = vmatprep.subr.mxu0 0.0
    %2791 = vmatpush1.msra.mxu0 %v2163
    %2792 = vmatprep.subr.mxu0 0.0
    %2793 = vmatpush1.msra.mxu0 %v2164
    %2794 = vmatprep.subr.mxu0 0.0
    %2795 = vmatpush1.msra.mxu0 %v2165
    %2796 = vmatprep.subr.mxu0 0.0
    %2797 = vmatpush1.msra.mxu0 0.0
    %2798 = vmatprep.subr.mxu0 0.0
    %2799 = vmatpush1.msra.mxu0 0.0
    %2800 = vmatprep.subr.mxu0 0.0
    %2801 = vmatpush1.msra.mxu0 0.0
    %2802 = vmatprep.subr.mxu0 0.0
    %2803 = vmatpush1.msra.mxu0 0.0
    %2804 = vmatprep.subr.mxu0 0.0
    %2805 = vmatpush1.msra.mxu0 0.0
    %2806 = vmatprep.subr.mxu0 0.0
    %2807 = vmatpush1.msra.mxu0 0.0
    %2808 = vmatprep.subr.mxu0 0.0
    %2809 = vmatpush1.msra.mxu0 0.0
    %2810 = vmatprep.subr.mxu0 0.0
    %2811 = vmatpush1.msra.mxu0 0.0
    %2812 = vmatprep.subr.mxu0 0.0
    %2813 = vmatpush1.msra.mxu0 0.0
    %2814 = vmatprep.subr.mxu0 0.0
    %2815 = vmatpush1.msra.mxu0 0.0
    %2816 = vmatprep.subr.mxu0 0.0
    %2817 = vmatpush1.msra.mxu0 0.0
    %2818 = vmatprep.subr.mxu0 0.0
    %2819 = vmatpush1.msra.mxu0 0.0
    %2820 = vmatprep.subr.mxu0 0.0
    %2821 = vmatpush1.msra.mxu0 0.0
    %2822 = vmatprep.subr.mxu0 0.0
    %2823 = vmatpush1.msra.mxu0 0.0
    %2824 = vmatprep.subr.mxu0 0.0
    %2825 = vmatpush1.msra.mxu0 0.0
    %2826 = vmatprep.subr.mxu0 0.0
    %2827 = vmatpush1.msra.mxu0 0.0
    %2828 = vmatprep.subr.mxu0 0.0
    %2829 = vmatpush1.msra.mxu0 0.0
    %2830 = vmatprep.subr.mxu0 0.0
    %2831 = vmatpush1.msra.mxu0 0.0
    %2832 = vmatprep.subr.mxu0 0.0
    %2833 = vmatpush1.msra.mxu0 0.0
    %2834 = vmatprep.subr.mxu0 0.0
    %2835 = vmatpush1.msra.mxu0 0.0
    %2836 = vmatprep.subr.mxu0 0.0
    %2837 = vmatpush1.msra.mxu0 0.0
    %2838 = vmatprep.subr.mxu0 0.0
    %2839 = vmatpush1.msra.mxu0 0.0
    %2840 = vmatprep.subr.mxu0 0.0
    %2841 = vmatpush1.msra.mxu0 0.0
    %2842 = vmatprep.subr.mxu0 0.0
    %2843 = vmatpush1.msra.mxu0 0.0
    %2844 = vmatprep.subr.mxu0 0.0
    %2845 = vmatpush1.msra.mxu0 0.0
    %2846 = vmatprep.subr.mxu0 0.0
    %2847 = vmatpush1.msra.mxu0 0.0
    %2848 = vmatprep.subr.mxu0 0.0
    %2849 = vmatpush1.msra.mxu0 0.0
    %2850 = vmatprep.subr.mxu0 0.0
    %2851 = vmatpush1.msra.mxu0 0.0
    %2852 = vmatprep.mubr.f32.mxu0 0.0
    %2853 = vmatmul.mubr.f32.gmra.mrb[0].mxu0 %v2786
    %v2854 = vpop.f32.mrb[0].mxu0
    %v2855 = vadd.f32 0.0, %v2854
    %v2856 = vpop.f32.mrb[0].mxu0
    %2857 = vdwg.mxu0
    %v2858 = vadd.f32 %v2171, %v2855
    %v2859 = vxor.u32 %v2858, 2147483648
    %v2860 = vmul.f32 %v2859, 1.442695
    %v2861 = vpow.pop %v2860
    %v2862 = vadd.f32 %v2861, 1.0
    %v2863 = vrcp.pop %v2862
    %v2864 = vmul.f32 1.0, %v2863
    %v2865 = vtanh.pop %v2858
    %v2866 = vmul.f32 %v2864, %v2774
    %2868 = vrot.lane.b32.xlu0 %v2865, 32
    %v2869 = vpop.permute.xlu0 %2868
    %v2871 = vmul.f32 %v2864, %v2869
    %2873 = vrot.lane.b32.xlu0 %v2871, 32
    %v2874 = vpop.permute.xlu0 %2873
    %v2876 = vadd.f32 %v2866, %v2874
    %v2877 = vtanh.pop %v2876
    %2879 = vrot.lane.b32.xlu0 %v2877, 32
    %v2880 = vpop.permute.xlu0 %2879
    %v2882 = vmul.f32 %v2864, %v2880
    %2884 = vrot.lane.b32.xlu0 %v2882, 64
    %v2885 = vpop.permute.xlu0 %2884
    %2887 = vst.msk [vmem:[#allocation2 + $0x30] sm:$0xff] %vm228, %v2885
    %v2888 = vsel %vm228, %v2885, 0
    %2890 = vmatprep.subr.mxu0 0.0
    %2891 = vmatpush1.msra.mxu0 %v2162
    %2892 = vmatprep.subr.mxu0 0.0
    %2893 = vmatpush1.msra.mxu0 %v2163
    %2894 = vmatprep.subr.mxu0 0.0
    %2895 = vmatpush1.msra.mxu0 %v2164
    %2896 = vmatprep.subr.mxu0 0.0
    %2897 = vmatpush1.msra.mxu0 %v2165
    %2898 = vmatprep.subr.mxu0 0.0
    %2899 = vmatpush1.msra.mxu0 0.0
    %2900 = vmatprep.subr.mxu0 0.0
    %2901 = vmatpush1.msra.mxu0 0.0
    %2902 = vmatprep.subr.mxu0 0.0
    %2903 = vmatpush1.msra.mxu0 0.0
    %2904 = vmatprep.subr.mxu0 0.0
    %2905 = vmatpush1.msra.mxu0 0.0
    %2906 = vmatprep.subr.mxu0 0.0
    %2907 = vmatpush1.msra.mxu0 0.0
    %2908 = vmatprep.subr.mxu0 0.0
    %2909 = vmatpush1.msra.mxu0 0.0
    %2910 = vmatprep.subr.mxu0 0.0
    %2911 = vmatpush1.msra.mxu0 0.0
    %2912 = vmatprep.subr.mxu0 0.0
    %2913 = vmatpush1.msra.mxu0 0.0
    %2914 = vmatprep.subr.mxu0 0.0
    %2915 = vmatpush1.msra.mxu0 0.0
    %2916 = vmatprep.subr.mxu0 0.0
    %2917 = vmatpush1.msra.mxu0 0.0
    %2918 = vmatprep.subr.mxu0 0.0
    %2919 = vmatpush1.msra.mxu0 0.0
    %2920 = vmatprep.subr.mxu0 0.0
    %2921 = vmatpush1.msra.mxu0 0.0
    %2922 = vmatprep.subr.mxu0 0.0
    %2923 = vmatpush1.msra.mxu0 0.0
    %2924 = vmatprep.subr.mxu0 0.0
    %2925 = vmatpush1.msra.mxu0 0.0
    %2926 = vmatprep.subr.mxu0 0.0
    %2927 = vmatpush1.msra.mxu0 0.0
    %2928 = vmatprep.subr.mxu0 0.0
    %2929 = vmatpush1.msra.mxu0 0.0
    %2930 = vmatprep.subr.mxu0 0.0
    %2931 = vmatpush1.msra.mxu0 0.0
    %2932 = vmatprep.subr.mxu0 0.0
    %2933 = vmatpush1.msra.mxu0 0.0
    %2934 = vmatprep.subr.mxu0 0.0
    %2935 = vmatpush1.msra.mxu0 0.0
    %2936 = vmatprep.subr.mxu0 0.0
    %2937 = vmatpush1.msra.mxu0 0.0
    %2938 = vmatprep.subr.mxu0 0.0
    %2939 = vmatpush1.msra.mxu0 0.0
    %2940 = vmatprep.subr.mxu0 0.0
    %2941 = vmatpush1.msra.mxu0 0.0
    %2942 = vmatprep.subr.mxu0 0.0
    %2943 = vmatpush1.msra.mxu0 0.0
    %2944 = vmatprep.subr.mxu0 0.0
    %2945 = vmatpush1.msra.mxu0 0.0
    %2946 = vmatprep.subr.mxu0 0.0
    %2947 = vmatpush1.msra.mxu0 0.0
    %2948 = vmatprep.subr.mxu0 0.0
    %2949 = vmatpush1.msra.mxu0 0.0
    %2950 = vmatprep.subr.mxu0 0.0
    %2951 = vmatpush1.msra.mxu0 0.0
    %2952 = vmatprep.subr.mxu0 0.0
    %2953 = vmatpush1.msra.mxu0 0.0
    %2954 = vmatprep.mubr.f32.mxu0 0.0
    %2955 = vmatmul.mubr.f32.gmra.mrb[0].mxu0 %v2888
    %v2956 = vpop.f32.mrb[0].mxu0
    %v2957 = vadd.f32 0.0, %v2956
    %v2958 = vpop.f32.mrb[0].mxu0
    %2959 = vdwg.mxu0
    %v2960 = vadd.f32 %v2171, %v2957
    %v2961 = vxor.u32 %v2960, 2147483648
    %v2962 = vmul.f32 %v2961, 1.442695
    %v2963 = vpow.pop %v2962
    %v2964 = vadd.f32 %v2963, 1.0
    %v2965 = vrcp.pop %v2964
    %v2966 = vmul.f32 1.0, %v2965
    %v2967 = vtanh.pop %v2960
    %v2968 = vmul.f32 %v2966, %v2876
    %2970 = vrot.lane.b32.xlu0 %v2967, 32
    %v2971 = vpop.permute.xlu0 %2970
    %v2973 = vmul.f32 %v2966, %v2971
    %2975 = vrot.lane.b32.xlu0 %v2973, 32
    %v2976 = vpop.permute.xlu0 %2975
    %v2978 = vadd.f32 %v2968, %v2976
    %v2979 = vtanh.pop %v2978
    %2981 = vrot.lane.b32.xlu0 %v2979, 32
    %v2982 = vpop.permute.xlu0 %2981
    %v2984 = vmul.f32 %v2966, %v2982
    %2986 = vrot.lane.b32.xlu0 %v2984, 64
    %v2987 = vpop.permute.xlu0 %2986
    %2989 = vst.msk [vmem:[#allocation2 + $0x38] sm:$0xff] %vm228, %v2987
    %v2990 = vld [vmem:[#allocation2] sm:$0xff]
    %v2991 = vld [vmem:[#allocation2 + $0x8] sm:$0xff]
    %v2992 = vld [vmem:[#allocation2 + $0x10] sm:$0xff]
    %v2993 = vld [vmem:[#allocation2 + $0x18] sm:$0xff]
    %v2994 = vld [vmem:[#allocation2 + $0x20] sm:$0xff]
    %v2995 = vld [vmem:[#allocation2 + $0x28] sm:$0xff]
    %v2996 = vld [vmem:[#allocation2 + $0x30] sm:$0xff]
    %v2997 = vld [vmem:[#allocation2 + $0x38] sm:$0xff]
    %v2998 = vld [vmem:[%s10] sm:$0xff]
    %v2999 = vld [vmem:[%s10 + $0x8] sm:$0xff]
    %v3000 = vld [vmem:[%s10 + $0x10] sm:$0xff]
    %v3001 = vld [vmem:[%s10 + $0x18] sm:$0xff]
    %v3002 = vld [vmem:[%s11] sm:$0xff]
    %v3003 = vld [vmem:[%s11 + $0x8] sm:$0xff]
    %v3004 = vld [vmem:[%s11 + $0x10] sm:$0xff]
    %v3005 = vld [vmem:[%s11 + $0x18] sm:$0xff]
    %v3006 = vld [vmem:[%s12] sm:$0x1]
    %v3008 = vlaneseq
    %v3009 = vshrl.u32 %v3008, 7
    %v3010 = vsub.s32 0, %v3009
    %v3011 = vrot.slane %v3006, %v3010
    %v3014 = vsel %vm228, %v2990, 0
    %v3017 = vsel %vm228, %v2991, 0
    %v3020 = vsel %vm228, %v2992, 0
    %v3023 = vsel %vm228, %v2993, 0
    %v3026 = vsel %vm228, %v2994, 0
    %v3029 = vsel %vm228, %v2995, 0
    %v3032 = vsel %vm228, %v2996, 0
    %v3035 = vsel %vm228, %v2997, 0
    %3037 = vmatprep.subr.mxu0 0.0
    %3038 = vmatpush1.msra.mxu0 %v2998
    %3039 = vmatprep.subr.mxu0 0.0
    %3040 = vmatpush1.msra.mxu0 %v2999
    %3041 = vmatprep.subr.mxu0 0.0
    %3042 = vmatpush1.msra.mxu0 %v3000
    %3043 = vmatprep.subr.mxu0 0.0
    %3044 = vmatpush1.msra.mxu0 %v3001
    %3045 = vmatprep.subr.mxu0 0.0
    %3046 = vmatpush1.msra.mxu0 0.0
    %3047 = vmatprep.subr.mxu0 0.0
    %3048 = vmatpush1.msra.mxu0 0.0
    %3049 = vmatprep.subr.mxu0 0.0
    %3050 = vmatpush1.msra.mxu0 0.0
    %3051 = vmatprep.subr.mxu0 0.0
    %3052 = vmatpush1.msra.mxu0 0.0
    %3053 = vmatprep.subr.mxu0 0.0
    %3054 = vmatpush1.msra.mxu0 0.0
    %3055 = vmatprep.subr.mxu0 0.0
    %3056 = vmatpush1.msra.mxu0 0.0
    %3057 = vmatprep.subr.mxu0 0.0
    %3058 = vmatpush1.msra.mxu0 0.0
    %3059 = vmatprep.subr.mxu0 0.0
    %3060 = vmatpush1.msra.mxu0 0.0
    %3061 = vmatprep.subr.mxu0 0.0
    %3062 = vmatpush1.msra.mxu0 0.0
    %3063 = vmatprep.subr.mxu0 0.0
    %3064 = vmatpush1.msra.mxu0 0.0
    %3065 = vmatprep.subr.mxu0 0.0
    %3066 = vmatpush1.msra.mxu0 0.0
    %3067 = vmatprep.subr.mxu0 0.0
    %3068 = vmatpush1.msra.mxu0 0.0
    %3069 = vmatprep.subr.mxu0 0.0
    %3070 = vmatpush1.msra.mxu0 0.0
    %3071 = vmatprep.subr.mxu0 0.0
    %3072 = vmatpush1.msra.mxu0 0.0
    %3073 = vmatprep.subr.mxu0 0.0
    %3074 = vmatpush1.msra.mxu0 0.0
    %3075 = vmatprep.subr.mxu0 0.0
    %3076 = vmatpush1.msra.mxu0 0.0
    %3077 = vmatprep.subr.mxu0 0.0
    %3078 = vmatpush1.msra.mxu0 0.0
    %3079 = vmatprep.subr.mxu0 0.0
    %3080 = vmatpush1.msra.mxu0 0.0
    %3081 = vmatprep.subr.mxu0 0.0
    %3082 = vmatpush1.msra.mxu0 0.0
    %3083 = vmatprep.subr.mxu0 0.0
    %3084 = vmatpush1.msra.mxu0 0.0
    %3085 = vmatprep.subr.mxu0 0.0
    %3086 = vmatpush1.msra.mxu0 0.0
    %3087 = vmatprep.subr.mxu0 0.0
    %3088 = vmatpush1.msra.mxu0 0.0
    %3089 = vmatprep.subr.mxu0 0.0
    %3090 = vmatpush1.msra.mxu0 0.0
    %3091 = vmatprep.subr.mxu0 0.0
    %3092 = vmatpush1.msra.mxu0 0.0
    %3093 = vmatprep.subr.mxu0 0.0
    %3094 = vmatpush1.msra.mxu0 0.0
    %3095 = vmatprep.subr.mxu0 0.0
    %3096 = vmatpush1.msra.mxu0 0.0
    %3097 = vmatprep.subr.mxu0 0.0
    %3098 = vmatpush1.msra.mxu0 0.0
    %3099 = vmatprep.subr.mxu0 0.0
    %3100 = vmatpush1.msra.mxu0 0.0
    %3101 = vmatprep.mubr.f32.mxu0 0.0
    %3102 = vmatmul.mubr.f32.gmra.mrb[0].mxu0 %v3014
    %v3103 = vpop.f32.mrb[0].mxu0
    %v3104 = vadd.f32 %v3011, %v3103
    %v3105 = vpop.f32.mrb[0].mxu0
    %3106 = vmatprep.mubr.f32.mxu0 0.0
    %3107 = vmatmul.mubr.f32.gmra.mrb[0].mxu0 %v3017
    %v3108 = vpop.f32.mrb[0].mxu0
    %v3109 = vadd.f32 %v3011, %v3108
    %v3110 = vpop.f32.mrb[0].mxu0
    %3111 = vmatprep.mubr.f32.mxu0 0.0
    %3112 = vmatmul.mubr.f32.gmra.mrb[0].mxu0 %v3020
    %v3113 = vpop.f32.mrb[0].mxu0
    %v3114 = vadd.f32 %v3011, %v3113
    %v3115 = vpop.f32.mrb[0].mxu0
    %3116 = vmatprep.mubr.f32.mxu0 0.0
    %3117 = vmatmul.mubr.f32.gmra.mrb[0].mxu0 %v3023
    %v3118 = vpop.f32.mrb[0].mxu0
    %v3119 = vadd.f32 %v3011, %v3118
    %v3120 = vpop.f32.mrb[0].mxu0
    %3121 = vmatprep.mubr.f32.mxu0 0.0
    %3122 = vmatmul.mubr.f32.gmra.mrb[0].mxu0 %v3026
    %v3123 = vpop.f32.mrb[0].mxu0
    %v3124 = vadd.f32 %v3011, %v3123
    %v3125 = vpop.f32.mrb[0].mxu0
    %3126 = vmatprep.mubr.f32.mxu0 0.0
    %3127 = vmatmul.mubr.f32.gmra.mrb[0].mxu0 %v3029
    %v3128 = vpop.f32.mrb[0].mxu0
    %v3129 = vadd.f32 %v3011, %v3128
    %v3130 = vpop.f32.mrb[0].mxu0
    %3131 = vmatprep.mubr.f32.mxu0 0.0
    %3132 = vmatmul.mubr.f32.gmra.mrb[0].mxu0 %v3032
    %v3133 = vpop.f32.mrb[0].mxu0
    %v3134 = vadd.f32 %v3011, %v3133
    %v3135 = vpop.f32.mrb[0].mxu0
    %3136 = vmatprep.mubr.f32.mxu0 0.0
    %3137 = vmatmul.mubr.f32.gmra.mrb[0].mxu0 %v3035
    %v3138 = vpop.f32.mrb[0].mxu0
    %v3139 = vadd.f32 %v3011, %v3138
    %v3140 = vpop.f32.mrb[0].mxu0
    %3141 = vdwg.mxu0
    %3142 = vmatprep.subr.mxu0 0.0
    %3143 = vmatpush1.msra.mxu0 %v3002
    %3144 = vmatprep.subr.mxu0 0.0
    %3145 = vmatpush1.msra.mxu0 %v3003
    %3146 = vmatprep.subr.mxu0 0.0
    %3147 = vmatpush1.msra.mxu0 %v3004
    %3148 = vmatprep.subr.mxu0 0.0
    %3149 = vmatpush1.msra.mxu0 %v3005
    %3150 = vmatprep.subr.mxu0 0.0
    %3151 = vmatpush1.msra.mxu0 0.0
    %3152 = vmatprep.subr.mxu0 0.0
    %3153 = vmatpush1.msra.mxu0 0.0
    %3154 = vmatprep.subr.mxu0 0.0
    %3155 = vmatpush1.msra.mxu0 0.0
    %3156 = vmatprep.subr.mxu0 0.0
    %3157 = vmatpush1.msra.mxu0 0.0
    %3158 = vmatprep.subr.mxu0 0.0
    %3159 = vmatpush1.msra.mxu0 0.0
    %3160 = vmatprep.subr.mxu0 0.0
    %3161 = vmatpush1.msra.mxu0 0.0
    %3162 = vmatprep.subr.mxu0 0.0
    %3163 = vmatpush1.msra.mxu0 0.0
    %3164 = vmatprep.subr.mxu0 0.0
    %3165 = vmatpush1.msra.mxu0 0.0
    %3166 = vmatprep.subr.mxu0 0.0
    %3167 = vmatpush1.msra.mxu0 0.0
    %3168 = vmatprep.subr.mxu0 0.0
    %3169 = vmatpush1.msra.mxu0 0.0
    %3170 = vmatprep.subr.mxu0 0.0
    %3171 = vmatpush1.msra.mxu0 0.0
    %3172 = vmatprep.subr.mxu0 0.0
    %3173 = vmatpush1.msra.mxu0 0.0
    %3174 = vmatprep.subr.mxu0 0.0
    %3175 = vmatpush1.msra.mxu0 0.0
    %3176 = vmatprep.subr.mxu0 0.0
    %3177 = vmatpush1.msra.mxu0 0.0
    %3178 = vmatprep.subr.mxu0 0.0
    %3179 = vmatpush1.msra.mxu0 0.0
    %3180 = vmatprep.subr.mxu0 0.0
    %3181 = vmatpush1.msra.mxu0 0.0
    %3182 = vmatprep.subr.mxu0 0.0
    %3183 = vmatpush1.msra.mxu0 0.0
    %3184 = vmatprep.subr.mxu0 0.0
    %3185 = vmatpush1.msra.mxu0 0.0
    %3186 = vmatprep.subr.mxu0 0.0
    %3187 = vmatpush1.msra.mxu0 0.0
    %3188 = vmatprep.subr.mxu0 0.0
    %3189 = vmatpush1.msra.mxu0 0.0
    %3190 = vmatprep.subr.mxu0 0.0
    %3191 = vmatpush1.msra.mxu0 0.0
    %3192 = vmatprep.subr.mxu0 0.0
    %3193 = vmatpush1.msra.mxu0 0.0
    %3194 = vmatprep.subr.mxu0 0.0
    %3195 = vmatpush1.msra.mxu0 0.0
    %3196 = vmatprep.subr.mxu0 0.0
    %3197 = vmatpush1.msra.mxu0 0.0
    %3198 = vmatprep.subr.mxu0 0.0
    %3199 = vmatpush1.msra.mxu0 0.0
    %3200 = vmatprep.subr.mxu0 0.0
    %3201 = vmatpush1.msra.mxu0 0.0
    %3202 = vmatprep.subr.mxu0 0.0
    %3203 = vmatpush1.msra.mxu0 0.0
    %3204 = vmatprep.subr.mxu0 0.0
    %3205 = vmatpush1.msra.mxu0 0.0
    %3206 = vmatprep.mubr.f32.mxu0 0.0
    %3207 = vmatmul.mubr.f32.gmra.mrb[0].mxu0 %v2174
    %v3208 = vpop.f32.mrb[0].mxu0
    %v3209 = vadd.f32 0.0, %v3208
    %v3210 = vpop.f32.mrb[0].mxu0
    %3211 = vdwg.mxu0
    %v3212 = vadd.f32 %v3104, %v3209
    %v3213 = vxor.u32 %v3212, 2147483648
    %v3214 = vmul.f32 %v3213, 1.442695
    %v3215 = vpow.pop %v3214
    %v3216 = vadd.f32 %v3215, 1.0
    %v3217 = vrcp.pop %v3216
    %v3218 = vmul.f32 1.0, %v3217
    %v3219 = vtanh.pop %v3212
    %v3220 = vmul.f32 %v3218, 0.0
    %3222 = vrot.lane.b32.xlu0 %v3219, 32
    %v3223 = vpop.permute.xlu0 %3222
    %v3225 = vmul.f32 %v3218, %v3223
    %3227 = vrot.lane.b32.xlu0 %v3225, 32
    %v3228 = vpop.permute.xlu0 %3227
    %v3230 = vadd.f32 %v3220, %v3228
    %v3231 = vtanh.pop %v3230
    %3233 = vrot.lane.b32.xlu0 %v3231, 32
    %v3234 = vpop.permute.xlu0 %3233
    %v3236 = vmul.f32 %v3218, %v3234
    %3238 = vrot.lane.b32.xlu0 %v3236, 64
    %v3239 = vpop.permute.xlu0 %3238
    %3241 = vst.msk [vmem:[#allocation3] sm:$0xff] %vm228, %v3239
    %v3242 = vsel %vm228, %v3239, 0
    %3244 = vmatprep.subr.mxu0 0.0
    %3245 = vmatpush1.msra.mxu0 %v3002
    %3246 = vmatprep.subr.mxu0 0.0
    %3247 = vmatpush1.msra.mxu0 %v3003
    %3248 = vmatprep.subr.mxu0 0.0
    %3249 = vmatpush1.msra.mxu0 %v3004
    %3250 = vmatprep.subr.mxu0 0.0
    %3251 = vmatpush1.msra.mxu0 %v3005
    %3252 = vmatprep.subr.mxu0 0.0
    %3253 = vmatpush1.msra.mxu0 0.0
    %3254 = vmatprep.subr.mxu0 0.0
    %3255 = vmatpush1.msra.mxu0 0.0
    %3256 = vmatprep.subr.mxu0 0.0
    %3257 = vmatpush1.msra.mxu0 0.0
    %3258 = vmatprep.subr.mxu0 0.0
    %3259 = vmatpush1.msra.mxu0 0.0
    %3260 = vmatprep.subr.mxu0 0.0
    %3261 = vmatpush1.msra.mxu0 0.0
    %3262 = vmatprep.subr.mxu0 0.0
    %3263 = vmatpush1.msra.mxu0 0.0
    %3264 = vmatprep.subr.mxu0 0.0
    %3265 = vmatpush1.msra.mxu0 0.0
    %3266 = vmatprep.subr.mxu0 0.0
    %3267 = vmatpush1.msra.mxu0 0.0
    %3268 = vmatprep.subr.mxu0 0.0
    %3269 = vmatpush1.msra.mxu0 0.0
    %3270 = vmatprep.subr.mxu0 0.0
    %3271 = vmatpush1.msra.mxu0 0.0
    %3272 = vmatprep.subr.mxu0 0.0
    %3273 = vmatpush1.msra.mxu0 0.0
    %3274 = vmatprep.subr.mxu0 0.0
    %3275 = vmatpush1.msra.mxu0 0.0
    %3276 = vmatprep.subr.mxu0 0.0
    %3277 = vmatpush1.msra.mxu0 0.0
    %3278 = vmatprep.subr.mxu0 0.0
    %3279 = vmatpush1.msra.mxu0 0.0
    %3280 = vmatprep.subr.mxu0 0.0
    %3281 = vmatpush1.msra.mxu0 0.0
    %3282 = vmatprep.subr.mxu0 0.0
    %3283 = vmatpush1.msra.mxu0 0.0
    %3284 = vmatprep.subr.mxu0 0.0
    %3285 = vmatpush1.msra.mxu0 0.0
    %3286 = vmatprep.subr.mxu0 0.0
    %3287 = vmatpush1.msra.mxu0 0.0
    %3288 = vmatprep.subr.mxu0 0.0
    %3289 = vmatpush1.msra.mxu0 0.0
    %3290 = vmatprep.subr.mxu0 0.0
    %3291 = vmatpush1.msra.mxu0 0.0
    %3292 = vmatprep.subr.mxu0 0.0
    %3293 = vmatpush1.msra.mxu0 0.0
    %3294 = vmatprep.subr.mxu0 0.0
    %3295 = vmatpush1.msra.mxu0 0.0
    %3296 = vmatprep.subr.mxu0 0.0
    %3297 = vmatpush1.msra.mxu0 0.0
    %3298 = vmatprep.subr.mxu0 0.0
    %3299 = vmatpush1.msra.mxu0 0.0
    %3300 = vmatprep.subr.mxu0 0.0
    %3301 = vmatpush1.msra.mxu0 0.0
    %3302 = vmatprep.subr.mxu0 0.0
    %3303 = vmatpush1.msra.mxu0 0.0
    %3304 = vmatprep.subr.mxu0 0.0
    %3305 = vmatpush1.msra.mxu0 0.0
    %3306 = vmatprep.subr.mxu0 0.0
    %3307 = vmatpush1.msra.mxu0 0.0
    %3308 = vmatprep.mubr.f32.mxu0 0.0
    %3309 = vmatmul.mubr.f32.gmra.mrb[0].mxu0 %v3242
    %v3310 = vpop.f32.mrb[0].mxu0
    %v3311 = vadd.f32 0.0, %v3310
    %v3312 = vpop.f32.mrb[0].mxu0
    %3313 = vdwg.mxu0
    %v3314 = vadd.f32 %v3109, %v3311
    %v3315 = vxor.u32 %v3314, 2147483648
    %v3316 = vmul.f32 %v3315, 1.442695
    %v3317 = vpow.pop %v3316
    %v3318 = vadd.f32 %v3317, 1.0
    %v3319 = vrcp.pop %v3318
    %v3320 = vmul.f32 1.0, %v3319
    %v3321 = vtanh.pop %v3314
    %v3322 = vmul.f32 %v3320, %v3230
    %3324 = vrot.lane.b32.xlu0 %v3321, 32
    %v3325 = vpop.permute.xlu0 %3324
    %v3327 = vmul.f32 %v3320, %v3325
    %3329 = vrot.lane.b32.xlu0 %v3327, 32
    %v3330 = vpop.permute.xlu0 %3329
    %v3332 = vadd.f32 %v3322, %v3330
    %v3333 = vtanh.pop %v3332
    %3335 = vrot.lane.b32.xlu0 %v3333, 32
    %v3336 = vpop.permute.xlu0 %3335
    %v3338 = vmul.f32 %v3320, %v3336
    %3340 = vrot.lane.b32.xlu0 %v3338, 64
    %v3341 = vpop.permute.xlu0 %3340
    %3343 = vst.msk [vmem:[#allocation3 + $0x8] sm:$0xff] %vm228, %v3341
    %v3344 = vsel %vm228, %v3341, 0
    %3346 = vmatprep.subr.mxu0 0.0
    %3347 = vmatpush1.msra.mxu0 %v3002
    %3348 = vmatprep.subr.mxu0 0.0
    %3349 = vmatpush1.msra.mxu0 %v3003
    %3350 = vmatprep.subr.mxu0 0.0
    %3351 = vmatpush1.msra.mxu0 %v3004
    %3352 = vmatprep.subr.mxu0 0.0
    %3353 = vmatpush1.msra.mxu0 %v3005
    %3354 = vmatprep.subr.mxu0 0.0
    %3355 = vmatpush1.msra.mxu0 0.0
    %3356 = vmatprep.subr.mxu0 0.0
    %3357 = vmatpush1.msra.mxu0 0.0
    %3358 = vmatprep.subr.mxu0 0.0
    %3359 = vmatpush1.msra.mxu0 0.0
    %3360 = vmatprep.subr.mxu0 0.0
    %3361 = vmatpush1.msra.mxu0 0.0
    %3362 = vmatprep.subr.mxu0 0.0
    %3363 = vmatpush1.msra.mxu0 0.0
    %3364 = vmatprep.subr.mxu0 0.0
    %3365 = vmatpush1.msra.mxu0 0.0
    %3366 = vmatprep.subr.mxu0 0.0
    %3367 = vmatpush1.msra.mxu0 0.0
    %3368 = vmatprep.subr.mxu0 0.0
    %3369 = vmatpush1.msra.mxu0 0.0
    %3370 = vmatprep.subr.mxu0 0.0
    %3371 = vmatpush1.msra.mxu0 0.0
    %3372 = vmatprep.subr.mxu0 0.0
    %3373 = vmatpush1.msra.mxu0 0.0
    %3374 = vmatprep.subr.mxu0 0.0
    %3375 = vmatpush1.msra.mxu0 0.0
    %3376 = vmatprep.subr.mxu0 0.0
    %3377 = vmatpush1.msra.mxu0 0.0
    %3378 = vmatprep.subr.mxu0 0.0
    %3379 = vmatpush1.msra.mxu0 0.0
    %3380 = vmatprep.subr.mxu0 0.0
    %3381 = vmatpush1.msra.mxu0 0.0
    %3382 = vmatprep.subr.mxu0 0.0
    %3383 = vmatpush1.msra.mxu0 0.0
    %3384 = vmatprep.subr.mxu0 0.0
    %3385 = vmatpush1.msra.mxu0 0.0
    %3386 = vmatprep.subr.mxu0 0.0
    %3387 = vmatpush1.msra.mxu0 0.0
    %3388 = vmatprep.subr.mxu0 0.0
    %3389 = vmatpush1.msra.mxu0 0.0
    %3390 = vmatprep.subr.mxu0 0.0
    %3391 = vmatpush1.msra.mxu0 0.0
    %3392 = vmatprep.subr.mxu0 0.0
    %3393 = vmatpush1.msra.mxu0 0.0
    %3394 = vmatprep.subr.mxu0 0.0
    %3395 = vmatpush1.msra.mxu0 0.0
    %3396 = vmatprep.subr.mxu0 0.0
    %3397 = vmatpush1.msra.mxu0 0.0
    %3398 = vmatprep.subr.mxu0 0.0
    %3399 = vmatpush1.msra.mxu0 0.0
    %3400 = vmatprep.subr.mxu0 0.0
    %3401 = vmatpush1.msra.mxu0 0.0
    %3402 = vmatprep.subr.mxu0 0.0
    %3403 = vmatpush1.msra.mxu0 0.0
    %3404 = vmatprep.subr.mxu0 0.0
    %3405 = vmatpush1.msra.mxu0 0.0
    %3406 = vmatprep.subr.mxu0 0.0
    %3407 = vmatpush1.msra.mxu0 0.0
    %3408 = vmatprep.subr.mxu0 0.0
    %3409 = vmatpush1.msra.mxu0 0.0
    %3410 = vmatprep.mubr.f32.mxu0 0.0
    %3411 = vmatmul.mubr.f32.gmra.mrb[0].mxu0 %v3344
    %v3412 = vpop.f32.mrb[0].mxu0
    %v3413 = vadd.f32 0.0, %v3412
    %v3414 = vpop.f32.mrb[0].mxu0
    %3415 = vdwg.mxu0
    %v3416 = vadd.f32 %v3114, %v3413
    %v3417 = vxor.u32 %v3416, 2147483648
    %v3418 = vmul.f32 %v3417, 1.442695
    %v3419 = vpow.pop %v3418
    %v3420 = vadd.f32 %v3419, 1.0
    %v3421 = vrcp.pop %v3420
    %v3422 = vmul.f32 1.0, %v3421
    %v3423 = vtanh.pop %v3416
    %v3424 = vmul.f32 %v3422, %v3332
    %3426 = vrot.lane.b32.xlu0 %v3423, 32
    %v3427 = vpop.permute.xlu0 %3426
    %v3429 = vmul.f32 %v3422, %v3427
    %3431 = vrot.lane.b32.xlu0 %v3429, 32
    %v3432 = vpop.permute.xlu0 %3431
    %v3434 = vadd.f32 %v3424, %v3432
    %v3435 = vtanh.pop %v3434
    %3437 = vrot.lane.b32.xlu0 %v3435, 32
    %v3438 = vpop.permute.xlu0 %3437
    %v3440 = vmul.f32 %v3422, %v3438
    %3442 = vrot.lane.b32.xlu0 %v3440, 64
    %v3443 = vpop.permute.xlu0 %3442
    %3445 = vst.msk [vmem:[#allocation3 + $0x10] sm:$0xff] %vm228, %v3443
    %v3446 = vsel %vm228, %v3443, 0
    %3448 = vmatprep.subr.mxu0 0.0
    %3449 = vmatpush1.msra.mxu0 %v3002
    %3450 = vmatprep.subr.mxu0 0.0
    %3451 = vmatpush1.msra.mxu0 %v3003
    %3452 = vmatprep.subr.mxu0 0.0
    %3453 = vmatpush1.msra.mxu0 %v3004
    %3454 = vmatprep.subr.mxu0 0.0
    %3455 = vmatpush1.msra.mxu0 %v3005
    %3456 = vmatprep.subr.mxu0 0.0
    %3457 = vmatpush1.msra.mxu0 0.0
    %3458 = vmatprep.subr.mxu0 0.0
    %3459 = vmatpush1.msra.mxu0 0.0
    %3460 = vmatprep.subr.mxu0 0.0
    %3461 = vmatpush1.msra.mxu0 0.0
    %3462 = vmatprep.subr.mxu0 0.0
    %3463 = vmatpush1.msra.mxu0 0.0
    %3464 = vmatprep.subr.mxu0 0.0
    %3465 = vmatpush1.msra.mxu0 0.0
    %3466 = vmatprep.subr.mxu0 0.0
    %3467 = vmatpush1.msra.mxu0 0.0
    %3468 = vmatprep.subr.mxu0 0.0
    %3469 = vmatpush1.msra.mxu0 0.0
    %3470 = vmatprep.subr.mxu0 0.0
    %3471 = vmatpush1.msra.mxu0 0.0
    %3472 = vmatprep.subr.mxu0 0.0
    %3473 = vmatpush1.msra.mxu0 0.0
    %3474 = vmatprep.subr.mxu0 0.0
    %3475 = vmatpush1.msra.mxu0 0.0
    %3476 = vmatprep.subr.mxu0 0.0
    %3477 = vmatpush1.msra.mxu0 0.0
    %3478 = vmatprep.subr.mxu0 0.0
    %3479 = vmatpush1.msra.mxu0 0.0
    %3480 = vmatprep.subr.mxu0 0.0
    %3481 = vmatpush1.msra.mxu0 0.0
    %3482 = vmatprep.subr.mxu0 0.0
    %3483 = vmatpush1.msra.mxu0 0.0
    %3484 = vmatprep.subr.mxu0 0.0
    %3485 = vmatpush1.msra.mxu0 0.0
    %3486 = vmatprep.subr.mxu0 0.0
    %3487 = vmatpush1.msra.mxu0 0.0
    %3488 = vmatprep.subr.mxu0 0.0
    %3489 = vmatpush1.msra.mxu0 0.0
    %3490 = vmatprep.subr.mxu0 0.0
    %3491 = vmatpush1.msra.mxu0 0.0
    %3492 = vmatprep.subr.mxu0 0.0
    %3493 = vmatpush1.msra.mxu0 0.0
    %3494 = vmatprep.subr.mxu0 0.0
    %3495 = vmatpush1.msra.mxu0 0.0
    %3496 = vmatprep.subr.mxu0 0.0
    %3497 = vmatpush1.msra.mxu0 0.0
    %3498 = vmatprep.subr.mxu0 0.0
    %3499 = vmatpush1.msra.mxu0 0.0
    %3500 = vmatprep.subr.mxu0 0.0
    %3501 = vmatpush1.msra.mxu0 0.0
    %3502 = vmatprep.subr.mxu0 0.0
    %3503 = vmatpush1.msra.mxu0 0.0
    %3504 = vmatprep.subr.mxu0 0.0
    %3505 = vmatpush1.msra.mxu0 0.0
    %3506 = vmatprep.subr.mxu0 0.0
    %3507 = vmatpush1.msra.mxu0 0.0
    %3508 = vmatprep.subr.mxu0 0.0
    %3509 = vmatpush1.msra.mxu0 0.0
    %3510 = vmatprep.subr.mxu0 0.0
    %3511 = vmatpush1.msra.mxu0 0.0
    %3512 = vmatprep.mubr.f32.mxu0 0.0
    %3513 = vmatmul.mubr.f32.gmra.mrb[0].mxu0 %v3446
    %v3514 = vpop.f32.mrb[0].mxu0
    %v3515 = vadd.f32 0.0, %v3514
    %v3516 = vpop.f32.mrb[0].mxu0
    %3517 = vdwg.mxu0
    %v3518 = vadd.f32 %v3119, %v3515
    %v3519 = vxor.u32 %v3518, 2147483648
    %v3520 = vmul.f32 %v3519, 1.442695
    %v3521 = vpow.pop %v3520
    %v3522 = vadd.f32 %v3521, 1.0
    %v3523 = vrcp.pop %v3522
    %v3524 = vmul.f32 1.0, %v3523
    %v3525 = vtanh.pop %v3518
    %v3526 = vmul.f32 %v3524, %v3434
    %3528 = vrot.lane.b32.xlu0 %v3525, 32
    %v3529 = vpop.permute.xlu0 %3528
    %v3531 = vmul.f32 %v3524, %v3529
    %3533 = vrot.lane.b32.xlu0 %v3531, 32
    %v3534 = vpop.permute.xlu0 %3533
    %v3536 = vadd.f32 %v3526, %v3534
    %v3537 = vtanh.pop %v3536
    %3539 = vrot.lane.b32.xlu0 %v3537, 32
    %v3540 = vpop.permute.xlu0 %3539
    %v3542 = vmul.f32 %v3524, %v3540
    %3544 = vrot.lane.b32.xlu0 %v3542, 64
    %v3545 = vpop.permute.xlu0 %3544
    %3547 = vst.msk [vmem:[#allocation3 + $0x18] sm:$0xff] %vm228, %v3545
    %v3548 = vsel %vm228, %v3545, 0
    %3550 = vmatprep.subr.mxu0 0.0
    %3551 = vmatpush1.msra.mxu0 %v3002
    %3552 = vmatprep.subr.mxu0 0.0
    %3553 = vmatpush1.msra.mxu0 %v3003
    %3554 = vmatprep.subr.mxu0 0.0
    %3555 = vmatpush1.msra.mxu0 %v3004
    %3556 = vmatprep.subr.mxu0 0.0
    %3557 = vmatpush1.msra.mxu0 %v3005
    %3558 = vmatprep.subr.mxu0 0.0
    %3559 = vmatpush1.msra.mxu0 0.0
    %3560 = vmatprep.subr.mxu0 0.0
    %3561 = vmatpush1.msra.mxu0 0.0
    %3562 = vmatprep.subr.mxu0 0.0
    %3563 = vmatpush1.msra.mxu0 0.0
    %3564 = vmatprep.subr.mxu0 0.0
    %3565 = vmatpush1.msra.mxu0 0.0
    %3566 = vmatprep.subr.mxu0 0.0
    %3567 = vmatpush1.msra.mxu0 0.0
    %3568 = vmatprep.subr.mxu0 0.0
    %3569 = vmatpush1.msra.mxu0 0.0
    %3570 = vmatprep.subr.mxu0 0.0
    %3571 = vmatpush1.msra.mxu0 0.0
    %3572 = vmatprep.subr.mxu0 0.0
    %3573 = vmatpush1.msra.mxu0 0.0
    %3574 = vmatprep.subr.mxu0 0.0
    %3575 = vmatpush1.msra.mxu0 0.0
    %3576 = vmatprep.subr.mxu0 0.0
    %3577 = vmatpush1.msra.mxu0 0.0
    %3578 = vmatprep.subr.mxu0 0.0
    %3579 = vmatpush1.msra.mxu0 0.0
    %3580 = vmatprep.subr.mxu0 0.0
    %3581 = vmatpush1.msra.mxu0 0.0
    %3582 = vmatprep.subr.mxu0 0.0
    %3583 = vmatpush1.msra.mxu0 0.0
    %3584 = vmatprep.subr.mxu0 0.0
    %3585 = vmatpush1.msra.mxu0 0.0
    %3586 = vmatprep.subr.mxu0 0.0
    %3587 = vmatpush1.msra.mxu0 0.0
    %3588 = vmatprep.subr.mxu0 0.0
    %3589 = vmatpush1.msra.mxu0 0.0
    %3590 = vmatprep.subr.mxu0 0.0
    %3591 = vmatpush1.msra.mxu0 0.0
    %3592 = vmatprep.subr.mxu0 0.0
    %3593 = vmatpush1.msra.mxu0 0.0
    %3594 = vmatprep.subr.mxu0 0.0
    %3595 = vmatpush1.msra.mxu0 0.0
    %3596 = vmatprep.subr.mxu0 0.0
    %3597 = vmatpush1.msra.mxu0 0.0
    %3598 = vmatprep.subr.mxu0 0.0
    %3599 = vmatpush1.msra.mxu0 0.0
    %3600 = vmatprep.subr.mxu0 0.0
    %3601 = vmatpush1.msra.mxu0 0.0
    %3602 = vmatprep.subr.mxu0 0.0
    %3603 = vmatpush1.msra.mxu0 0.0
    %3604 = vmatprep.subr.mxu0 0.0
    %3605 = vmatpush1.msra.mxu0 0.0
    %3606 = vmatprep.subr.mxu0 0.0
    %3607 = vmatpush1.msra.mxu0 0.0
    %3608 = vmatprep.subr.mxu0 0.0
    %3609 = vmatpush1.msra.mxu0 0.0
    %3610 = vmatprep.subr.mxu0 0.0
    %3611 = vmatpush1.msra.mxu0 0.0
    %3612 = vmatprep.subr.mxu0 0.0
    %3613 = vmatpush1.msra.mxu0 0.0
    %3614 = vmatprep.mubr.f32.mxu0 0.0
    %3615 = vmatmul.mubr.f32.gmra.mrb[0].mxu0 %v3548
    %v3616 = vpop.f32.mrb[0].mxu0
    %v3617 = vadd.f32 0.0, %v3616
    %v3618 = vpop.f32.mrb[0].mxu0
    %3619 = vdwg.mxu0
    %v3620 = vadd.f32 %v3124, %v3617
    %v3621 = vxor.u32 %v3620, 2147483648
    %v3622 = vmul.f32 %v3621, 1.442695
    %v3623 = vpow.pop %v3622
    %v3624 = vadd.f32 %v3623, 1.0
    %v3625 = vrcp.pop %v3624
    %v3626 = vmul.f32 1.0, %v3625
    %v3627 = vtanh.pop %v3620
    %v3628 = vmul.f32 %v3626, %v3536
    %3630 = vrot.lane.b32.xlu0 %v3627, 32
    %v3631 = vpop.permute.xlu0 %3630
    %v3633 = vmul.f32 %v3626, %v3631
    %3635 = vrot.lane.b32.xlu0 %v3633, 32
    %v3636 = vpop.permute.xlu0 %3635
    %v3638 = vadd.f32 %v3628, %v3636
    %v3639 = vtanh.pop %v3638
    %3641 = vrot.lane.b32.xlu0 %v3639, 32
    %v3642 = vpop.permute.xlu0 %3641
    %v3644 = vmul.f32 %v3626, %v3642
    %3646 = vrot.lane.b32.xlu0 %v3644, 64
    %v3647 = vpop.permute.xlu0 %3646
    %3649 = vst.msk [vmem:[#allocation3 + $0x20] sm:$0xff] %vm228, %v3647
    %v3650 = vsel %vm228, %v3647, 0
    %3652 = vmatprep.subr.mxu0 0.0
    %3653 = vmatpush1.msra.mxu0 %v3002
    %3654 = vmatprep.subr.mxu0 0.0
    %3655 = vmatpush1.msra.mxu0 %v3003
    %3656 = vmatprep.subr.mxu0 0.0
    %3657 = vmatpush1.msra.mxu0 %v3004
    %3658 = vmatprep.subr.mxu0 0.0
    %3659 = vmatpush1.msra.mxu0 %v3005
    %3660 = vmatprep.subr.mxu0 0.0
    %3661 = vmatpush1.msra.mxu0 0.0
    %3662 = vmatprep.subr.mxu0 0.0
    %3663 = vmatpush1.msra.mxu0 0.0
    %3664 = vmatprep.subr.mxu0 0.0
    %3665 = vmatpush1.msra.mxu0 0.0
    %3666 = vmatprep.subr.mxu0 0.0
    %3667 = vmatpush1.msra.mxu0 0.0
    %3668 = vmatprep.subr.mxu0 0.0
    %3669 = vmatpush1.msra.mxu0 0.0
    %3670 = vmatprep.subr.mxu0 0.0
    %3671 = vmatpush1.msra.mxu0 0.0
    %3672 = vmatprep.subr.mxu0 0.0
    %3673 = vmatpush1.msra.mxu0 0.0
    %3674 = vmatprep.subr.mxu0 0.0
    %3675 = vmatpush1.msra.mxu0 0.0
    %3676 = vmatprep.subr.mxu0 0.0
    %3677 = vmatpush1.msra.mxu0 0.0
    %3678 = vmatprep.subr.mxu0 0.0
    %3679 = vmatpush1.msra.mxu0 0.0
    %3680 = vmatprep.subr.mxu0 0.0
    %3681 = vmatpush1.msra.mxu0 0.0
    %3682 = vmatprep.subr.mxu0 0.0
    %3683 = vmatpush1.msra.mxu0 0.0
    %3684 = vmatprep.subr.mxu0 0.0
    %3685 = vmatpush1.msra.mxu0 0.0
    %3686 = vmatprep.subr.mxu0 0.0
    %3687 = vmatpush1.msra.mxu0 0.0
    %3688 = vmatprep.subr.mxu0 0.0
    %3689 = vmatpush1.msra.mxu0 0.0
    %3690 = vmatprep.subr.mxu0 0.0
    %3691 = vmatpush1.msra.mxu0 0.0
    %3692 = vmatprep.subr.mxu0 0.0
    %3693 = vmatpush1.msra.mxu0 0.0
    %3694 = vmatprep.subr.mxu0 0.0
    %3695 = vmatpush1.msra.mxu0 0.0
    %3696 = vmatprep.subr.mxu0 0.0
    %3697 = vmatpush1.msra.mxu0 0.0
    %3698 = vmatprep.subr.mxu0 0.0
    %3699 = vmatpush1.msra.mxu0 0.0
    %3700 = vmatprep.subr.mxu0 0.0
    %3701 = vmatpush1.msra.mxu0 0.0
    %3702 = vmatprep.subr.mxu0 0.0
    %3703 = vmatpush1.msra.mxu0 0.0
    %3704 = vmatprep.subr.mxu0 0.0
    %3705 = vmatpush1.msra.mxu0 0.0
    %3706 = vmatprep.subr.mxu0 0.0
    %3707 = vmatpush1.msra.mxu0 0.0
    %3708 = vmatprep.subr.mxu0 0.0
    %3709 = vmatpush1.msra.mxu0 0.0
    %3710 = vmatprep.subr.mxu0 0.0
    %3711 = vmatpush1.msra.mxu0 0.0
    %3712 = vmatprep.subr.mxu0 0.0
    %3713 = vmatpush1.msra.mxu0 0.0
    %3714 = vmatprep.subr.mxu0 0.0
    %3715 = vmatpush1.msra.mxu0 0.0
    %3716 = vmatprep.mubr.f32.mxu0 0.0
    %3717 = vmatmul.mubr.f32.gmra.mrb[0].mxu0 %v3650
    %v3718 = vpop.f32.mrb[0].mxu0
    %v3719 = vadd.f32 0.0, %v3718
    %v3720 = vpop.f32.mrb[0].mxu0
    %3721 = vdwg.mxu0
    %v3722 = vadd.f32 %v3129, %v3719
    %v3723 = vxor.u32 %v3722, 2147483648
    %v3724 = vmul.f32 %v3723, 1.442695
    %v3725 = vpow.pop %v3724
    %v3726 = vadd.f32 %v3725, 1.0
    %v3727 = vrcp.pop %v3726
    %v3728 = vmul.f32 1.0, %v3727
    %v3729 = vtanh.pop %v3722
    %v3730 = vmul.f32 %v3728, %v3638
    %3732 = vrot.lane.b32.xlu0 %v3729, 32
    %v3733 = vpop.permute.xlu0 %3732
    %v3735 = vmul.f32 %v3728, %v3733
    %3737 = vrot.lane.b32.xlu0 %v3735, 32
    %v3738 = vpop.permute.xlu0 %3737
    %v3740 = vadd.f32 %v3730, %v3738
    %v3741 = vtanh.pop %v3740
    %3743 = vrot.lane.b32.xlu0 %v3741, 32
    %v3744 = vpop.permute.xlu0 %3743
    %v3746 = vmul.f32 %v3728, %v3744
    %3748 = vrot.lane.b32.xlu0 %v3746, 64
    %v3749 = vpop.permute.xlu0 %3748
    %3751 = vst.msk [vmem:[#allocation3 + $0x28] sm:$0xff] %vm228, %v3749
    %v3752 = vsel %vm228, %v3749, 0
    %3754 = vmatprep.subr.mxu0 0.0
    %3755 = vmatpush1.msra.mxu0 %v3002
    %3756 = vmatprep.subr.mxu0 0.0
    %3757 = vmatpush1.msra.mxu0 %v3003
    %3758 = vmatprep.subr.mxu0 0.0
    %3759 = vmatpush1.msra.mxu0 %v3004
    %3760 = vmatprep.subr.mxu0 0.0
    %3761 = vmatpush1.msra.mxu0 %v3005
    %3762 = vmatprep.subr.mxu0 0.0
    %3763 = vmatpush1.msra.mxu0 0.0
    %3764 = vmatprep.subr.mxu0 0.0
    %3765 = vmatpush1.msra.mxu0 0.0
    %3766 = vmatprep.subr.mxu0 0.0
    %3767 = vmatpush1.msra.mxu0 0.0
    %3768 = vmatprep.subr.mxu0 0.0
    %3769 = vmatpush1.msra.mxu0 0.0
    %3770 = vmatprep.subr.mxu0 0.0
    %3771 = vmatpush1.msra.mxu0 0.0
    %3772 = vmatprep.subr.mxu0 0.0
    %3773 = vmatpush1.msra.mxu0 0.0
    %3774 = vmatprep.subr.mxu0 0.0
    %3775 = vmatpush1.msra.mxu0 0.0
    %3776 = vmatprep.subr.mxu0 0.0
    %3777 = vmatpush1.msra.mxu0 0.0
    %3778 = vmatprep.subr.mxu0 0.0
    %3779 = vmatpush1.msra.mxu0 0.0
    %3780 = vmatprep.subr.mxu0 0.0
    %3781 = vmatpush1.msra.mxu0 0.0
    %3782 = vmatprep.subr.mxu0 0.0
    %3783 = vmatpush1.msra.mxu0 0.0
    %3784 = vmatprep.subr.mxu0 0.0
    %3785 = vmatpush1.msra.mxu0 0.0
    %3786 = vmatprep.subr.mxu0 0.0
    %3787 = vmatpush1.msra.mxu0 0.0
    %3788 = vmatprep.subr.mxu0 0.0
    %3789 = vmatpush1.msra.mxu0 0.0
    %3790 = vmatprep.subr.mxu0 0.0
    %3791 = vmatpush1.msra.mxu0 0.0
    %3792 = vmatprep.subr.mxu0 0.0
    %3793 = vmatpush1.msra.mxu0 0.0
    %3794 = vmatprep.subr.mxu0 0.0
    %3795 = vmatpush1.msra.mxu0 0.0
    %3796 = vmatprep.subr.mxu0 0.0
    %3797 = vmatpush1.msra.mxu0 0.0
    %3798 = vmatprep.subr.mxu0 0.0
    %3799 = vmatpush1.msra.mxu0 0.0
    %3800 = vmatprep.subr.mxu0 0.0
    %3801 = vmatpush1.msra.mxu0 0.0
    %3802 = vmatprep.subr.mxu0 0.0
    %3803 = vmatpush1.msra.mxu0 0.0
    %3804 = vmatprep.subr.mxu0 0.0
    %3805 = vmatpush1.msra.mxu0 0.0
    %3806 = vmatprep.subr.mxu0 0.0
    %3807 = vmatpush1.msra.mxu0 0.0
    %3808 = vmatprep.subr.mxu0 0.0
    %3809 = vmatpush1.msra.mxu0 0.0
    %3810 = vmatprep.subr.mxu0 0.0
    %3811 = vmatpush1.msra.mxu0 0.0
    %3812 = vmatprep.subr.mxu0 0.0
    %3813 = vmatpush1.msra.mxu0 0.0
    %3814 = vmatprep.subr.mxu0 0.0
    %3815 = vmatpush1.msra.mxu0 0.0
    %3816 = vmatprep.subr.mxu0 0.0
    %3817 = vmatpush1.msra.mxu0 0.0
    %3818 = vmatprep.mubr.f32.mxu0 0.0
    %3819 = vmatmul.mubr.f32.gmra.mrb[0].mxu0 %v3752
    %v3820 = vpop.f32.mrb[0].mxu0
    %v3821 = vadd.f32 0.0, %v3820
    %v3822 = vpop.f32.mrb[0].mxu0
    %3823 = vdwg.mxu0
    %v3824 = vadd.f32 %v3134, %v3821
    %v3825 = vxor.u32 %v3824, 2147483648
    %v3826 = vmul.f32 %v3825, 1.442695
    %v3827 = vpow.pop %v3826
    %v3828 = vadd.f32 %v3827, 1.0
    %v3829 = vrcp.pop %v3828
    %v3830 = vmul.f32 1.0, %v3829
    %v3831 = vtanh.pop %v3824
    %v3832 = vmul.f32 %v3830, %v3740
    %3834 = vrot.lane.b32.xlu0 %v3831, 32
    %v3835 = vpop.permute.xlu0 %3834
    %v3837 = vmul.f32 %v3830, %v3835
    %3839 = vrot.lane.b32.xlu0 %v3837, 32
    %v3840 = vpop.permute.xlu0 %3839
    %v3842 = vadd.f32 %v3832, %v3840
    %v3843 = vtanh.pop %v3842
    %3845 = vrot.lane.b32.xlu0 %v3843, 32
    %v3846 = vpop.permute.xlu0 %3845
    %v3848 = vmul.f32 %v3830, %v3846
    %3850 = vrot.lane.b32.xlu0 %v3848, 64
    %v3851 = vpop.permute.xlu0 %3850
    %3853 = vst.msk [vmem:[#allocation3 + $0x30] sm:$0xff] %vm228, %v3851
    %v3854 = vsel %vm228, %v3851, 0
    %3856 = vmatprep.subr.mxu0 0.0
    %3857 = vmatpush1.msra.mxu0 %v3002
    %3858 = vmatprep.subr.mxu0 0.0
    %3859 = vmatpush1.msra.mxu0 %v3003
    %3860 = vmatprep.subr.mxu0 0.0
    %3861 = vmatpush1.msra.mxu0 %v3004
    %3862 = vmatprep.subr.mxu0 0.0
    %3863 = vmatpush1.msra.mxu0 %v3005
    %3864 = vmatprep.subr.mxu0 0.0
    %3865 = vmatpush1.msra.mxu0 0.0
    %3866 = vmatprep.subr.mxu0 0.0
    %3867 = vmatpush1.msra.mxu0 0.0
    %3868 = vmatprep.subr.mxu0 0.0
    %3869 = vmatpush1.msra.mxu0 0.0
    %3870 = vmatprep.subr.mxu0 0.0
    %3871 = vmatpush1.msra.mxu0 0.0
    %3872 = vmatprep.subr.mxu0 0.0
    %3873 = vmatpush1.msra.mxu0 0.0
    %3874 = vmatprep.subr.mxu0 0.0
    %3875 = vmatpush1.msra.mxu0 0.0
    %3876 = vmatprep.subr.mxu0 0.0
    %3877 = vmatpush1.msra.mxu0 0.0
    %3878 = vmatprep.subr.mxu0 0.0
    %3879 = vmatpush1.msra.mxu0 0.0
    %3880 = vmatprep.subr.mxu0 0.0
    %3881 = vmatpush1.msra.mxu0 0.0
    %3882 = vmatprep.subr.mxu0 0.0
    %3883 = vmatpush1.msra.mxu0 0.0
    %3884 = vmatprep.subr.mxu0 0.0
    %3885 = vmatpush1.msra.mxu0 0.0
    %3886 = vmatprep.subr.mxu0 0.0
    %3887 = vmatpush1.msra.mxu0 0.0
    %3888 = vmatprep.subr.mxu0 0.0
    %3889 = vmatpush1.msra.mxu0 0.0
    %3890 = vmatprep.subr.mxu0 0.0
    %3891 = vmatpush1.msra.mxu0 0.0
    %3892 = vmatprep.subr.mxu0 0.0
    %3893 = vmatpush1.msra.mxu0 0.0
    %3894 = vmatprep.subr.mxu0 0.0
    %3895 = vmatpush1.msra.mxu0 0.0
    %3896 = vmatprep.subr.mxu0 0.0
    %3897 = vmatpush1.msra.mxu0 0.0
    %3898 = vmatprep.subr.mxu0 0.0
    %3899 = vmatpush1.msra.mxu0 0.0
    %3900 = vmatprep.subr.mxu0 0.0
    %3901 = vmatpush1.msra.mxu0 0.0
    %3902 = vmatprep.subr.mxu0 0.0
    %3903 = vmatpush1.msra.mxu0 0.0
    %3904 = vmatprep.subr.mxu0 0.0
    %3905 = vmatpush1.msra.mxu0 0.0
    %3906 = vmatprep.subr.mxu0 0.0
    %3907 = vmatpush1.msra.mxu0 0.0
    %3908 = vmatprep.subr.mxu0 0.0
    %3909 = vmatpush1.msra.mxu0 0.0
    %3910 = vmatprep.subr.mxu0 0.0
    %3911 = vmatpush1.msra.mxu0 0.0
    %3912 = vmatprep.subr.mxu0 0.0
    %3913 = vmatpush1.msra.mxu0 0.0
    %3914 = vmatprep.subr.mxu0 0.0
    %3915 = vmatpush1.msra.mxu0 0.0
    %3916 = vmatprep.subr.mxu0 0.0
    %3917 = vmatpush1.msra.mxu0 0.0
    %3918 = vmatprep.subr.mxu0 0.0
    %3919 = vmatpush1.msra.mxu0 0.0
    %3920 = vmatprep.mubr.f32.mxu0 0.0
    %3921 = vmatmul.mubr.f32.gmra.mrb[0].mxu0 %v3854
    %v3922 = vpop.f32.mrb[0].mxu0
    %v3923 = vadd.f32 0.0, %v3922
    %v3924 = vpop.f32.mrb[0].mxu0
    %3925 = vdwg.mxu0
    %v3926 = vadd.f32 %v3139, %v3923
    %v3927 = vxor.u32 %v3926, 2147483648
    %v3928 = vmul.f32 %v3927, 1.442695
    %v3929 = vpow.pop %v3928
    %v3930 = vadd.f32 %v3929, 1.0
    %v3931 = vrcp.pop %v3930
    %v3932 = vmul.f32 1.0, %v3931
    %v3933 = vtanh.pop %v3926
    %v3934 = vmul.f32 %v3932, %v3842
    %3936 = vrot.lane.b32.xlu0 %v3933, 32
    %v3937 = vpop.permute.xlu0 %3936
    %v3939 = vmul.f32 %v3932, %v3937
    %3941 = vrot.lane.b32.xlu0 %v3939, 32
    %v3942 = vpop.permute.xlu0 %3941
    %v3944 = vadd.f32 %v3934, %v3942
    %v3945 = vtanh.pop %v3944
    %3947 = vrot.lane.b32.xlu0 %v3945, 32
    %v3948 = vpop.permute.xlu0 %3947
    %v3950 = vmul.f32 %v3932, %v3948
    %3952 = vrot.lane.b32.xlu0 %v3950, 64
    %v3953 = vpop.permute.xlu0 %3952
    %3955 = vst.msk [vmem:[#allocation3 + $0x38] sm:$0xff] %vm228, %v3953
    %v3956 = vld [vmem:[#allocation3] sm:$0xff]
    %v3957 = vld [vmem:[#allocation3 + $0x8] sm:$0xff]
    %v3958 = vld [vmem:[#allocation3 + $0x10] sm:$0xff]
    %v3959 = vld [vmem:[#allocation3 + $0x18] sm:$0xff]
    %v3960 = vld [vmem:[#allocation3 + $0x20] sm:$0xff]
    %v3961 = vld [vmem:[#allocation3 + $0x28] sm:$0xff]
    %v3962 = vld [vmem:[#allocation3 + $0x30] sm:$0xff]
    %v3963 = vld [vmem:[#allocation3 + $0x38] sm:$0xff]
    %v3964 = vld [vmem:[%s17] sm:$0xff]
    %v3965 = vld [vmem:[%s17 + $0x8] sm:$0xff]
    %v3966 = vld [vmem:[%s17 + $0x10] sm:$0xff]
    %v3967 = vld [vmem:[%s17 + $0x18] sm:$0xff]
    %v3968 = vld [vmem:[%s18] sm:$0x1]
    %v3970 = vlaneseq
    %v3971 = vshrl.u32 %v3970, 7
    %v3972 = vsub.s32 0, %v3971
    %v3973 = vrot.slane %v3968, %v3972
    %v3976 = vsel %vm228, %v3956, 0
    %v3979 = vsel %vm228, %v3957, 0
    %v3982 = vsel %vm228, %v3958, 0
    %v3985 = vsel %vm228, %v3959, 0
    %v3988 = vsel %vm228, %v3960, 0
    %v3991 = vsel %vm228, %v3961, 0
    %v3994 = vsel %vm228, %v3962, 0
    %v3997 = vsel %vm228, %v3963, 0
    %3999 = vmatprep.subr.mxu0 0.0
    %4000 = vmatpush1.msra.mxu0 %v3964
    %4001 = vmatprep.subr.mxu0 0.0
    %4002 = vmatpush1.msra.mxu0 %v3965
    %4003 = vmatprep.subr.mxu0 0.0
    %4004 = vmatpush1.msra.mxu0 %v3966
    %4005 = vmatprep.subr.mxu0 0.0
    %4006 = vmatpush1.msra.mxu0 %v3967
    %4007 = vmatprep.subr.mxu0 0.0
    %4008 = vmatpush1.msra.mxu0 0.0
    %4009 = vmatprep.subr.mxu0 0.0
    %4010 = vmatpush1.msra.mxu0 0.0
    %4011 = vmatprep.subr.mxu0 0.0
    %4012 = vmatpush1.msra.mxu0 0.0
    %4013 = vmatprep.subr.mxu0 0.0
    %4014 = vmatpush1.msra.mxu0 0.0
    %4015 = vmatprep.subr.mxu0 0.0
    %4016 = vmatpush1.msra.mxu0 0.0
    %4017 = vmatprep.subr.mxu0 0.0
    %4018 = vmatpush1.msra.mxu0 0.0
    %4019 = vmatprep.subr.mxu0 0.0
    %4020 = vmatpush1.msra.mxu0 0.0
    %4021 = vmatprep.subr.mxu0 0.0
    %4022 = vmatpush1.msra.mxu0 0.0
    %4023 = vmatprep.subr.mxu0 0.0
    %4024 = vmatpush1.msra.mxu0 0.0
    %4025 = vmatprep.subr.mxu0 0.0
    %4026 = vmatpush1.msra.mxu0 0.0
    %4027 = vmatprep.subr.mxu0 0.0
    %4028 = vmatpush1.msra.mxu0 0.0
    %4029 = vmatprep.subr.mxu0 0.0
    %4030 = vmatpush1.msra.mxu0 0.0
    %4031 = vmatprep.subr.mxu0 0.0
    %4032 = vmatpush1.msra.mxu0 0.0
    %4033 = vmatprep.subr.mxu0 0.0
    %4034 = vmatpush1.msra.mxu0 0.0
    %4035 = vmatprep.subr.mxu0 0.0
    %4036 = vmatpush1.msra.mxu0 0.0
    %4037 = vmatprep.subr.mxu0 0.0
    %4038 = vmatpush1.msra.mxu0 0.0
    %4039 = vmatprep.subr.mxu0 0.0
    %4040 = vmatpush1.msra.mxu0 0.0
    %4041 = vmatprep.subr.mxu0 0.0
    %4042 = vmatpush1.msra.mxu0 0.0
    %4043 = vmatprep.subr.mxu0 0.0
    %4044 = vmatpush1.msra.mxu0 0.0
    %4045 = vmatprep.subr.mxu0 0.0
    %4046 = vmatpush1.msra.mxu0 0.0
    %4047 = vmatprep.subr.mxu0 0.0
    %4048 = vmatpush1.msra.mxu0 0.0
    %4049 = vmatprep.subr.mxu0 0.0
    %4050 = vmatpush1.msra.mxu0 0.0
    %4051 = vmatprep.subr.mxu0 0.0
    %4052 = vmatpush1.msra.mxu0 0.0
    %4053 = vmatprep.subr.mxu0 0.0
    %4054 = vmatpush1.msra.mxu0 0.0
    %4055 = vmatprep.subr.mxu0 0.0
    %4056 = vmatpush1.msra.mxu0 0.0
    %4057 = vmatprep.subr.mxu0 0.0
    %4058 = vmatpush1.msra.mxu0 0.0
    %4059 = vmatprep.subr.mxu0 0.0
    %4060 = vmatpush1.msra.mxu0 0.0
    %4061 = vmatprep.subr.mxu0 0.0
    %4062 = vmatpush1.msra.mxu0 0.0
    %4063 = vmatprep.mubr.f32.mxu0 0.0
    %4064 = vmatmul.mubr.f32.gmra.mrb[0].mxu0 %v3976
    %v4065 = vpop.f32.mrb[0].mxu0
    %v4066 = vadd.f32 %v3973, %v4065
    %v4067 = vpop.f32.mrb[0].mxu0
    %4068 = vmatprep.mubr.f32.mxu0 0.0
    %4069 = vmatmul.mubr.f32.gmra.mrb[0].mxu0 %v3979
    %v4070 = vpop.f32.mrb[0].mxu0
    %v4071 = vadd.f32 %v3973, %v4070
    %v4072 = vpop.f32.mrb[0].mxu0
    %4073 = vmatprep.mubr.f32.mxu0 0.0
    %4074 = vmatmul.mubr.f32.gmra.mrb[0].mxu0 %v3982
    %v4075 = vpop.f32.mrb[0].mxu0
    %v4076 = vadd.f32 %v3973, %v4075
    %v4077 = vpop.f32.mrb[0].mxu0
    %4078 = vmatprep.mubr.f32.mxu0 0.0
    %4079 = vmatmul.mubr.f32.gmra.mrb[0].mxu0 %v3985
    %v4080 = vpop.f32.mrb[0].mxu0
    %v4081 = vadd.f32 %v3973, %v4080
    %v4082 = vpop.f32.mrb[0].mxu0
    %4083 = vmatprep.mubr.f32.mxu0 0.0
    %4084 = vmatmul.mubr.f32.gmra.mrb[0].mxu0 %v3988
    %v4085 = vpop.f32.mrb[0].mxu0
    %v4086 = vadd.f32 %v3973, %v4085
    %v4087 = vpop.f32.mrb[0].mxu0
    %4088 = vmatprep.mubr.f32.mxu0 0.0
    %4089 = vmatmul.mubr.f32.gmra.mrb[0].mxu0 %v3991
    %v4090 = vpop.f32.mrb[0].mxu0
    %v4091 = vadd.f32 %v3973, %v4090
    %v4092 = vpop.f32.mrb[0].mxu0
    %4093 = vmatprep.mubr.f32.mxu0 0.0
    %4094 = vmatmul.mubr.f32.gmra.mrb[0].mxu0 %v3994
    %v4095 = vpop.f32.mrb[0].mxu0
    %v4096 = vadd.f32 %v3973, %v4095
    %v4097 = vpop.f32.mrb[0].mxu0
    %4098 = vmatprep.mubr.f32.mxu0 0.0
    %4099 = vmatmul.mubr.f32.gmra.mrb[0].mxu0 %v3997
    %v4100 = vpop.f32.mrb[0].mxu0
    %v4101 = vadd.f32 %v3973, %v4100
    %v4102 = vpop.f32.mrb[0].mxu0
    %4103 = vdwg.mxu0
    %4104 = vst [vmem:[%s19] sm:$0xff] %v4066
    %4105 = vst [vmem:[%s19 + $0x8] sm:$0xff] %v4071
    %4106 = vst [vmem:[%s19 + $0x10] sm:$0xff] %v4076
    %4107 = vst [vmem:[%s19 + $0x18] sm:$0xff] %v4081
    %4108 = vst [vmem:[%s19 + $0x20] sm:$0xff] %v4086
    %4109 = vst [vmem:[%s19 + $0x28] sm:$0xff] %v4091
    %4110 = vst [vmem:[%s19 + $0x30] sm:$0xff] %v4096
    %4111 = vst [vmem:[%s19 + $0x38] sm:$0xff] %v4101
    // Predicated region
    $region82: #{lstm_autoencoder_forward.1} parent=1 // pred_check
      _
    $region83: #{lstm_autoencoder_forward.1} parent=1 // pred_check_branch
      %4113 = sbr.rel (0) target = $region85
    $region84: #{lstm_autoencoder_forward.1} parent=1 // pred_region
      _
    $region85: #{lstm_autoencoder_forward.1} parent=1 // pred_fallthru
      _
    // Predicated region
    $region86: #{lstm_autoencoder_forward.1} parent=1 // pred_check
      _
    $region87: #{lstm_autoencoder_forward.1} parent=1 // pred_check_branch
      %4115 = sbr.rel (0) target = $region89
    $region88: #{lstm_autoencoder_forward.1} parent=1 // pred_region
      _
    $region89: #{lstm_autoencoder_forward.1} parent=1 // pred_fallthru
      _
    %4116 = vsyncpa [#allocation5], 1

</llo_original>
